<compile_context>
chip_gen: v5e
topology: v5e:2x2
jax: 0.10.0
libtpu: 0.0.40
codegen_flags: <defaults>
</compile_context>

<pallas_src>
import functools
import math

import numpy as np
import jax
import jax.numpy as jnp
from jax import lax
from jax.experimental import pallas as pl
from jax.experimental.pallas import tpu as pltpu


# --------------------------------------------------------------------------
# tiling helpers
# --------------------------------------------------------------------------

_BLOCK_BYTES = 2 * 1024 * 1024   # per-input block budget (keeps 3 inputs x 2 bufs + scratch < 48 MiB)
_VMEM_LIMIT = 48 * 1024 * 1024   # explicit scoped-VMEM limit (safe on v7x's 64 MiB physical VMEM)

_PARAMS = pltpu.CompilerParams(
    dimension_semantics=("parallel", "arbitrary"),
    vmem_limit_bytes=_VMEM_LIMIT,
)


def _spatial_rows(hw):
    """Lay a flattened spatial axis out as (rows, lanes) with lanes=128 when possible."""
    if hw % 128 == 0:
        return hw // 128, 128
    return 1, hw


def _pick_chunk(n, unit, bytes_per_unit, budget=_BLOCK_BYTES):
    """Largest multiple-of-`unit` divisor of n whose block stays <= budget bytes.

    Falls back to the full extent when n is not a multiple of `unit`; no padding
    is ever introduced so reductions stay exact.
    """
    if n % unit != 0 or n * bytes_per_unit <= budget:
        return n
    c = min(n, max(unit, (budget // bytes_per_unit) // unit * unit))
    while c >= unit:
        if n % c == 0:
            return c
        c -= unit
    return unit


def _acc_rows(total_rows):
    """Accumulator sublane count: a full 8-row vreg slab when the data allows it."""
    return 8 if total_rows % 8 == 0 else total_rows


def _mxu_fuse_limit():
    """Fusing the three grams into one (3C,3C) only pays when it fits one MXU tile."""
    try:
        kind = jax.devices()[0].device_kind.lower()
    except Exception:
        return 128
    return 256 if ("v6" in kind or "v7" in kind) else 128


def _nearest_downsample(x, scale):
    """F.interpolate(mode='nearest', recompute_scale_factor=True) equivalent."""
    b, c, h, w = x.shape
    out_h = int(math.floor(h * scale))
    out_w = int(math.floor(w * scale))
    if h % out_h == 0 and w % out_w == 0:
        # exact integer ratio: strided slice, no gather, no extra HBM round trip
        return x[:, :, :: h // out_h, :: w // out_w]
    ih = np.floor(np.arange(out_h) * (h / out_h)).astype(np.int32)
    iw = np.floor(np.arange(out_w) * (w / out_w)).astype(np.int32)
    return x[:, :, ih, :][:, :, :, iw]


# --------------------------------------------------------------------------
# kernels
# --------------------------------------------------------------------------


def _dice_kernel(x_ref, m_ref, out_ref):
    # x/m blocks (1, rpb, L); out block (1, 3, ar, L), resident across chunks.
    k = pl.program_id(1)

    @pl.when(k == 0)
    def _():
        out_ref[...] = jnp.zeros_like(out_ref)

    ar, lanes = out_ref.shape[2], out_ref.shape[3]
    x = x_ref[0].astype(jnp.float32)
    s = 1.0 / (1.0 + jnp.exp(-x))                    # sigmoid (f32 throughout)
    t = 1.0 - m_ref[0].astype(jnp.float32)           # target = 1 - mask_gt
    # elementwise VPU partial sums only; cross-lane reduce deferred to JAX glue
    out_ref[0, 0] += (s * t).reshape(-1, ar, lanes).sum(axis=0)
    out_ref[0, 1] += (s * s).reshape(-1, ar, lanes).sum(axis=0)
    out_ref[0, 2] += (t * t).reshape(-1, ar, lanes).sum(axis=0)


def _msr_kernel(o_ref, g_ref, m_ref, out_ref):
    # o/g blocks (1, C, rpb, L); m block (1, 1, rpb, L); out (1, 2, ar, L) resident.
    k = pl.program_id(1)

    @pl.when(k == 0)
    def _():
        out_ref[...] = jnp.zeros_like(out_ref)

    ar, lanes = out_ref.shape[2], out_ref.shape[3]
    o = o_ref[0].astype(jnp.float32)                 # (C, rpb, L)
    g = g_ref[0].astype(jnp.float32)
    m = m_ref[0].astype(jnp.float32)                 # (1, rpb, L) -> bcast over C
    # mask is binary, so |(1-m)d| = (1-m)|d| and |m d| = m|d|: only two sums needed
    ad = jnp.abs(o - g)
    out_ref[0, 0] += ad.reshape(-1, ar, lanes).sum(axis=0)
    out_ref[0, 1] += (m * ad).reshape(-1, ar, lanes).sum(axis=0)


def _prc_style_kernel(fo_ref, foc_ref, fg_ref, out_ref, prc_acc, *grams,
                      fused, inv_chw):
    # fo/foc/fg blocks (1, C, t); out (1, 1, 2); prc_acc (ar, t) scratch.
    # grams: fused -> (f_all (3C,t), g_all (3C,3C)); else (go, goc, gg) each (C,C).
    k = pl.program_id(1)
    nk = pl.num_programs(1)
    c = fo_ref.shape[1]
    ar = prc_acc.shape[0]

    @pl.when(k == 0)
    def _():
        prc_acc[...] = jnp.zeros_like(prc_acc)
        if fused:
            grams[1][...] = jnp.zeros_like(grams[1])
        else:
            for g in grams:
                g[...] = jnp.zeros_like(g)

    fo = fo_ref[0].astype(jnp.float32)               # (C, t)
    foc = foc_ref[0].astype(jnp.float32)
    fg = fg_ref[0].astype(jnp.float32)

    # perceptual partials (both terms share the single fg load): elementwise
    # accumulation; the cross-lane reduce happens once in the finalize.
    p = jnp.abs(fo - fg) + jnp.abs(foc - fg)
    prc_acc[...] += p.reshape(-1, ar, p.shape[-1]).sum(axis=0)

    # gram accumulation: contract the spatial (lane) axis, accumulate in VMEM
    dn = (((1,), (1,)), ((), ()))
    if fused:
        f_all, g_all = grams
        f_all[0:c, :] = fo
        f_all[c:2 * c, :] = foc
        f_all[2 * c:3 * c, :] = fg
        fa = f_all[...]
        g_all[...] += lax.dot_general(fa, fa, dn, preferred_element_type=jnp.float32)
    else:
        go, goc, gg = grams
        go[...] += lax.dot_general(fo, fo, dn, preferred_element_type=jnp.float32)
        goc[...] += lax.dot_general(foc, foc, dn, preferred_element_type=jnp.float32)
        gg[...] += lax.dot_general(fg, fg, dn, preferred_element_type=jnp.float32)

    @pl.when(k == nk - 1)
    def _():
        if fused:
            g_full = grams[1][...] * inv_chw
            g_o = g_full[0:c, 0:c]
            g_oc = g_full[c:2 * c, c:2 * c]
            g_g = g_full[2 * c:3 * c, 2 * c:3 * c]
        else:
            g_o = grams[0][...] * inv_chw
            g_oc = grams[1][...] * inv_chw
            g_g = grams[2][...] * inv_chw
        style = jnp.sum(jnp.abs(g_o - g_g)) + jnp.sum(jnp.abs(g_oc - g_g))
        out_ref[0, :, 0:1] = jnp.sum(prc_acc[...], keepdims=True)
        out_ref[0, :, 1:2] = style.reshape(1, 1)


# --------------------------------------------------------------------------
# pallas_call wrappers
# --------------------------------------------------------------------------


def dice_loss_pallas(mask_pred, mask_gt):
    b = mask_pred.shape[0]
    hw = int(np.prod(mask_pred.shape[1:]))
    n_rows, lanes = _spatial_rows(hw)
    rpb = _pick_chunk(n_rows, 8, lanes * 4)
    nk = n_rows // rpb
    ar = _acc_rows(rpb)
    x3 = mask_pred.reshape(b, n_rows, lanes)
    m3 = mask_gt.reshape(b, n_rows, lanes)
    out = pl.pallas_call(
        _dice_kernel,
        out_shape=jax.ShapeDtypeStruct((b, 3, ar, lanes), jnp.float32),
        grid=(b, nk),
        in_specs=[pl.BlockSpec((1, rpb, lanes), lambda i, j: (i, j, 0)),
                  pl.BlockSpec((1, rpb, lanes), lambda i, j: (i, j, 0))],
        out_specs=pl.BlockSpec((1, 3, ar, lanes), lambda i, j: (i, 0, 0, 0)),
        compiler_params=_PARAMS,
    )(x3, m3)
    a = jnp.sum(out[:, 0], axis=(1, 2))
    bsum = jnp.sum(out[:, 1], axis=(1, 2)) + 0.001
    csum = jnp.sum(out[:, 2], axis=(1, 2)) + 0.001
    dice = 2.0 * a / (bsum + csum)
    return 1.0 - jnp.mean(dice)


def masked_l1_pair(output, gt_, mask_, w0, w1):
    # w0 * mean(|(1-m)(o-g)|) + w1 * mean(|m(o-g)|); mask broadcast over C in-kernel.
    b, c, h, w = output.shape
    hw = h * w
    n_rows, lanes = _spatial_rows(hw)
    rpb = _pick_chunk(n_rows, 8, c * lanes * 4)
    nk = n_rows // rpb
    ar = _acc_rows(c * rpb)
    o4 = output.reshape(b, c, n_rows, lanes)
    g4 = gt_.reshape(b, c, n_rows, lanes)
    m4 = mask_.reshape(b, 1, n_rows, lanes)
    out = pl.pallas_call(
        _msr_kernel,
        out_shape=jax.ShapeDtypeStruct((b, 2, ar, lanes), jnp.float32),
        grid=(b, nk),
        in_specs=[pl.BlockSpec((1, c, rpb, lanes), lambda i, j: (i, 0, j, 0)),
                  pl.BlockSpec((1, c, rpb, lanes), lambda i, j: (i, 0, j, 0)),
                  pl.BlockSpec((1, 1, rpb, lanes), lambda i, j: (i, 0, j, 0))],
        out_specs=pl.BlockSpec((1, 2, ar, lanes), lambda i, j: (i, 0, 0, 0)),
        compiler_params=_PARAMS,
    )(o4, g4, m4)
    n = float(b * c * hw)
    sa = jnp.sum(out[:, 0])
    sm = jnp.sum(out[:, 1])
    return (w0 * (sa - sm) + w1 * sm) / n


def prc_and_style(feat_output, feat_output_comp, feat_gt, fuse_limit):
    # Returns (perceptual_term, style_term) for one feature level.
    b, c, h, w = feat_gt.shape
    hw = h * w
    t = _pick_chunk(hw, 128, c * 4)
    nk = hw // t
    ar = _acc_rows(c)
    fused = (3 * c <= fuse_limit) and (c % 8 == 0)
    fo3 = feat_output.reshape(b, c, hw)
    foc3 = feat_output_comp.reshape(b, c, hw)
    fg3 = feat_gt.reshape(b, c, hw)
    kern = functools.partial(_prc_style_kernel, fused=fused,
                             inv_chw=1.0 / float(c * hw))
    spec = pl.BlockSpec((1, c, t), lambda i, j: (i, 0, j))
    if fused:
        gram_scratch = [pltpu.VMEM((3 * c, t), jnp.float32),
                        pltpu.VMEM((3 * c, 3 * c), jnp.float32)]
    else:
        gram_scratch = [pltpu.VMEM((c, c), jnp.float32)] * 3
    out = pl.pallas_call(
        kern,
        out_shape=jax.ShapeDtypeStruct((b, 1, 2), jnp.float32),
        grid=(b, nk),
        in_specs=[spec, spec, spec],
        out_specs=pl.BlockSpec((1, 1, 2), lambda i, j: (i, 0, 0)),
        scratch_shapes=[pltpu.VMEM((ar, t), jnp.float32)] + gram_scratch,
        compiler_params=_PARAMS,
    )(fo3, foc3, fg3)
    prc = jnp.sum(out[:, 0, 0]) / float(b * c * hw)
    style = jnp.sum(out[:, 0, 1]) / float(b * c * c)
    return prc, style


# --------------------------------------------------------------------------
# full loss
# --------------------------------------------------------------------------


def text_removal_loss(preds, mask_gt, gt):
    # mask loss: dice(sigmoid(mask_pred), 1 - mask_gt); the "1 - m" is fused in-kernel.
    mask_loss = dice_loss_pallas(preds['mask'], mask_gt)

    # generator adversarial term: plain JAX (a kernel here is pure launch overhead)
    d_fake = -jnp.mean(preds['fake_prob_G'])

    # multi-scale reconstruction loss (one fused kernel per scale)
    scale_factors = [0.25, 0.5, 1.0]
    weights = [[5.0, 0.8], [6.0, 1.0], [10.0, 2.0]]
    msr = jnp.float32(0.0)
    for output, s, (w0, w1) in zip(preds['outputs'], scale_factors, weights):
        if s != 1.0:
            mask_ = _nearest_downsample(mask_gt, s)
            gt_ = _nearest_downsample(gt, s)
        else:
            mask_, gt_ = mask_gt, gt
        msr = msr + masked_l1_pair(output, gt_, mask_, w0, w1)

    # perceptual + style losses (one fused kernel per feature level)
    fuse_limit = _mxu_fuse_limit()
    prc = jnp.float32(0.0)
    style = jnp.float32(0.0)
    for i in range(3):
        p_i, s_i = prc_and_style(preds['feat_output'][i],
                                 preds['feat_output_comp'][i],
                                 preds['feat_gt'][i],
                                 fuse_limit)
        prc = prc + p_i
        style = style + s_i

    return {
        'MSR_loss': msr,
        'prc_loss': prc,
        'style_loss': style,
        'D_fake': d_fake,
        'mask_loss': mask_loss,
    }


# --------------------------------------------------------------------------
# main
# --------------------------------------------------------------------------

if __name__ == "__main__":
    key = jax.random.PRNGKey(0)
    keys = jax.random.split(key, 16)

    B, H, W = 2, 16, 16
    mask_gt = (jax.random.uniform(keys[0], (B, 1, H, W)) > 0.5).astype(jnp.float32)
    gt = jax.random.normal(keys[1], (B, 3, H, W), jnp.float32)

    # outputs at scales 0.25, 0.5, 1.0 of the ground-truth resolution
    outputs = [
        jax.random.normal(keys[2], (B, 3, 4, 4), jnp.float32),
        jax.random.normal(keys[3], (B, 3, 8, 8), jnp.float32),
        jax.random.normal(keys[4], (B, 3, 16, 16), jnp.float32),
    ]

    feat_shapes = [(B, 8, 16, 16), (B, 16, 8, 8), (B, 32, 4, 4)]
    feat_output = [jax.random.normal(keys[5 + i], s, jnp.float32)
                   for i, s in enumerate(feat_shapes)]
    feat_output_comp = [jax.random.normal(keys[8 + i], s, jnp.float32)
                        for i, s in enumerate(feat_shapes)]
    feat_gt = [jax.random.normal(keys[11 + i], s, jnp.float32)
               for i, s in enumerate(feat_shapes)]

    preds = {
        'mask': jax.random.normal(keys[14], (B, 1, H, W), jnp.float32),
        'fake_prob_G': jax.random.normal(keys[15], (B, 1), jnp.float32),
        'outputs': outputs,
        'feat_output': feat_output,
        'feat_output_comp': feat_output_comp,
        'feat_gt': feat_gt,
    }

    losses = jax.jit(text_removal_loss)(preds, mask_gt, gt)
    losses = jax.block_until_ready(losses)

    for k in ('MSR_loss', 'prc_loss', 'style_loss', 'D_fake', 'mask_loss'):
        assert jnp.isfinite(losses[k]), f"non-finite loss {k}"

    print("KERNEL_OK")
</pallas_src>

<mosaic_0001>
module attributes {stable_mosaic.version = 11 : i64} {
  func.func @_dice_kernel(%arg0: i32, %arg1: i32, %arg2: memref<1x2x128xf32, #tpu.memory_space<vmem>>, %arg3: memref<1x2x128xf32, #tpu.memory_space<vmem>>, %arg4: memref<1x3x2x128xf32, #tpu.memory_space<vmem>>) attributes {dimension_semantics = [#tpu.dimension_semantics<parallel>, #tpu.dimension_semantics<arbitrary>], iteration_bounds = array<i64: 2, 1>, scalar_prefetch = 0 : i64, scratch_operands = 0 : i64, tpu.core_type = #tpu.core_type<tc>, window_params = [{transform_indices = @transform_0, window_bounds = array<i64: 1, 2, 128>}, {transform_indices = @transform_1, window_bounds = array<i64: 1, 2, 128>}, {transform_indices = @transform_2, window_bounds = array<i64: 1, 3, 2, 128>}]} {
    %c0_i32 = arith.constant 0 : i32
    %0 = arith.cmpi eq, %arg1, %c0_i32 : i32
    %1 = arith.extui %0 : i1 to i32
    %c0_i32_0 = arith.constant 0 : i32
    %2 = arith.cmpi ne, %1, %c0_i32_0 : i32
    scf.if %2 {
      %cst_34 = arith.constant 0.000000e+00 : f32
      %43 = vector.broadcast %cst_34 : f32 to vector<1x3x2x128xf32>
      %c0_35 = arith.constant 0 : index
      %c0_36 = arith.constant 0 : index
      %c0_37 = arith.constant 0 : index
      %c0_38 = arith.constant 0 : index
      %44 = vector.load %arg4[%c0_35, %c0_36, %c0_37, %c0_38] : memref<1x3x2x128xf32, #tpu.memory_space<vmem>>, vector<1x3x2x128xf32>
      tpu.vector_store %arg4[%c0_35, %c0_36, %c0_37, %c0_38], %43 {strides = array<i32>} : memref<1x3x2x128xf32, #tpu.memory_space<vmem>>, vector<1x3x2x128xf32>,
    } else {
    }
    %c0 = arith.constant 0 : index
    %c0_1 = arith.constant 0 : index
    %c0_2 = arith.constant 0 : index
    %3 = vector.load %arg2[%c0, %c0_1, %c0_2] : memref<1x2x128xf32, #tpu.memory_space<vmem>>, vector<1x2x128xf32>
    %4 = vector.shape_cast %3 : vector<1x2x128xf32> to vector<2x128xf32>
    %cst = arith.constant 0.000000e+00 : f32
    %5 = vector.broadcast %cst : f32 to vector<2x128xf32>
    %6 = arith.subf %5, %4 : vector<2x128xf32>
    %7 = math.exp %6 : vector<2x128xf32>
    %cst_3 = arith.constant 1.000000e+00 : f32
    %8 = vector.broadcast %cst_3 : f32 to vector<2x128xf32>
    %9 = arith.addf %8, %7 : vector<2x128xf32>
    %cst_4 = arith.constant 1.000000e+00 : f32
    %10 = vector.broadcast %cst_4 : f32 to vector<2x128xf32>
    %11 = arith.divf %10, %9 : vector<2x128xf32>
    %c0_5 = arith.constant 0 : index
    %c0_6 = arith.constant 0 : index
    %c0_7 = arith.constant 0 : index
    %12 = vector.load %arg3[%c0_5, %c0_6, %c0_7] : memref<1x2x128xf32, #tpu.memory_space<vmem>>, vector<1x2x128xf32>
    %13 = vector.shape_cast %12 : vector<1x2x128xf32> to vector<2x128xf32>
    %cst_8 = arith.constant 1.000000e+00 : f32
    %14 = vector.broadcast %cst_8 : f32 to vector<2x128xf32>
    %15 = arith.subf %14, %13 : vector<2x128xf32>
    %c0_9 = arith.constant 0 : index
    %c0_10 = arith.constant 0 : index
    %c0_11 = arith.constant 0 : index
    %c0_12 = arith.constant 0 : index
    %16 = vector.load %arg4[%c0_9, %c0_10, %c0_11, %c0_12] : memref<1x3x2x128xf32, #tpu.memory_space<vmem>>, vector<1x1x2x128xf32>
    %17 = vector.shape_cast %16 : vector<1x1x2x128xf32> to vector<2x128xf32>
    %18 = arith.mulf %11, %15 : vector<2x128xf32>
    %19 = vector.shape_cast %18 : vector<2x128xf32> to vector<1x2x128xf32>
    %cst_13 = arith.constant dense<0.000000e+00> : vector<2x128xf32>
    %20 = vector.multi_reduction <add>, %19, %cst_13 [0] : vector<1x2x128xf32> to vector<2x128xf32>
    %21 = arith.addf %17, %20 : vector<2x128xf32>
    %c0_14 = arith.constant 0 : index
    %c0_15 = arith.constant 0 : index
    %c0_16 = arith.constant 0 : index
    %c0_17 = arith.constant 0 : index
    %22 = vector.load %arg4[%c0_14, %c0_15, %c0_16, %c0_17] : memref<1x3x2x128xf32, #tpu.memory_space<vmem>>, vector<1x1x2x128xf32>
    %23 = vector.shape_cast %22 : vector<1x1x2x128xf32> to vector<2x128xf32>
    %24 = vector.shape_cast %21 : vector<2x128xf32> to vector<1x1x2x128xf32>
    tpu.vector_store %arg4[%c0_14, %c0_15, %c0_16, %c0_17], %24 {strides = array<i32>} : memref<1x3x2x128xf32, #tpu.memory_space<vmem>>, vector<1x1x2x128xf32>,
    %c0_18 = arith.constant 0 : index
    %c1 = arith.constant 1 : index
    %c0_19 = arith.constant 0 : index
    %c0_20 = arith.constant 0 : index
    %25 = vector.load %arg4[%c0_18, %c1, %c0_19, %c0_20] : memref<1x3x2x128xf32, #tpu.memory_space<vmem>>, vector<1x1x2x128xf32>
    %26 = vector.shape_cast %25 : vector<1x1x2x128xf32> to vector<2x128xf32>
    %27 = arith.mulf %11, %11 : vector<2x128xf32>
    %28 = vector.shape_cast %27 : vector<2x128xf32> to vector<1x2x128xf32>
    %cst_21 = arith.constant dense<0.000000e+00> : vector<2x128xf32>
    %29 = vector.multi_reduction <add>, %28, %cst_21 [0] : vector<1x2x128xf32> to vector<2x128xf32>
    %30 = arith.addf %26, %29 : vector<2x128xf32>
    %c0_22 = arith.constant 0 : index
    %c1_23 = arith.constant 1 : index
    %c0_24 = arith.constant 0 : index
    %c0_25 = arith.constant 0 : index
    %31 = vector.load %arg4[%c0_22, %c1_23, %c0_24, %c0_25] : memref<1x3x2x128xf32, #tpu.memory_space<vmem>>, vector<1x1x2x128xf32>
    %32 = vector.shape_cast %31 : vector<1x1x2x128xf32> to vector<2x128xf32>
    %33 = vector.shape_cast %30 : vector<2x128xf32> to vector<1x1x2x128xf32>
    tpu.vector_store %arg4[%c0_22, %c1_23, %c0_24, %c0_25], %33 {strides = array<i32>} : memref<1x3x2x128xf32, #tpu.memory_space<vmem>>, vector<1x1x2x128xf32>,
    %c0_26 = arith.constant 0 : index
    %c2 = arith.constant 2 : index
    %c0_27 = arith.constant 0 : index
    %c0_28 = arith.constant 0 : index
    %34 = vector.load %arg4[%c0_26, %c2, %c0_27, %c0_28] : memref<1x3x2x128xf32, #tpu.memory_space<vmem>>, vector<1x1x2x128xf32>
    %35 = vector.shape_cast %34 : vector<1x1x2x128xf32> to vector<2x128xf32>
    %36 = arith.mulf %15, %15 : vector<2x128xf32>
    %37 = vector.shape_cast %36 : vector<2x128xf32> to vector<1x2x128xf32>
    %cst_29 = arith.constant dense<0.000000e+00> : vector<2x128xf32>
    %38 = vector.multi_reduction <add>, %37, %cst_29 [0] : vector<1x2x128xf32> to vector<2x128xf32>
    %39 = arith.addf %35, %38 : vector<2x128xf32>
    %c0_30 = arith.constant 0 : index
    %c2_31 = arith.constant 2 : index
    %c0_32 = arith.constant 0 : index
    %c0_33 = arith.constant 0 : index
    %40 = vector.load %arg4[%c0_30, %c2_31, %c0_32, %c0_33] : memref<1x3x2x128xf32, #tpu.memory_space<vmem>>, vector<1x1x2x128xf32>
    %41 = vector.shape_cast %40 : vector<1x1x2x128xf32> to vector<2x128xf32>
    %42 = vector.shape_cast %39 : vector<2x128xf32> to vector<1x1x2x128xf32>
    tpu.vector_store %arg4[%c0_30, %c2_31, %c0_32, %c0_33], %42 {strides = array<i32>} : memref<1x3x2x128xf32, #tpu.memory_space<vmem>>, vector<1x1x2x128xf32>,
    return
  }
  func.func @transform_0(%arg0: i32, %arg1: i32) -> (i32, i32, i32) {
    %c0_i32 = arith.constant 0 : i32
    %c0_i32_0 = arith.constant 0 : i32
    return %arg0, %arg1, %c0_i32 : i32, i32, i32
  }
  func.func @transform_1(%arg0: i32, %arg1: i32) -> (i32, i32, i32) {
    %c0_i32 = arith.constant 0 : i32
    %c0_i32_0 = arith.constant 0 : i32
    return %arg0, %arg1, %c0_i32 : i32, i32, i32
  }
  func.func @transform_2(%arg0: i32, %arg1: i32) -> (i32, i32, i32, i32) {
    %c0_i32 = arith.constant 0 : i32
    %c0_i32_0 = arith.constant 0 : i32
    %c0_i32_1 = arith.constant 0 : i32
    %c0_i32_2 = arith.constant 0 : i32
    return %arg0, %c0_i32, %c0_i32_0, %c0_i32_1 : i32, i32, i32, i32
  }
}

module attributes {stable_mosaic.version = 11 : i64} {
  func.func @_msr_kernel(%arg0: i32, %arg1: i32, %arg2: memref<1x3x2x128xf32, #tpu.memory_space<vmem>>, %arg3: memref<1x3x2x128xf32, #tpu.memory_space<vmem>>, %arg4: memref<1x1x2x128xf32, #tpu.memory_space<vmem>>, %arg5: memref<1x2x6x128xf32, #tpu.memory_space<vmem>>) attributes {dimension_semantics = [#tpu.dimension_semantics<parallel>, #tpu.dimension_semantics<arbitrary>], iteration_bounds = array<i64: 2, 1>, scalar_prefetch = 0 : i64, scratch_operands = 0 : i64, tpu.core_type = #tpu.core_type<tc>, window_params = [{transform_indices = @transform_0, window_bounds = array<i64: 1, 3, 2, 128>}, {transform_indices = @transform_1, window_bounds = array<i64: 1, 3, 2, 128>}, {transform_indices = @transform_2, window_bounds = array<i64: 1, 1, 2, 128>}, {transform_indices = @transform_3, window_bounds = array<i64: 1, 2, 6, 128>}]} {
    %c0_i32 = arith.constant 0 : i32
    %0 = arith.cmpi eq, %arg1, %c0_i32 : i32
    %1 = arith.extui %0 : i1 to i32
    %c0_i32_0 = arith.constant 0 : i32
    %2 = arith.cmpi ne, %1, %c0_i32_0 : i32
    scf.if %2 {
      %cst_28 = arith.constant 0.000000e+00 : f32
      %29 = vector.broadcast %cst_28 : f32 to vector<1x2x6x128xf32>
      %c0_29 = arith.constant 0 : index
      %c0_30 = arith.constant 0 : index
      %c0_31 = arith.constant 0 : index
      %c0_32 = arith.constant 0 : index
      %30 = vector.load %arg5[%c0_29, %c0_30, %c0_31, %c0_32] : memref<1x2x6x128xf32, #tpu.memory_space<vmem>>, vector<1x2x6x128xf32>
      tpu.vector_store %arg5[%c0_29, %c0_30, %c0_31, %c0_32], %29 {strides = array<i32>} : memref<1x2x6x128xf32, #tpu.memory_space<vmem>>, vector<1x2x6x128xf32>,
    } else {
    }
    %c0 = arith.constant 0 : index
    %c0_1 = arith.constant 0 : index
    %c0_2 = arith.constant 0 : index
    %c0_3 = arith.constant 0 : index
    %3 = vector.load %arg2[%c0, %c0_1, %c0_2, %c0_3] : memref<1x3x2x128xf32, #tpu.memory_space<vmem>>, vector<1x3x2x128xf32>
    %4 = vector.shape_cast %3 : vector<1x3x2x128xf32> to vector<3x2x128xf32>
    %c0_4 = arith.constant 0 : index
    %c0_5 = arith.constant 0 : index
    %c0_6 = arith.constant 0 : index
    %c0_7 = arith.constant 0 : index
    %5 = vector.load %arg3[%c0_4, %c0_5, %c0_6, %c0_7] : memref<1x3x2x128xf32, #tpu.memory_space<vmem>>, vector<1x3x2x128xf32>
    %6 = vector.shape_cast %5 : vector<1x3x2x128xf32> to vector<3x2x128xf32>
    %c0_8 = arith.constant 0 : index
    %c0_9 = arith.constant 0 : index
    %c0_10 = arith.constant 0 : index
    %c0_11 = arith.constant 0 : index
    %7 = vector.load %arg4[%c0_8, %c0_9, %c0_10, %c0_11] : memref<1x1x2x128xf32, #tpu.memory_space<vmem>>, vector<1x1x2x128xf32>
    %8 = vector.shape_cast %7 : vector<1x1x2x128xf32> to vector<1x2x128xf32>
    %9 = arith.subf %4, %6 : vector<3x2x128xf32>
    %10 = math.absf %9 : vector<3x2x128xf32>
    %c0_12 = arith.constant 0 : index
    %c0_13 = arith.constant 0 : index
    %c0_14 = arith.constant 0 : index
    %c0_15 = arith.constant 0 : index
    %11 = vector.load %arg5[%c0_12, %c0_13, %c0_14, %c0_15] : memref<1x2x6x128xf32, #tpu.memory_space<vmem>>, vector<1x1x6x128xf32>
    %12 = vector.shape_cast %11 : vector<1x1x6x128xf32> to vector<6x128xf32>
    %13 = vector.shape_cast %10 : vector<3x2x128xf32> to vector<1x6x128xf32>
    %cst = arith.constant dense<0.000000e+00> : vector<6x128xf32>
    %14 = vector.multi_reduction <add>, %13, %cst [0] : vector<1x6x128xf32> to vector<6x128xf32>
    %15 = arith.addf %12, %14 : vector<6x128xf32>
    %c0_16 = arith.constant 0 : index
    %c0_17 = arith.constant 0 : index
    %c0_18 = arith.constant 0 : index
    %c0_19 = arith.constant 0 : index
    %16 = vector.load %arg5[%c0_16, %c0_17, %c0_18, %c0_19] : memref<1x2x6x128xf32, #tpu.memory_space<vmem>>, vector<1x1x6x128xf32>
    %17 = vector.shape_cast %16 : vector<1x1x6x128xf32> to vector<6x128xf32>
    %18 = vector.shape_cast %15 : vector<6x128xf32> to vector<1x1x6x128xf32>
    tpu.vector_store %arg5[%c0_16, %c0_17, %c0_18, %c0_19], %18 {strides = array<i32>} : memref<1x2x6x128xf32, #tpu.memory_space<vmem>>, vector<1x1x6x128xf32>,
    %c0_20 = arith.constant 0 : index
    %c1 = arith.constant 1 : index
    %c0_21 = arith.constant 0 : index
    %c0_22 = arith.constant 0 : index
    %19 = vector.load %arg5[%c0_20, %c1, %c0_21, %c0_22] : memref<1x2x6x128xf32, #tpu.memory_space<vmem>>, vector<1x1x6x128xf32>
    %20 = vector.shape_cast %19 : vector<1x1x6x128xf32> to vector<6x128xf32>
    %21 = vector.broadcast %8 : vector<1x2x128xf32> to vector<3x2x128xf32>
    %22 = arith.mulf %21, %10 : vector<3x2x128xf32>
    %23 = vector.shape_cast %22 : vector<3x2x128xf32> to vector<1x6x128xf32>
    %cst_23 = arith.constant dense<0.000000e+00> : vector<6x128xf32>
    %24 = vector.multi_reduction <add>, %23, %cst_23 [0] : vector<1x6x128xf32> to vector<6x128xf32>
    %25 = arith.addf %20, %24 : vector<6x128xf32>
    %c0_24 = arith.constant 0 : index
    %c1_25 = arith.constant 1 : index
    %c0_26 = arith.constant 0 : index
    %c0_27 = arith.constant 0 : index
    %26 = vector.load %arg5[%c0_24, %c1_25, %c0_26, %c0_27] : memref<1x2x6x128xf32, #tpu.memory_space<vmem>>, vector<1x1x6x128xf32>
    %27 = vector.shape_cast %26 : vector<1x1x6x128xf32> to vector<6x128xf32>
    %28 = vector.shape_cast %25 : vector<6x128xf32> to vector<1x1x6x128xf32>
    tpu.vector_store %arg5[%c0_24, %c1_25, %c0_26, %c0_27], %28 {strides = array<i32>} : memref<1x2x6x128xf32, #tpu.memory_space<vmem>>, vector<1x1x6x128xf32>,
    return
  }
  func.func @transform_0(%arg0: i32, %arg1: i32) -> (i32, i32, i32, i32) {
    %c0_i32 = arith.constant 0 : i32
    %c0_i32_0 = arith.constant 0 : i32
    %c0_i32_1 = arith.constant 0 : i32
    return %arg0, %c0_i32, %arg1, %c0_i32_0 : i32, i32, i32, i32
  }
  func.func @transform_1(%arg0: i32, %arg1: i32) -> (i32, i32, i32, i32) {
    %c0_i32 = arith.constant 0 : i32
    %c0_i32_0 = arith.constant 0 : i32
    %c0_i32_1 = arith.constant 0 : i32
    return %arg0, %c0_i32, %arg1, %c0_i32_0 : i32, i32, i32, i32
  }
  func.func @transform_2(%arg0: i32, %arg1: i32) -> (i32, i32, i32, i32) {
    %c0_i32 = arith.constant 0 : i32
    %c0_i32_0 = arith.constant 0 : i32
    %c0_i32_1 = arith.constant 0 : i32
    return %arg0, %c0_i32, %arg1, %c0_i32_0 : i32, i32, i32, i32
  }
  func.func @transform_3(%arg0: i32, %arg1: i32) -> (i32, i32, i32, i32) {
    %c0_i32 = arith.constant 0 : i32
    %c0_i32_0 = arith.constant 0 : i32
    %c0_i32_1 = arith.constant 0 : i32
    %c0_i32_2 = arith.constant 0 : i32
    return %arg0, %c0_i32, %c0_i32_0, %c0_i32_1 : i32, i32, i32, i32
  }
}

module attributes {stable_mosaic.version = 11 : i64} {
  func.func @_msr_kernel(%arg0: i32, %arg1: i32, %arg2: memref<1x3x1x16xf32, #tpu.memory_space<vmem>>, %arg3: memref<1x3x1x16xf32, #tpu.memory_space<vmem>>, %arg4: memref<1x1x1x16xf32, #tpu.memory_space<vmem>>, %arg5: memref<1x2x3x16xf32, #tpu.memory_space<vmem>>) attributes {dimension_semantics = [#tpu.dimension_semantics<parallel>, #tpu.dimension_semantics<arbitrary>], iteration_bounds = array<i64: 2, 1>, scalar_prefetch = 0 : i64, scratch_operands = 0 : i64, tpu.core_type = #tpu.core_type<tc>, window_params = [{transform_indices = @transform_0, window_bounds = array<i64: 1, 3, 1, 16>}, {transform_indices = @transform_1, window_bounds = array<i64: 1, 3, 1, 16>}, {transform_indices = @transform_2, window_bounds = array<i64: 1, 1, 1, 16>}, {transform_indices = @transform_3, window_bounds = array<i64: 1, 2, 3, 16>}]} {
    %c0_i32 = arith.constant 0 : i32
    %0 = arith.cmpi eq, %arg1, %c0_i32 : i32
    %1 = arith.extui %0 : i1 to i32
    %c0_i32_0 = arith.constant 0 : i32
    %2 = arith.cmpi ne, %1, %c0_i32_0 : i32
    scf.if %2 {
      %cst_28 = arith.constant 0.000000e+00 : f32
      %29 = vector.broadcast %cst_28 : f32 to vector<1x2x3x16xf32>
      %c0_29 = arith.constant 0 : index
      %c0_30 = arith.constant 0 : index
      %c0_31 = arith.constant 0 : index
      %c0_32 = arith.constant 0 : index
      %30 = vector.load %arg5[%c0_29, %c0_30, %c0_31, %c0_32] : memref<1x2x3x16xf32, #tpu.memory_space<vmem>>, vector<1x2x3x16xf32>
      tpu.vector_store %arg5[%c0_29, %c0_30, %c0_31, %c0_32], %29 {strides = array<i32>} : memref<1x2x3x16xf32, #tpu.memory_space<vmem>>, vector<1x2x3x16xf32>,
    } else {
    }
    %c0 = arith.constant 0 : index
    %c0_1 = arith.constant 0 : index
    %c0_2 = arith.constant 0 : index
    %c0_3 = arith.constant 0 : index
    %3 = vector.load %arg2[%c0, %c0_1, %c0_2, %c0_3] : memref<1x3x1x16xf32, #tpu.memory_space<vmem>>, vector<1x3x1x16xf32>
    %4 = vector.shape_cast %3 : vector<1x3x1x16xf32> to vector<3x1x16xf32>
    %c0_4 = arith.constant 0 : index
    %c0_5 = arith.constant 0 : index
    %c0_6 = arith.constant 0 : index
    %c0_7 = arith.constant 0 : index
    %5 = vector.load %arg3[%c0_4, %c0_5, %c0_6, %c0_7] : memref<1x3x1x16xf32, #tpu.memory_space<vmem>>, vector<1x3x1x16xf32>
    %6 = vector.shape_cast %5 : vector<1x3x1x16xf32> to vector<3x1x16xf32>
    %c0_8 = arith.constant 0 : index
    %c0_9 = arith.constant 0 : index
    %c0_10 = arith.constant 0 : index
    %c0_11 = arith.constant 0 : index
    %7 = vector.load %arg4[%c0_8, %c0_9, %c0_10, %c0_11] : memref<1x1x1x16xf32, #tpu.memory_space<vmem>>, vector<1x1x1x16xf32>
    %8 = vector.shape_cast %7 : vector<1x1x1x16xf32> to vector<1x1x16xf32>
    %9 = arith.subf %4, %6 : vector<3x1x16xf32>
    %10 = math.absf %9 : vector<3x1x16xf32>
    %c0_12 = arith.constant 0 : index
    %c0_13 = arith.constant 0 : index
    %c0_14 = arith.constant 0 : index
    %c0_15 = arith.constant 0 : index
    %11 = vector.load %arg5[%c0_12, %c0_13, %c0_14, %c0_15] : memref<1x2x3x16xf32, #tpu.memory_space<vmem>>, vector<1x1x3x16xf32>
    %12 = vector.shape_cast %11 : vector<1x1x3x16xf32> to vector<3x16xf32>
    %13 = vector.shape_cast %10 : vector<3x1x16xf32> to vector<1x3x16xf32>
    %cst = arith.constant dense<0.000000e+00> : vector<3x16xf32>
    %14 = vector.multi_reduction <add>, %13, %cst [0] : vector<1x3x16xf32> to vector<3x16xf32>
    %15 = arith.addf %12, %14 : vector<3x16xf32>
    %c0_16 = arith.constant 0 : index
    %c0_17 = arith.constant 0 : index
    %c0_18 = arith.constant 0 : index
    %c0_19 = arith.constant 0 : index
    %16 = vector.load %arg5[%c0_16, %c0_17, %c0_18, %c0_19] : memref<1x2x3x16xf32, #tpu.memory_space<vmem>>, vector<1x1x3x16xf32>
    %17 = vector.shape_cast %16 : vector<1x1x3x16xf32> to vector<3x16xf32>
    %18 = vector.shape_cast %15 : vector<3x16xf32> to vector<1x1x3x16xf32>
    tpu.vector_store %arg5[%c0_16, %c0_17, %c0_18, %c0_19], %18 {strides = array<i32>} : memref<1x2x3x16xf32, #tpu.memory_space<vmem>>, vector<1x1x3x16xf32>,
    %c0_20 = arith.constant 0 : index
    %c1 = arith.constant 1 : index
    %c0_21 = arith.constant 0 : index
    %c0_22 = arith.constant 0 : index
    %19 = vector.load %arg5[%c0_20, %c1, %c0_21, %c0_22] : memref<1x2x3x16xf32, #tpu.memory_space<vmem>>, vector<1x1x3x16xf32>
    %20 = vector.shape_cast %19 : vector<1x1x3x16xf32> to vector<3x16xf32>
    %21 = vector.broadcast %8 : vector<1x1x16xf32> to vector<3x1x16xf32>
    %22 = arith.mulf %21, %10 : vector<3x1x16xf32>
    %23 = vector.shape_cast %22 : vector<3x1x16xf32> to vector<1x3x16xf32>
    %cst_23 = arith.constant dense<0.000000e+00> : vector<3x16xf32>
    %24 = vector.multi_reduction <add>, %23, %cst_23 [0] : vector<1x3x16xf32> to vector<3x16xf32>
    %25 = arith.addf %20, %24 : vector<3x16xf32>
    %c0_24 = arith.constant 0 : index
    %c1_25 = arith.constant 1 : index
    %c0_26 = arith.constant 0 : index
    %c0_27 = arith.constant 0 : index
    %26 = vector.load %arg5[%c0_24, %c1_25, %c0_26, %c0_27] : memref<1x2x3x16xf32, #tpu.memory_space<vmem>>, vector<1x1x3x16xf32>
    %27 = vector.shape_cast %26 : vector<1x1x3x16xf32> to vector<3x16xf32>
    %28 = vector.shape_cast %25 : vector<3x16xf32> to vector<1x1x3x16xf32>
    tpu.vector_store %arg5[%c0_24, %c1_25, %c0_26, %c0_27], %28 {strides = array<i32>} : memref<1x2x3x16xf32, #tpu.memory_space<vmem>>, vector<1x1x3x16xf32>,
    return
  }
  func.func @transform_0(%arg0: i32, %arg1: i32) -> (i32, i32, i32, i32) {
    %c0_i32 = arith.constant 0 : i32
    %c0_i32_0 = arith.constant 0 : i32
    %c0_i32_1 = arith.constant 0 : i32
    return %arg0, %c0_i32, %arg1, %c0_i32_0 : i32, i32, i32, i32
  }
  func.func @transform_1(%arg0: i32, %arg1: i32) -> (i32, i32, i32, i32) {
    %c0_i32 = arith.constant 0 : i32
    %c0_i32_0 = arith.constant 0 : i32
    %c0_i32_1 = arith.constant 0 : i32
    return %arg0, %c0_i32, %arg1, %c0_i32_0 : i32, i32, i32, i32
  }
  func.func @transform_2(%arg0: i32, %arg1: i32) -> (i32, i32, i32, i32) {
    %c0_i32 = arith.constant 0 : i32
    %c0_i32_0 = arith.constant 0 : i32
    %c0_i32_1 = arith.constant 0 : i32
    return %arg0, %c0_i32, %arg1, %c0_i32_0 : i32, i32, i32, i32
  }
  func.func @transform_3(%arg0: i32, %arg1: i32) -> (i32, i32, i32, i32) {
    %c0_i32 = arith.constant 0 : i32
    %c0_i32_0 = arith.constant 0 : i32
    %c0_i32_1 = arith.constant 0 : i32
    %c0_i32_2 = arith.constant 0 : i32
    return %arg0, %c0_i32, %c0_i32_0, %c0_i32_1 : i32, i32, i32, i32
  }
}

module attributes {stable_mosaic.version = 11 : i64} {
  func.func @_prc_style_kernel(%arg0: i32, %arg1: i32, %arg2: memref<1x8x256xf32, #tpu.memory_space<vmem>>, %arg3: memref<1x8x256xf32, #tpu.memory_space<vmem>>, %arg4: memref<1x8x256xf32, #tpu.memory_space<vmem>>, %arg5: memref<1x1x2xf32, #tpu.memory_space<vmem>>, %arg6: memref<8x256xf32, #tpu.memory_space<vmem>>, %arg7: memref<24x256xf32, #tpu.memory_space<vmem>>, %arg8: memref<24x24xf32, #tpu.memory_space<vmem>>) attributes {dimension_semantics = [#tpu.dimension_semantics<parallel>, #tpu.dimension_semantics<arbitrary>], iteration_bounds = array<i64: 2, 1>, scalar_prefetch = 0 : i64, scratch_operands = 3 : i64, tpu.core_type = #tpu.core_type<tc>, window_params = [{transform_indices = @transform_0, window_bounds = array<i64: 1, 8, 256>}, {transform_indices = @transform_1, window_bounds = array<i64: 1, 8, 256>}, {transform_indices = @transform_2, window_bounds = array<i64: 1, 8, 256>}, {transform_indices = @transform_3, window_bounds = array<i64: 1, 1, 2>}]} {
    %c0_i32 = arith.constant 0 : i32
    %0 = arith.cmpi eq, %arg1, %c0_i32 : i32
    %1 = arith.extui %0 : i1 to i32
    %c0_i32_0 = arith.constant 0 : i32
    %2 = arith.cmpi ne, %1, %c0_i32_0 : i32
    scf.if %2 {
      %cst_26 = arith.constant 0.000000e+00 : f32
      %30 = vector.broadcast %cst_26 : f32 to vector<8x256xf32>
      %c0_27 = arith.constant 0 : index
      %c0_28 = arith.constant 0 : index
      %31 = vector.load %arg6[%c0_27, %c0_28] : memref<8x256xf32, #tpu.memory_space<vmem>>, vector<8x256xf32>
      tpu.vector_store %arg6[%c0_27, %c0_28], %30 {strides = array<i32>} : memref<8x256xf32, #tpu.memory_space<vmem>>, vector<8x256xf32>,
      %cst_29 = arith.constant 0.000000e+00 : f32
      %32 = vector.broadcast %cst_29 : f32 to vector<24x24xf32>
      %c0_30 = arith.constant 0 : index
      %c0_31 = arith.constant 0 : index
      %33 = vector.load %arg8[%c0_30, %c0_31] : memref<24x24xf32, #tpu.memory_space<vmem>>, vector<24x24xf32>
      tpu.vector_store %arg8[%c0_30, %c0_31], %32 {strides = array<i32>} : memref<24x24xf32, #tpu.memory_space<vmem>>, vector<24x24xf32>,
    } else {
    }
    %c0 = arith.constant 0 : index
    %c0_1 = arith.constant 0 : index
    %c0_2 = arith.constant 0 : index
    %3 = vector.load %arg2[%c0, %c0_1, %c0_2] : memref<1x8x256xf32, #tpu.memory_space<vmem>>, vector<1x8x256xf32>
    %4 = vector.shape_cast %3 : vector<1x8x256xf32> to vector<8x256xf32>
    %c0_3 = arith.constant 0 : index
    %c0_4 = arith.constant 0 : index
    %c0_5 = arith.constant 0 : index
    %5 = vector.load %arg3[%c0_3, %c0_4, %c0_5] : memref<1x8x256xf32, #tpu.memory_space<vmem>>, vector<1x8x256xf32>
    %6 = vector.shape_cast %5 : vector<1x8x256xf32> to vector<8x256xf32>
    %c0_6 = arith.constant 0 : index
    %c0_7 = arith.constant 0 : index
    %c0_8 = arith.constant 0 : index
    %7 = vector.load %arg4[%c0_6, %c0_7, %c0_8] : memref<1x8x256xf32, #tpu.memory_space<vmem>>, vector<1x8x256xf32>
    %8 = vector.shape_cast %7 : vector<1x8x256xf32> to vector<8x256xf32>
    %9 = arith.subf %4, %8 : vector<8x256xf32>
    %10 = math.absf %9 : vector<8x256xf32>
    %11 = arith.subf %6, %8 : vector<8x256xf32>
    %12 = math.absf %11 : vector<8x256xf32>
    %13 = arith.addf %10, %12 : vector<8x256xf32>
    %c0_9 = arith.constant 0 : index
    %c0_10 = arith.constant 0 : index
    %14 = vector.load %arg6[%c0_9, %c0_10] : memref<8x256xf32, #tpu.memory_space<vmem>>, vector<8x256xf32>
    %15 = vector.shape_cast %13 : vector<8x256xf32> to vector<1x8x256xf32>
    %cst = arith.constant dense<0.000000e+00> : vector<8x256xf32>
    %16 = vector.multi_reduction <add>, %15, %cst [0] : vector<1x8x256xf32> to vector<8x256xf32>
    %17 = arith.addf %14, %16 : vector<8x256xf32>
    %c0_11 = arith.constant 0 : index
    %c0_12 = arith.constant 0 : index
    %18 = vector.load %arg6[%c0_11, %c0_12] : memref<8x256xf32, #tpu.memory_space<vmem>>, vector<8x256xf32>
    tpu.vector_store %arg6[%c0_11, %c0_12], %17 {strides = array<i32>} : memref<8x256xf32, #tpu.memory_space<vmem>>, vector<8x256xf32>,
    %c0_13 = arith.constant 0 : index
    %c0_14 = arith.constant 0 : index
    %19 = vector.load %arg7[%c0_13, %c0_14] : memref<24x256xf32, #tpu.memory_space<vmem>>, vector<8x256xf32>
    tpu.vector_store %arg7[%c0_13, %c0_14], %4 {strides = array<i32>} : memref<24x256xf32, #tpu.memory_space<vmem>>, vector<8x256xf32>,
    %c8 = arith.constant 8 : index
    %c0_15 = arith.constant 0 : index
    %20 = vector.load %arg7[%c8, %c0_15] : memref<24x256xf32, #tpu.memory_space<vmem>>, vector<8x256xf32>
    tpu.vector_store %arg7[%c8, %c0_15], %6 {strides = array<i32>} : memref<24x256xf32, #tpu.memory_space<vmem>>, vector<8x256xf32>,
    %c16 = arith.constant 16 : index
    %c0_16 = arith.constant 0 : index
    %21 = vector.load %arg7[%c16, %c0_16] : memref<24x256xf32, #tpu.memory_space<vmem>>, vector<8x256xf32>
    tpu.vector_store %arg7[%c16, %c0_16], %8 {strides = array<i32>} : memref<24x256xf32, #tpu.memory_space<vmem>>, vector<8x256xf32>,
    %c0_17 = arith.constant 0 : index
    %c0_18 = arith.constant 0 : index
    %22 = vector.load %arg7[%c0_17, %c0_18] : memref<24x256xf32, #tpu.memory_space<vmem>>, vector<24x256xf32>
    %c0_19 = arith.constant 0 : index
    %c0_20 = arith.constant 0 : index
    %23 = vector.load %arg8[%c0_19, %c0_20] : memref<24x24xf32, #tpu.memory_space<vmem>>, vector<24x24xf32>
    %cst_21 = arith.constant dense<0.000000e+00> : vector<24x24xf32>
    %24 = tpu.matmul %22, %22, %cst_21 {dimension_numbers = #tpu.dot_dimension_numbers<[1], [1], [0], [0], [0, 0, 1, 0], [], []>} : vector<24x256xf32>, vector<24x256xf32>, vector<24x24xf32> -> vector<24x24xf32>
    %25 = arith.addf %23, %24 : vector<24x24xf32>
    %c0_22 = arith.constant 0 : index
    %c0_23 = arith.constant 0 : index
    %26 = vector.load %arg8[%c0_22, %c0_23] : memref<24x24xf32, #tpu.memory_space<vmem>>, vector<24x24xf32>
    tpu.vector_store %arg8[%c0_22, %c0_23], %25 {strides = array<i32>} : memref<24x24xf32, #tpu.memory_space<vmem>>, vector<24x24xf32>,
    %c0_i32_24 = arith.constant 0 : i32
    %27 = arith.cmpi eq, %arg1, %c0_i32_24 : i32
    %28 = arith.extui %27 : i1 to i32
    %c0_i32_25 = arith.constant 0 : i32
    %29 = arith.cmpi ne, %28, %c0_i32_25 : i32
    scf.if %29 {
      %c0_26 = arith.constant 0 : index
      %c0_27 = arith.constant 0 : index
      %30 = vector.load %arg8[%c0_26, %c0_27] : memref<24x24xf32, #tpu.memory_space<vmem>>, vector<24x24xf32>
      %cst_28 = arith.constant 4.8828125E-4 : f32
      %31 = vector.broadcast %cst_28 : f32 to vector<24x24xf32>
      %32 = arith.mulf %30, %31 : vector<24x24xf32>
      %33 = vector.extract_strided_slice %32 {offsets = [0, 0], sizes = [8, 8], strides = [1, 1]} : vector<24x24xf32> to vector<8x8xf32>
      %34 = vector.extract_strided_slice %32 {offsets = [8, 8], sizes = [8, 8], strides = [1, 1]} : vector<24x24xf32> to vector<8x8xf32>
      %35 = vector.extract_strided_slice %32 {offsets = [16, 16], sizes = [8, 8], strides = [1, 1]} : vector<24x24xf32> to vector<8x8xf32>
      %36 = arith.subf %33, %35 : vector<8x8xf32>
      %37 = math.absf %36 : vector<8x8xf32>
      %38 = vector.shape_cast %37 : vector<8x8xf32> to vector<1x8x8xf32>
      %cst_29 = arith.constant dense<0.000000e+00> : vector<1xf32>
      %39 = vector.multi_reduction <add>, %38, %cst_29 [1, 2] : vector<1x8x8xf32> to vector<1xf32>
      %40 = vector.shape_cast %39 : vector<1xf32> to vector<1x1x1xf32>
      %41 = vector.extract %40[0, 0, 0] : f32 from vector<1x1x1xf32>
      %42 = arith.subf %34, %35 : vector<8x8xf32>
      %43 = math.absf %42 : vector<8x8xf32>
      %44 = vector.shape_cast %43 : vector<8x8xf32> to vector<1x8x8xf32>
      %cst_30 = arith.constant dense<0.000000e+00> : vector<1xf32>
      %45 = vector.multi_reduction <add>, %44, %cst_30 [1, 2] : vector<1x8x8xf32> to vector<1xf32>
      %46 = vector.shape_cast %45 : vector<1xf32> to vector<1x1x1xf32>
      %47 = vector.extract %46[0, 0, 0] : f32 from vector<1x1x1xf32>
      %48 = arith.addf %41, %47 : f32
      %c0_31 = arith.constant 0 : index
      %c0_32 = arith.constant 0 : index
      %49 = vector.load %arg6[%c0_31, %c0_32] : memref<8x256xf32, #tpu.memory_space<vmem>>, vector<8x256xf32>
      %50 = vector.shape_cast %49 : vector<8x256xf32> to vector<1x8x256xf32>
      %cst_33 = arith.constant dense<0.000000e+00> : vector<1xf32>
      %51 = vector.multi_reduction <add>, %50, %cst_33 [1, 2] : vector<1x8x256xf32> to vector<1xf32>
      %52 = vector.shape_cast %51 : vector<1xf32> to vector<1x1x1xf32>
      %53 = vector.extract %52[0, 0, 0] : f32 from vector<1x1x1xf32>
      %54 = vector.broadcast %53 : f32 to vector<1x1xf32>
      %c0_34 = arith.constant 0 : index
      %c0_35 = arith.constant 0 : index
      %c0_36 = arith.constant 0 : index
      %55 = vector.load %arg5[%c0_34, %c0_35, %c0_36] : memref<1x1x2xf32, #tpu.memory_space<vmem>>, vector<1x1x1xf32>
      %56 = vector.shape_cast %55 : vector<1x1x1xf32> to vector<1x1xf32>
      %57 = vector.shape_cast %54 : vector<1x1xf32> to vector<1x1x1xf32>
      tpu.vector_store %arg5[%c0_34, %c0_35, %c0_36], %57 {strides = array<i32>} : memref<1x1x2xf32, #tpu.memory_space<vmem>>, vector<1x1x1xf32>,
      %58 = vector.broadcast %48 : f32 to vector<1x1xf32>
      %c0_37 = arith.constant 0 : index
      %c0_38 = arith.constant 0 : index
      %c1 = arith.constant 1 : index
      %59 = vector.load %arg5[%c0_37, %c0_38, %c1] : memref<1x1x2xf32, #tpu.memory_space<vmem>>, vector<1x1x1xf32>
      %60 = vector.shape_cast %59 : vector<1x1x1xf32> to vector<1x1xf32>
      %61 = vector.shape_cast %58 : vector<1x1xf32> to vector<1x1x1xf32>
      tpu.vector_store %arg5[%c0_37, %c0_38, %c1], %61 {strides = array<i32>} : memref<1x1x2xf32, #tpu.memory_space<vmem>>, vector<1x1x1xf32>,
    } else {
    }
    return
  }
  func.func @transform_0(%arg0: i32, %arg1: i32) -> (i32, i32, i32) {
    %c0_i32 = arith.constant 0 : i32
    %c0_i32_0 = arith.constant 0 : i32
    return %arg0, %c0_i32, %arg1 : i32, i32, i32
  }
  func.func @transform_1(%arg0: i32, %arg1: i32) -> (i32, i32, i32) {
    %c0_i32 = arith.constant 0 : i32
    %c0_i32_0 = arith.constant 0 : i32
    return %arg0, %c0_i32, %arg1 : i32, i32, i32
  }
  func.func @transform_2(%arg0: i32, %arg1: i32) -> (i32, i32, i32) {
    %c0_i32 = arith.constant 0 : i32
    %c0_i32_0 = arith.constant 0 : i32
    return %arg0, %c0_i32, %arg1 : i32, i32, i32
  }
  func.func @transform_3(%arg0: i32, %arg1: i32) -> (i32, i32, i32) {
    %c0_i32 = arith.constant 0 : i32
    %c0_i32_0 = arith.constant 0 : i32
    %c0_i32_1 = arith.constant 0 : i32
    return %arg0, %c0_i32, %c0_i32_0 : i32, i32, i32
  }
}

module attributes {stable_mosaic.version = 11 : i64} {
  func.func @_prc_style_kernel(%arg0: i32, %arg1: i32, %arg2: memref<1x16x64xf32, #tpu.memory_space<vmem>>, %arg3: memref<1x16x64xf32, #tpu.memory_space<vmem>>, %arg4: memref<1x16x64xf32, #tpu.memory_space<vmem>>, %arg5: memref<1x1x2xf32, #tpu.memory_space<vmem>>, %arg6: memref<8x64xf32, #tpu.memory_space<vmem>>, %arg7: memref<48x64xf32, #tpu.memory_space<vmem>>, %arg8: memref<48x48xf32, #tpu.memory_space<vmem>>) attributes {dimension_semantics = [#tpu.dimension_semantics<parallel>, #tpu.dimension_semantics<arbitrary>], iteration_bounds = array<i64: 2, 1>, scalar_prefetch = 0 : i64, scratch_operands = 3 : i64, tpu.core_type = #tpu.core_type<tc>, window_params = [{transform_indices = @transform_0, window_bounds = array<i64: 1, 16, 64>}, {transform_indices = @transform_1, window_bounds = array<i64: 1, 16, 64>}, {transform_indices = @transform_2, window_bounds = array<i64: 1, 16, 64>}, {transform_indices = @transform_3, window_bounds = array<i64: 1, 1, 2>}]} {
    %c0_i32 = arith.constant 0 : i32
    %0 = arith.cmpi eq, %arg1, %c0_i32 : i32
    %1 = arith.extui %0 : i1 to i32
    %c0_i32_0 = arith.constant 0 : i32
    %2 = arith.cmpi ne, %1, %c0_i32_0 : i32
    scf.if %2 {
      %cst_26 = arith.constant 0.000000e+00 : f32
      %30 = vector.broadcast %cst_26 : f32 to vector<8x64xf32>
      %c0_27 = arith.constant 0 : index
      %c0_28 = arith.constant 0 : index
      %31 = vector.load %arg6[%c0_27, %c0_28] : memref<8x64xf32, #tpu.memory_space<vmem>>, vector<8x64xf32>
      tpu.vector_store %arg6[%c0_27, %c0_28], %30 {strides = array<i32>} : memref<8x64xf32, #tpu.memory_space<vmem>>, vector<8x64xf32>,
      %cst_29 = arith.constant 0.000000e+00 : f32
      %32 = vector.broadcast %cst_29 : f32 to vector<48x48xf32>
      %c0_30 = arith.constant 0 : index
      %c0_31 = arith.constant 0 : index
      %33 = vector.load %arg8[%c0_30, %c0_31] : memref<48x48xf32, #tpu.memory_space<vmem>>, vector<48x48xf32>
      tpu.vector_store %arg8[%c0_30, %c0_31], %32 {strides = array<i32>} : memref<48x48xf32, #tpu.memory_space<vmem>>, vector<48x48xf32>,
    } else {
    }
    %c0 = arith.constant 0 : index
    %c0_1 = arith.constant 0 : index
    %c0_2 = arith.constant 0 : index
    %3 = vector.load %arg2[%c0, %c0_1, %c0_2] : memref<1x16x64xf32, #tpu.memory_space<vmem>>, vector<1x16x64xf32>
    %4 = vector.shape_cast %3 : vector<1x16x64xf32> to vector<16x64xf32>
    %c0_3 = arith.constant 0 : index
    %c0_4 = arith.constant 0 : index
    %c0_5 = arith.constant 0 : index
    %5 = vector.load %arg3[%c0_3, %c0_4, %c0_5] : memref<1x16x64xf32, #tpu.memory_space<vmem>>, vector<1x16x64xf32>
    %6 = vector.shape_cast %5 : vector<1x16x64xf32> to vector<16x64xf32>
    %c0_6 = arith.constant 0 : index
    %c0_7 = arith.constant 0 : index
    %c0_8 = arith.constant 0 : index
    %7 = vector.load %arg4[%c0_6, %c0_7, %c0_8] : memref<1x16x64xf32, #tpu.memory_space<vmem>>, vector<1x16x64xf32>
    %8 = vector.shape_cast %7 : vector<1x16x64xf32> to vector<16x64xf32>
    %9 = arith.subf %4, %8 : vector<16x64xf32>
    %10 = math.absf %9 : vector<16x64xf32>
    %11 = arith.subf %6, %8 : vector<16x64xf32>
    %12 = math.absf %11 : vector<16x64xf32>
    %13 = arith.addf %10, %12 : vector<16x64xf32>
    %c0_9 = arith.constant 0 : index
    %c0_10 = arith.constant 0 : index
    %14 = vector.load %arg6[%c0_9, %c0_10] : memref<8x64xf32, #tpu.memory_space<vmem>>, vector<8x64xf32>
    %15 = vector.shape_cast %13 : vector<16x64xf32> to vector<2x8x64xf32>
    %cst = arith.constant dense<0.000000e+00> : vector<8x64xf32>
    %16 = vector.multi_reduction <add>, %15, %cst [0] : vector<2x8x64xf32> to vector<8x64xf32>
    %17 = arith.addf %14, %16 : vector<8x64xf32>
    %c0_11 = arith.constant 0 : index
    %c0_12 = arith.constant 0 : index
    %18 = vector.load %arg6[%c0_11, %c0_12] : memref<8x64xf32, #tpu.memory_space<vmem>>, vector<8x64xf32>
    tpu.vector_store %arg6[%c0_11, %c0_12], %17 {strides = array<i32>} : memref<8x64xf32, #tpu.memory_space<vmem>>, vector<8x64xf32>,
    %c0_13 = arith.constant 0 : index
    %c0_14 = arith.constant 0 : index
    %19 = vector.load %arg7[%c0_13, %c0_14] : memref<48x64xf32, #tpu.memory_space<vmem>>, vector<16x64xf32>
    tpu.vector_store %arg7[%c0_13, %c0_14], %4 {strides = array<i32>} : memref<48x64xf32, #tpu.memory_space<vmem>>, vector<16x64xf32>,
    %c16 = arith.constant 16 : index
    %c0_15 = arith.constant 0 : index
    %20 = vector.load %arg7[%c16, %c0_15] : memref<48x64xf32, #tpu.memory_space<vmem>>, vector<16x64xf32>
    tpu.vector_store %arg7[%c16, %c0_15], %6 {strides = array<i32>} : memref<48x64xf32, #tpu.memory_space<vmem>>, vector<16x64xf32>,
    %c32 = arith.constant 32 : index
    %c0_16 = arith.constant 0 : index
    %21 = vector.load %arg7[%c32, %c0_16] : memref<48x64xf32, #tpu.memory_space<vmem>>, vector<16x64xf32>
    tpu.vector_store %arg7[%c32, %c0_16], %8 {strides = array<i32>} : memref<48x64xf32, #tpu.memory_space<vmem>>, vector<16x64xf32>,
    %c0_17 = arith.constant 0 : index
    %c0_18 = arith.constant 0 : index
    %22 = vector.load %arg7[%c0_17, %c0_18] : memref<48x64xf32, #tpu.memory_space<vmem>>, vector<48x64xf32>
    %c0_19 = arith.constant 0 : index
    %c0_20 = arith.constant 0 : index
    %23 = vector.load %arg8[%c0_19, %c0_20] : memref<48x48xf32, #tpu.memory_space<vmem>>, vector<48x48xf32>
    %cst_21 = arith.constant dense<0.000000e+00> : vector<48x48xf32>
    %24 = tpu.matmul %22, %22, %cst_21 {dimension_numbers = #tpu.dot_dimension_numbers<[1], [1], [0], [0], [0, 0, 1, 0], [], []>} : vector<48x64xf32>, vector<48x64xf32>, vector<48x48xf32> -> vector<48x48xf32>
    %25 = arith.addf %23, %24 : vector<48x48xf32>
    %c0_22 = arith.constant 0 : index
    %c0_23 = arith.constant 0 : index
    %26 = vector.load %arg8[%c0_22, %c0_23] : memref<48x48xf32, #tpu.memory_space<vmem>>, vector<48x48xf32>
    tpu.vector_store %arg8[%c0_22, %c0_23], %25 {strides = array<i32>} : memref<48x48xf32, #tpu.memory_space<vmem>>, vector<48x48xf32>,
    %c0_i32_24 = arith.constant 0 : i32
    %27 = arith.cmpi eq, %arg1, %c0_i32_24 : i32
    %28 = arith.extui %27 : i1 to i32
    %c0_i32_25 = arith.constant 0 : i32
    %29 = arith.cmpi ne, %28, %c0_i32_25 : i32
    scf.if %29 {
      %c0_26 = arith.constant 0 : index
      %c0_27 = arith.constant 0 : index
      %30 = vector.load %arg8[%c0_26, %c0_27] : memref<48x48xf32, #tpu.memory_space<vmem>>, vector<48x48xf32>
      %cst_28 = arith.constant 9.765625E-4 : f32
      %31 = vector.broadcast %cst_28 : f32 to vector<48x48xf32>
      %32 = arith.mulf %30, %31 : vector<48x48xf32>
      %33 = vector.extract_strided_slice %32 {offsets = [0, 0], sizes = [16, 16], strides = [1, 1]} : vector<48x48xf32> to vector<16x16xf32>
      %34 = vector.extract_strided_slice %32 {offsets = [16, 16], sizes = [16, 16], strides = [1, 1]} : vector<48x48xf32> to vector<16x16xf32>
      %35 = vector.extract_strided_slice %32 {offsets = [32, 32], sizes = [16, 16], strides = [1, 1]} : vector<48x48xf32> to vector<16x16xf32>
      %36 = arith.subf %33, %35 : vector<16x16xf32>
      %37 = math.absf %36 : vector<16x16xf32>
      %38 = vector.shape_cast %37 : vector<16x16xf32> to vector<1x16x16xf32>
      %cst_29 = arith.constant dense<0.000000e+00> : vector<1xf32>
      %39 = vector.multi_reduction <add>, %38, %cst_29 [1, 2] : vector<1x16x16xf32> to vector<1xf32>
      %40 = vector.shape_cast %39 : vector<1xf32> to vector<1x1x1xf32>
      %41 = vector.extract %40[0, 0, 0] : f32 from vector<1x1x1xf32>
      %42 = arith.subf %34, %35 : vector<16x16xf32>
      %43 = math.absf %42 : vector<16x16xf32>
      %44 = vector.shape_cast %43 : vector<16x16xf32> to vector<1x16x16xf32>
      %cst_30 = arith.constant dense<0.000000e+00> : vector<1xf32>
      %45 = vector.multi_reduction <add>, %44, %cst_30 [1, 2] : vector<1x16x16xf32> to vector<1xf32>
      %46 = vector.shape_cast %45 : vector<1xf32> to vector<1x1x1xf32>
      %47 = vector.extract %46[0, 0, 0] : f32 from vector<1x1x1xf32>
      %48 = arith.addf %41, %47 : f32
      %c0_31 = arith.constant 0 : index
      %c0_32 = arith.constant 0 : index
      %49 = vector.load %arg6[%c0_31, %c0_32] : memref<8x64xf32, #tpu.memory_space<vmem>>, vector<8x64xf32>
      %50 = vector.shape_cast %49 : vector<8x64xf32> to vector<1x8x64xf32>
      %cst_33 = arith.constant dense<0.000000e+00> : vector<1xf32>
      %51 = vector.multi_reduction <add>, %50, %cst_33 [1, 2] : vector<1x8x64xf32> to vector<1xf32>
      %52 = vector.shape_cast %51 : vector<1xf32> to vector<1x1x1xf32>
      %53 = vector.extract %52[0, 0, 0] : f32 from vector<1x1x1xf32>
      %54 = vector.broadcast %53 : f32 to vector<1x1xf32>
      %c0_34 = arith.constant 0 : index
      %c0_35 = arith.constant 0 : index
      %c0_36 = arith.constant 0 : index
      %55 = vector.load %arg5[%c0_34, %c0_35, %c0_36] : memref<1x1x2xf32, #tpu.memory_space<vmem>>, vector<1x1x1xf32>
      %56 = vector.shape_cast %55 : vector<1x1x1xf32> to vector<1x1xf32>
      %57 = vector.shape_cast %54 : vector<1x1xf32> to vector<1x1x1xf32>
      tpu.vector_store %arg5[%c0_34, %c0_35, %c0_36], %57 {strides = array<i32>} : memref<1x1x2xf32, #tpu.memory_space<vmem>>, vector<1x1x1xf32>,
      %58 = vector.broadcast %48 : f32 to vector<1x1xf32>
      %c0_37 = arith.constant 0 : index
      %c0_38 = arith.constant 0 : index
      %c1 = arith.constant 1 : index
      %59 = vector.load %arg5[%c0_37, %c0_38, %c1] : memref<1x1x2xf32, #tpu.memory_space<vmem>>, vector<1x1x1xf32>
      %60 = vector.shape_cast %59 : vector<1x1x1xf32> to vector<1x1xf32>
      %61 = vector.shape_cast %58 : vector<1x1xf32> to vector<1x1x1xf32>
      tpu.vector_store %arg5[%c0_37, %c0_38, %c1], %61 {strides = array<i32>} : memref<1x1x2xf32, #tpu.memory_space<vmem>>, vector<1x1x1xf32>,
    } else {
    }
    return
  }
  func.func @transform_0(%arg0: i32, %arg1: i32) -> (i32, i32, i32) {
    %c0_i32 = arith.constant 0 : i32
    %c0_i32_0 = arith.constant 0 : i32
    return %arg0, %c0_i32, %arg1 : i32, i32, i32
  }
  func.func @transform_1(%arg0: i32, %arg1: i32) -> (i32, i32, i32) {
    %c0_i32 = arith.constant 0 : i32
    %c0_i32_0 = arith.constant 0 : i32
    return %arg0, %c0_i32, %arg1 : i32, i32, i32
  }
  func.func @transform_2(%arg0: i32, %arg1: i32) -> (i32, i32, i32) {
    %c0_i32 = arith.constant 0 : i32
    %c0_i32_0 = arith.constant 0 : i32
    return %arg0, %c0_i32, %arg1 : i32, i32, i32
  }
  func.func @transform_3(%arg0: i32, %arg1: i32) -> (i32, i32, i32) {
    %c0_i32 = arith.constant 0 : i32
    %c0_i32_0 = arith.constant 0 : i32
    %c0_i32_1 = arith.constant 0 : i32
    return %arg0, %c0_i32, %c0_i32_0 : i32, i32, i32
  }
}

module attributes {stable_mosaic.version = 11 : i64} {
  func.func @_msr_kernel(%arg0: i32, %arg1: i32, %arg2: memref<1x3x1x64xf32, #tpu.memory_space<vmem>>, %arg3: memref<1x3x1x64xf32, #tpu.memory_space<vmem>>, %arg4: memref<1x1x1x64xf32, #tpu.memory_space<vmem>>, %arg5: memref<1x2x3x64xf32, #tpu.memory_space<vmem>>) attributes {dimension_semantics = [#tpu.dimension_semantics<parallel>, #tpu.dimension_semantics<arbitrary>], iteration_bounds = array<i64: 2, 1>, scalar_prefetch = 0 : i64, scratch_operands = 0 : i64, tpu.core_type = #tpu.core_type<tc>, window_params = [{transform_indices = @transform_0, window_bounds = array<i64: 1, 3, 1, 64>}, {transform_indices = @transform_1, window_bounds = array<i64: 1, 3, 1, 64>}, {transform_indices = @transform_2, window_bounds = array<i64: 1, 1, 1, 64>}, {transform_indices = @transform_3, window_bounds = array<i64: 1, 2, 3, 64>}]} {
    %c0_i32 = arith.constant 0 : i32
    %0 = arith.cmpi eq, %arg1, %c0_i32 : i32
    %1 = arith.extui %0 : i1 to i32
    %c0_i32_0 = arith.constant 0 : i32
    %2 = arith.cmpi ne, %1, %c0_i32_0 : i32
    scf.if %2 {
      %cst_28 = arith.constant 0.000000e+00 : f32
      %29 = vector.broadcast %cst_28 : f32 to vector<1x2x3x64xf32>
      %c0_29 = arith.constant 0 : index
      %c0_30 = arith.constant 0 : index
      %c0_31 = arith.constant 0 : index
      %c0_32 = arith.constant 0 : index
      %30 = vector.load %arg5[%c0_29, %c0_30, %c0_31, %c0_32] : memref<1x2x3x64xf32, #tpu.memory_space<vmem>>, vector<1x2x3x64xf32>
      tpu.vector_store %arg5[%c0_29, %c0_30, %c0_31, %c0_32], %29 {strides = array<i32>} : memref<1x2x3x64xf32, #tpu.memory_space<vmem>>, vector<1x2x3x64xf32>,
    } else {
    }
    %c0 = arith.constant 0 : index
    %c0_1 = arith.constant 0 : index
    %c0_2 = arith.constant 0 : index
    %c0_3 = arith.constant 0 : index
    %3 = vector.load %arg2[%c0, %c0_1, %c0_2, %c0_3] : memref<1x3x1x64xf32, #tpu.memory_space<vmem>>, vector<1x3x1x64xf32>
    %4 = vector.shape_cast %3 : vector<1x3x1x64xf32> to vector<3x1x64xf32>
    %c0_4 = arith.constant 0 : index
    %c0_5 = arith.constant 0 : index
    %c0_6 = arith.constant 0 : index
    %c0_7 = arith.constant 0 : index
    %5 = vector.load %arg3[%c0_4, %c0_5, %c0_6, %c0_7] : memref<1x3x1x64xf32, #tpu.memory_space<vmem>>, vector<1x3x1x64xf32>
    %6 = vector.shape_cast %5 : vector<1x3x1x64xf32> to vector<3x1x64xf32>
    %c0_8 = arith.constant 0 : index
    %c0_9 = arith.constant 0 : index
    %c0_10 = arith.constant 0 : index
    %c0_11 = arith.constant 0 : index
    %7 = vector.load %arg4[%c0_8, %c0_9, %c0_10, %c0_11] : memref<1x1x1x64xf32, #tpu.memory_space<vmem>>, vector<1x1x1x64xf32>
    %8 = vector.shape_cast %7 : vector<1x1x1x64xf32> to vector<1x1x64xf32>
    %9 = arith.subf %4, %6 : vector<3x1x64xf32>
    %10 = math.absf %9 : vector<3x1x64xf32>
    %c0_12 = arith.constant 0 : index
    %c0_13 = arith.constant 0 : index
    %c0_14 = arith.constant 0 : index
    %c0_15 = arith.constant 0 : index
    %11 = vector.load %arg5[%c0_12, %c0_13, %c0_14, %c0_15] : memref<1x2x3x64xf32, #tpu.memory_space<vmem>>, vector<1x1x3x64xf32>
    %12 = vector.shape_cast %11 : vector<1x1x3x64xf32> to vector<3x64xf32>
    %13 = vector.shape_cast %10 : vector<3x1x64xf32> to vector<1x3x64xf32>
    %cst = arith.constant dense<0.000000e+00> : vector<3x64xf32>
    %14 = vector.multi_reduction <add>, %13, %cst [0] : vector<1x3x64xf32> to vector<3x64xf32>
    %15 = arith.addf %12, %14 : vector<3x64xf32>
    %c0_16 = arith.constant 0 : index
    %c0_17 = arith.constant 0 : index
    %c0_18 = arith.constant 0 : index
    %c0_19 = arith.constant 0 : index
    %16 = vector.load %arg5[%c0_16, %c0_17, %c0_18, %c0_19] : memref<1x2x3x64xf32, #tpu.memory_space<vmem>>, vector<1x1x3x64xf32>
    %17 = vector.shape_cast %16 : vector<1x1x3x64xf32> to vector<3x64xf32>
    %18 = vector.shape_cast %15 : vector<3x64xf32> to vector<1x1x3x64xf32>
    tpu.vector_store %arg5[%c0_16, %c0_17, %c0_18, %c0_19], %18 {strides = array<i32>} : memref<1x2x3x64xf32, #tpu.memory_space<vmem>>, vector<1x1x3x64xf32>,
    %c0_20 = arith.constant 0 : index
    %c1 = arith.constant 1 : index
    %c0_21 = arith.constant 0 : index
    %c0_22 = arith.constant 0 : index
    %19 = vector.load %arg5[%c0_20, %c1, %c0_21, %c0_22] : memref<1x2x3x64xf32, #tpu.memory_space<vmem>>, vector<1x1x3x64xf32>
    %20 = vector.shape_cast %19 : vector<1x1x3x64xf32> to vector<3x64xf32>
    %21 = vector.broadcast %8 : vector<1x1x64xf32> to vector<3x1x64xf32>
    %22 = arith.mulf %21, %10 : vector<3x1x64xf32>
    %23 = vector.shape_cast %22 : vector<3x1x64xf32> to vector<1x3x64xf32>
    %cst_23 = arith.constant dense<0.000000e+00> : vector<3x64xf32>
    %24 = vector.multi_reduction <add>, %23, %cst_23 [0] : vector<1x3x64xf32> to vector<3x64xf32>
    %25 = arith.addf %20, %24 : vector<3x64xf32>
    %c0_24 = arith.constant 0 : index
    %c1_25 = arith.constant 1 : index
    %c0_26 = arith.constant 0 : index
    %c0_27 = arith.constant 0 : index
    %26 = vector.load %arg5[%c0_24, %c1_25, %c0_26, %c0_27] : memref<1x2x3x64xf32, #tpu.memory_space<vmem>>, vector<1x1x3x64xf32>
    %27 = vector.shape_cast %26 : vector<1x1x3x64xf32> to vector<3x64xf32>
    %28 = vector.shape_cast %25 : vector<3x64xf32> to vector<1x1x3x64xf32>
    tpu.vector_store %arg5[%c0_24, %c1_25, %c0_26, %c0_27], %28 {strides = array<i32>} : memref<1x2x3x64xf32, #tpu.memory_space<vmem>>, vector<1x1x3x64xf32>,
    return
  }
  func.func @transform_0(%arg0: i32, %arg1: i32) -> (i32, i32, i32, i32) {
    %c0_i32 = arith.constant 0 : i32
    %c0_i32_0 = arith.constant 0 : i32
    %c0_i32_1 = arith.constant 0 : i32
    return %arg0, %c0_i32, %arg1, %c0_i32_0 : i32, i32, i32, i32
  }
  func.func @transform_1(%arg0: i32, %arg1: i32) -> (i32, i32, i32, i32) {
    %c0_i32 = arith.constant 0 : i32
    %c0_i32_0 = arith.constant 0 : i32
    %c0_i32_1 = arith.constant 0 : i32
    return %arg0, %c0_i32, %arg1, %c0_i32_0 : i32, i32, i32, i32
  }
  func.func @transform_2(%arg0: i32, %arg1: i32) -> (i32, i32, i32, i32) {
    %c0_i32 = arith.constant 0 : i32
    %c0_i32_0 = arith.constant 0 : i32
    %c0_i32_1 = arith.constant 0 : i32
    return %arg0, %c0_i32, %arg1, %c0_i32_0 : i32, i32, i32, i32
  }
  func.func @transform_3(%arg0: i32, %arg1: i32) -> (i32, i32, i32, i32) {
    %c0_i32 = arith.constant 0 : i32
    %c0_i32_0 = arith.constant 0 : i32
    %c0_i32_1 = arith.constant 0 : i32
    %c0_i32_2 = arith.constant 0 : i32
    return %arg0, %c0_i32, %c0_i32_0, %c0_i32_1 : i32, i32, i32, i32
  }
}

module attributes {stable_mosaic.version = 11 : i64} {
  func.func @_prc_style_kernel(%arg0: i32, %arg1: i32, %arg2: memref<1x32x16xf32, #tpu.memory_space<vmem>>, %arg3: memref<1x32x16xf32, #tpu.memory_space<vmem>>, %arg4: memref<1x32x16xf32, #tpu.memory_space<vmem>>, %arg5: memref<1x1x2xf32, #tpu.memory_space<vmem>>, %arg6: memref<8x16xf32, #tpu.memory_space<vmem>>, %arg7: memref<96x16xf32, #tpu.memory_space<vmem>>, %arg8: memref<96x96xf32, #tpu.memory_space<vmem>>) attributes {dimension_semantics = [#tpu.dimension_semantics<parallel>, #tpu.dimension_semantics<arbitrary>], iteration_bounds = array<i64: 2, 1>, scalar_prefetch = 0 : i64, scratch_operands = 3 : i64, tpu.core_type = #tpu.core_type<tc>, window_params = [{transform_indices = @transform_0, window_bounds = array<i64: 1, 32, 16>}, {transform_indices = @transform_1, window_bounds = array<i64: 1, 32, 16>}, {transform_indices = @transform_2, window_bounds = array<i64: 1, 32, 16>}, {transform_indices = @transform_3, window_bounds = array<i64: 1, 1, 2>}]} {
    %c0_i32 = arith.constant 0 : i32
    %0 = arith.cmpi eq, %arg1, %c0_i32 : i32
    %1 = arith.extui %0 : i1 to i32
    %c0_i32_0 = arith.constant 0 : i32
    %2 = arith.cmpi ne, %1, %c0_i32_0 : i32
    scf.if %2 {
      %cst_26 = arith.constant 0.000000e+00 : f32
      %30 = vector.broadcast %cst_26 : f32 to vector<8x16xf32>
      %c0_27 = arith.constant 0 : index
      %c0_28 = arith.constant 0 : index
      %31 = vector.load %arg6[%c0_27, %c0_28] : memref<8x16xf32, #tpu.memory_space<vmem>>, vector<8x16xf32>
      tpu.vector_store %arg6[%c0_27, %c0_28], %30 {strides = array<i32>} : memref<8x16xf32, #tpu.memory_space<vmem>>, vector<8x16xf32>,
      %cst_29 = arith.constant 0.000000e+00 : f32
      %32 = vector.broadcast %cst_29 : f32 to vector<96x96xf32>
      %c0_30 = arith.constant 0 : index
      %c0_31 = arith.constant 0 : index
      %33 = vector.load %arg8[%c0_30, %c0_31] : memref<96x96xf32, #tpu.memory_space<vmem>>, vector<96x96xf32>
      tpu.vector_store %arg8[%c0_30, %c0_31], %32 {strides = array<i32>} : memref<96x96xf32, #tpu.memory_space<vmem>>, vector<96x96xf32>,
    } else {
    }
    %c0 = arith.constant 0 : index
    %c0_1 = arith.constant 0 : index
    %c0_2 = arith.constant 0 : index
    %3 = vector.load %arg2[%c0, %c0_1, %c0_2] : memref<1x32x16xf32, #tpu.memory_space<vmem>>, vector<1x32x16xf32>
    %4 = vector.shape_cast %3 : vector<1x32x16xf32> to vector<32x16xf32>
    %c0_3 = arith.constant 0 : index
    %c0_4 = arith.constant 0 : index
    %c0_5 = arith.constant 0 : index
    %5 = vector.load %arg3[%c0_3, %c0_4, %c0_5] : memref<1x32x16xf32, #tpu.memory_space<vmem>>, vector<1x32x16xf32>
    %6 = vector.shape_cast %5 : vector<1x32x16xf32> to vector<32x16xf32>
    %c0_6 = arith.constant 0 : index
    %c0_7 = arith.constant 0 : index
    %c0_8 = arith.constant 0 : index
    %7 = vector.load %arg4[%c0_6, %c0_7, %c0_8] : memref<1x32x16xf32, #tpu.memory_space<vmem>>, vector<1x32x16xf32>
    %8 = vector.shape_cast %7 : vector<1x32x16xf32> to vector<32x16xf32>
    %9 = arith.subf %4, %8 : vector<32x16xf32>
    %10 = math.absf %9 : vector<32x16xf32>
    %11 = arith.subf %6, %8 : vector<32x16xf32>
    %12 = math.absf %11 : vector<32x16xf32>
    %13 = arith.addf %10, %12 : vector<32x16xf32>
    %c0_9 = arith.constant 0 : index
    %c0_10 = arith.constant 0 : index
    %14 = vector.load %arg6[%c0_9, %c0_10] : memref<8x16xf32, #tpu.memory_space<vmem>>, vector<8x16xf32>
    %15 = vector.shape_cast %13 : vector<32x16xf32> to vector<4x8x16xf32>
    %cst = arith.constant dense<0.000000e+00> : vector<8x16xf32>
    %16 = vector.multi_reduction <add>, %15, %cst [0] : vector<4x8x16xf32> to vector<8x16xf32>
    %17 = arith.addf %14, %16 : vector<8x16xf32>
    %c0_11 = arith.constant 0 : index
    %c0_12 = arith.constant 0 : index
    %18 = vector.load %arg6[%c0_11, %c0_12] : memref<8x16xf32, #tpu.memory_space<vmem>>, vector<8x16xf32>
    tpu.vector_store %arg6[%c0_11, %c0_12], %17 {strides = array<i32>} : memref<8x16xf32, #tpu.memory_space<vmem>>, vector<8x16xf32>,
    %c0_13 = arith.constant 0 : index
    %c0_14 = arith.constant 0 : index
    %19 = vector.load %arg7[%c0_13, %c0_14] : memref<96x16xf32, #tpu.memory_space<vmem>>, vector<32x16xf32>
    tpu.vector_store %arg7[%c0_13, %c0_14], %4 {strides = array<i32>} : memref<96x16xf32, #tpu.memory_space<vmem>>, vector<32x16xf32>,
    %c32 = arith.constant 32 : index
    %c0_15 = arith.constant 0 : index
    %20 = vector.load %arg7[%c32, %c0_15] : memref<96x16xf32, #tpu.memory_space<vmem>>, vector<32x16xf32>
    tpu.vector_store %arg7[%c32, %c0_15], %6 {strides = array<i32>} : memref<96x16xf32, #tpu.memory_space<vmem>>, vector<32x16xf32>,
    %c64 = arith.constant 64 : index
    %c0_16 = arith.constant 0 : index
    %21 = vector.load %arg7[%c64, %c0_16] : memref<96x16xf32, #tpu.memory_space<vmem>>, vector<32x16xf32>
    tpu.vector_store %arg7[%c64, %c0_16], %8 {strides = array<i32>} : memref<96x16xf32, #tpu.memory_space<vmem>>, vector<32x16xf32>,
    %c0_17 = arith.constant 0 : index
    %c0_18 = arith.constant 0 : index
    %22 = vector.load %arg7[%c0_17, %c0_18] : memref<96x16xf32, #tpu.memory_space<vmem>>, vector<96x16xf32>
    %c0_19 = arith.constant 0 : index
    %c0_20 = arith.constant 0 : index
    %23 = vector.load %arg8[%c0_19, %c0_20] : memref<96x96xf32, #tpu.memory_space<vmem>>, vector<96x96xf32>
    %cst_21 = arith.constant dense<0.000000e+00> : vector<96x96xf32>
    %24 = tpu.matmul %22, %22, %cst_21 {dimension_numbers = #tpu.dot_dimension_numbers<[1], [1], [0], [0], [0, 0, 1, 0], [], []>} : vector<96x16xf32>, vector<96x16xf32>, vector<96x96xf32> -> vector<96x96xf32>
    %25 = arith.addf %23, %24 : vector<96x96xf32>
    %c0_22 = arith.constant 0 : index
    %c0_23 = arith.constant 0 : index
    %26 = vector.load %arg8[%c0_22, %c0_23] : memref<96x96xf32, #tpu.memory_space<vmem>>, vector<96x96xf32>
    tpu.vector_store %arg8[%c0_22, %c0_23], %25 {strides = array<i32>} : memref<96x96xf32, #tpu.memory_space<vmem>>, vector<96x96xf32>,
    %c0_i32_24 = arith.constant 0 : i32
    %27 = arith.cmpi eq, %arg1, %c0_i32_24 : i32
    %28 = arith.extui %27 : i1 to i32
    %c0_i32_25 = arith.constant 0 : i32
    %29 = arith.cmpi ne, %28, %c0_i32_25 : i32
    scf.if %29 {
      %c0_26 = arith.constant 0 : index
      %c0_27 = arith.constant 0 : index
      %30 = vector.load %arg8[%c0_26, %c0_27] : memref<96x96xf32, #tpu.memory_space<vmem>>, vector<96x96xf32>
      %cst_28 = arith.constant 0.001953125 : f32
      %31 = vector.broadcast %cst_28 : f32 to vector<96x96xf32>
      %32 = arith.mulf %30, %31 : vector<96x96xf32>
      %33 = vector.extract_strided_slice %32 {offsets = [0, 0], sizes = [32, 32], strides = [1, 1]} : vector<96x96xf32> to vector<32x32xf32>
      %34 = vector.extract_strided_slice %32 {offsets = [32, 32], sizes = [32, 32], strides = [1, 1]} : vector<96x96xf32> to vector<32x32xf32>
      %35 = vector.extract_strided_slice %32 {offsets = [64, 64], sizes = [32, 32], strides = [1, 1]} : vector<96x96xf32> to vector<32x32xf32>
      %36 = arith.subf %33, %35 : vector<32x32xf32>
      %37 = math.absf %36 : vector<32x32xf32>
      %38 = vector.shape_cast %37 : vector<32x32xf32> to vector<1x32x32xf32>
      %cst_29 = arith.constant dense<0.000000e+00> : vector<1xf32>
      %39 = vector.multi_reduction <add>, %38, %cst_29 [1, 2] : vector<1x32x32xf32> to vector<1xf32>
      %40 = vector.shape_cast %39 : vector<1xf32> to vector<1x1x1xf32>
      %41 = vector.extract %40[0, 0, 0] : f32 from vector<1x1x1xf32>
      %42 = arith.subf %34, %35 : vector<32x32xf32>
      %43 = math.absf %42 : vector<32x32xf32>
      %44 = vector.shape_cast %43 : vector<32x32xf32> to vector<1x32x32xf32>
      %cst_30 = arith.constant dense<0.000000e+00> : vector<1xf32>
      %45 = vector.multi_reduction <add>, %44, %cst_30 [1, 2] : vector<1x32x32xf32> to vector<1xf32>
      %46 = vector.shape_cast %45 : vector<1xf32> to vector<1x1x1xf32>
      %47 = vector.extract %46[0, 0, 0] : f32 from vector<1x1x1xf32>
      %48 = arith.addf %41, %47 : f32
      %c0_31 = arith.constant 0 : index
      %c0_32 = arith.constant 0 : index
      %49 = vector.load %arg6[%c0_31, %c0_32] : memref<8x16xf32, #tpu.memory_space<vmem>>, vector<8x16xf32>
      %50 = vector.shape_cast %49 : vector<8x16xf32> to vector<1x8x16xf32>
      %cst_33 = arith.constant dense<0.000000e+00> : vector<1xf32>
      %51 = vector.multi_reduction <add>, %50, %cst_33 [1, 2] : vector<1x8x16xf32> to vector<1xf32>
      %52 = vector.shape_cast %51 : vector<1xf32> to vector<1x1x1xf32>
      %53 = vector.extract %52[0, 0, 0] : f32 from vector<1x1x1xf32>
      %54 = vector.broadcast %53 : f32 to vector<1x1xf32>
      %c0_34 = arith.constant 0 : index
      %c0_35 = arith.constant 0 : index
      %c0_36 = arith.constant 0 : index
      %55 = vector.load %arg5[%c0_34, %c0_35, %c0_36] : memref<1x1x2xf32, #tpu.memory_space<vmem>>, vector<1x1x1xf32>
      %56 = vector.shape_cast %55 : vector<1x1x1xf32> to vector<1x1xf32>
      %57 = vector.shape_cast %54 : vector<1x1xf32> to vector<1x1x1xf32>
      tpu.vector_store %arg5[%c0_34, %c0_35, %c0_36], %57 {strides = array<i32>} : memref<1x1x2xf32, #tpu.memory_space<vmem>>, vector<1x1x1xf32>,
      %58 = vector.broadcast %48 : f32 to vector<1x1xf32>
      %c0_37 = arith.constant 0 : index
      %c0_38 = arith.constant 0 : index
      %c1 = arith.constant 1 : index
      %59 = vector.load %arg5[%c0_37, %c0_38, %c1] : memref<1x1x2xf32, #tpu.memory_space<vmem>>, vector<1x1x1xf32>
      %60 = vector.shape_cast %59 : vector<1x1x1xf32> to vector<1x1xf32>
      %61 = vector.shape_cast %58 : vector<1x1xf32> to vector<1x1x1xf32>
      tpu.vector_store %arg5[%c0_37, %c0_38, %c1], %61 {strides = array<i32>} : memref<1x1x2xf32, #tpu.memory_space<vmem>>, vector<1x1x1xf32>,
    } else {
    }
    return
  }
  func.func @transform_0(%arg0: i32, %arg1: i32) -> (i32, i32, i32) {
    %c0_i32 = arith.constant 0 : i32
    %c0_i32_0 = arith.constant 0 : i32
    return %arg0, %c0_i32, %arg1 : i32, i32, i32
  }
  func.func @transform_1(%arg0: i32, %arg1: i32) -> (i32, i32, i32) {
    %c0_i32 = arith.constant 0 : i32
    %c0_i32_0 = arith.constant 0 : i32
    return %arg0, %c0_i32, %arg1 : i32, i32, i32
  }
  func.func @transform_2(%arg0: i32, %arg1: i32) -> (i32, i32, i32) {
    %c0_i32 = arith.constant 0 : i32
    %c0_i32_0 = arith.constant 0 : i32
    return %arg0, %c0_i32, %arg1 : i32, i32, i32
  }
  func.func @transform_3(%arg0: i32, %arg1: i32) -> (i32, i32, i32) {
    %c0_i32 = arith.constant 0 : i32
    %c0_i32_0 = arith.constant 0 : i32
    %c0_i32_1 = arith.constant 0 : i32
    return %arg0, %c0_i32, %c0_i32_0 : i32, i32, i32
  }
}

</mosaic_0001>

<llo_original>
// kernel: text_removal_loss.7
$region0: #{text_removal_loss.7}
  #allocation0 [shape = 'u32[]', space=smem, size = 0x4, offset = 0x4, fixed_abs, tag = 'smem constant byte address 0x4 - core index']
  #allocation1 [shape = 'u32[72,128]{1,0:T(1,128)}', space=vmem, size = 0x9000, scoped, tag = 'internal scratch']
  %s0 = inlined_call_operand.vmem [shape: f32[2,2,128], index: 0, kind: input, shape index: {}]
  %s1 = inlined_call_operand.vmem [shape: f32[2,2,128], index: 1, kind: input, shape index: {}]
  %s2 = inlined_call_operand.vmem [shape: f32[2,3,2,128], index: 2, kind: output, shape index: {}]
  %s3 = sld [smem:[#allocation0]]
  $region45: #{text_removal_loss.7} parent=0
    _
  %s5 = ssub.s32 1, %s3
  %s6 = scalar_select 0, %s5, %s3
  loop: start=0, step=1, limit=4
  $region2: #{text_removal_loss.7} parent=0 // loop_pre_header
    _
  $region3: #{text_removal_loss.7} parent=0 // loop_header
    %s8 = sphi 0, %s12
    %p9 = scmp.ge.s32.totalorder %s8, 4
    %s15 = sphi 0, %s27
    %s16 = sphi 0, %s23
    %s17 = sphi 0, %s15
    %s18 = sphi 0, %s16
    %s19 = sphi 0, %s17
    %s20 = sphi 0, %s18
    %s32 = sphi 0, %s34
    %s35 = sphi 0, %s32
    %s36 = sphi 0, %s35
    %s52 = sphi 0, %s36
    %s60 = sphi 0, %s62
    %s63 = sphi 0, %s60
    %s64 = sphi 0, %s63
    %s80 = sphi 0, %s64
    %s86 = sphi 0, %s88
    %s89 = sphi 0, %s86
    %s90 = sphi 0, %s89
    %s106 = sphi 0, %s90
  $region4: #{text_removal_loss.7} parent=0 // loop_header_branch
    %11 = sbr.rel (%p9) target = $region8
  $region5: #{text_removal_loss.7} parent=0 // loop_body
    %s13 = ssub.s32 %s8, 1
    %s14 = ssub.s32 %s8, 2
    %s21 = sadd.s32 1, %s16
    %p22 = scmp.ge.s32.totalorder %s21, 1
    %s23 = scalar_select %p22, 0, %s21
    %s24 = sadd.s32 1, %s15
    %s25 = scalar_select %p22, %s24, %s15
    %p26 = scmp.ge.s32.totalorder %s25, 2
    %s27 = scalar_select %p26, 0, %s25
    %s28 = ssub.s32 %s15, %s27
    %s29 = ssub.s32 %s16, %s23
    %s30 = sor.u32 %s28, %s29
    %p31 = scmp.eq.s32.totalorder %s30, 0
    %s33 = sadd.s32 %s32, 1
    %s34 = scalar_select %p31, %s32, %s33
    %p37 = pneg %p31
    %p38 = scmp.eq.s32.totalorder %s8, 1
    %p39 = por %p37, %p38
    %p40 = scmp.ne.s32.totalorder %s32, %s35
    %p41 = scmp.eq.s32.totalorder %s8, 0
    %p42 = por %p40, %p41
    %p43 = scmp.ne.s32.totalorder %s32, %s35
    %p44 = scmp.eq.s32.totalorder %s13, 1
    %p45 = por %p43, %p44
    %p46 = scmp.ne.s32.totalorder %s35, %s36
    %p47 = scmp.eq.s32.totalorder %s13, 0
    %p48 = por %p46, %p47
    %p49 = scmp.ne.s32.totalorder %s35, %s36
    %p50 = scmp.eq.s32.totalorder %s14, 1
    %p51 = por %p49, %p50
    %p53 = scmp.ne.s32.totalorder %s36, %s52
    %p54 = scmp.eq.s32.totalorder %s14, 0
    %p55 = por %p53, %p54
    %s56 = ssub.s32 %s15, %s27
    %s57 = ssub.s32 %s16, %s23
    %s58 = sor.u32 %s56, %s57
    %p59 = scmp.eq.s32.totalorder %s58, 0
    %s61 = sadd.s32 %s60, 1
    %s62 = scalar_select %p59, %s60, %s61
    %p65 = pneg %p59
    %p66 = scmp.eq.s32.totalorder %s8, 1
    %p67 = por %p65, %p66
    %p68 = scmp.ne.s32.totalorder %s60, %s63
    %p69 = scmp.eq.s32.totalorder %s8, 0
    %p70 = por %p68, %p69
    %p71 = scmp.ne.s32.totalorder %s60, %s63
    %p72 = scmp.eq.s32.totalorder %s13, 1
    %p73 = por %p71, %p72
    %p74 = scmp.ne.s32.totalorder %s63, %s64
    %p75 = scmp.eq.s32.totalorder %s13, 0
    %p76 = por %p74, %p75
    %p77 = scmp.ne.s32.totalorder %s63, %s64
    %p78 = scmp.eq.s32.totalorder %s14, 1
    %p79 = por %p77, %p78
    %p81 = scmp.ne.s32.totalorder %s64, %s80
    %p82 = scmp.eq.s32.totalorder %s14, 0
    %p83 = por %p81, %p82
    %s84 = ssub.s32 %s15, %s27
    %p85 = scmp.eq.s32.totalorder %s84, 0
    %s87 = sadd.s32 %s86, 1
    %s88 = scalar_select %p85, %s86, %s87
    %p91 = pneg %p85
    %p92 = scmp.eq.s32.totalorder %s8, 1
    %p93 = por %p91, %p92
    %p94 = scmp.ne.s32.totalorder %s86, %s89
    %p95 = scmp.eq.s32.totalorder %s8, 0
    %p96 = por %p94, %p95
    %p97 = scmp.ne.s32.totalorder %s86, %s89
    %p98 = scmp.eq.s32.totalorder %s13, 1
    %p99 = por %p97, %p98
    %p100 = scmp.ne.s32.totalorder %s89, %s90
    %p101 = scmp.eq.s32.totalorder %s13, 0
    %p102 = por %p100, %p101
    %p103 = scmp.ne.s32.totalorder %s89, %s90
    %p104 = scmp.eq.s32.totalorder %s14, 1
    %p105 = por %p103, %p104
    %p107 = scmp.ne.s32.totalorder %s90, %s106
    %p108 = scmp.eq.s32.totalorder %s14, 0
    %p109 = por %p107, %p108
    %p110 = scmp.le.s32.totalorder 1, %s8
    %p111 = scmp.lt.s32.totalorder %s8, 3
    %p112 = pnand %p110, %p111
    %p113 = pneg %p112
    // Predicated region
    $region9: #{text_removal_loss.7} parent=5 // pred_check
      _
    $region10: #{text_removal_loss.7} parent=5 // pred_check_branch
      %115 = sbr.rel (%p112) target = $region12
    $region11: #{text_removal_loss.7} parent=5 // pred_region
      %s116 = ssub.s32 %s8, 1
    $region12: #{text_removal_loss.7} parent=5 // pred_fallthru
      _
    %p117 = scmp.lt.s32.totalorder %s8, 2
    // Predicated region
    $region13: #{text_removal_loss.7} parent=5 // pred_check
      %p118 = pneg %p117
    $region14: #{text_removal_loss.7} parent=5 // pred_check_branch
      %120 = sbr.rel (%p118) target = $region16
    $region15: #{text_removal_loss.7} parent=5 // pred_region
      // Predicated region
      $region17: #{text_removal_loss.7} parent=15 // pred_check
        %p121 = pneg %p42
      $region18: #{text_removal_loss.7} parent=15 // pred_check_branch
        %123 = sbr.rel (%p121) target = $region20
      $region19: #{text_removal_loss.7} parent=15 // pred_region
        %p124 = scmp.lt.s32.totalorder %s15, 1
        %s125 = scalar_select %p124, %s15, 1
        %p126 = scmp.lt.s32.totalorder %s16, 0
        %s127 = scalar_select %p126, %s16, 0
        %s128 = sadd.s32 %s127, %s125
        %s129 = smul.addr %s128, 2
        %s130 = scalar_lea.vmem %s0, %s129
      $region20: #{text_removal_loss.7} parent=15 // pred_fallthru
        _
      // Predicated region
      $region21: #{text_removal_loss.7} parent=15 // pred_check
        %p131 = pneg %p70
      $region22: #{text_removal_loss.7} parent=15 // pred_check_branch
        %133 = sbr.rel (%p131) target = $region24
      $region23: #{text_removal_loss.7} parent=15 // pred_region
        %p134 = scmp.lt.s32.totalorder %s15, 1
        %s135 = scalar_select %p134, %s15, 1
        %p136 = scmp.lt.s32.totalorder %s16, 0
        %s137 = scalar_select %p136, %s16, 0
        %s138 = sadd.s32 %s137, %s135
        %s139 = smul.addr %s138, 2
        %s140 = scalar_lea.vmem %s1, %s139
      $region24: #{text_removal_loss.7} parent=15 // pred_fallthru
        _
    $region16: #{text_removal_loss.7} parent=5 // pred_fallthru
      _
    %p141 = scmp.le.s32.totalorder 1, %s8
    %p142 = scmp.lt.s32.totalorder %s8, 3
    %p143 = pnand %p141, %p142
    %p144 = pneg %p143
    // Predicated region
    $region25: #{text_removal_loss.7} parent=5 // pred_check
      _
    $region26: #{text_removal_loss.7} parent=5 // pred_check_branch
      %146 = sbr.rel (%p143) target = $region28
    $region27: #{text_removal_loss.7} parent=5 // pred_region
      %s147 = ssub.s32 %s8, 1
      %p148 = scmp.lt.s32.totalorder %s17, 1
      %s149 = scalar_select %p148, %s17, 1
      %p150 = scmp.lt.s32.totalorder %s18, 0
      %s151 = scalar_select %p150, %s18, 0
      %s152 = sadd.s32 %s151, %s149
      %s153 = smul.addr %s152, 2
      %s154 = scalar_lea.vmem %s0, %s153
      %p155 = pneg %p48
      %p156 = pneg %p45
      %p157 = scmp.lt.s32.totalorder %s17, 1
      %s158 = scalar_select %p157, %s17, 1
      %p159 = scmp.lt.s32.totalorder %s18, 0
      %s160 = scalar_select %p159, %s18, 0
      %s161 = sadd.s32 %s160, %s158
      %s162 = smul.addr %s161, 2
      %s163 = scalar_lea.vmem %s1, %s162
      %p164 = pneg %p76
      %p165 = pneg %p73
      %p166 = pneg %p102
      %p167 = pneg %p99
      %p168 = scmp.lt.s32.totalorder %s17, 1
      %s169 = scalar_select %p168, %s17, 1
      %s170 = smul.addr %s169, 3
      %s171 = smul.addr %s170, 2
      %s172 = scalar_lea.vmem %s2, %s171
      %p173 = scmp.lt.s32.totalorder %s17, 1
      %s174 = scalar_select %p173, %s17, 1
      %p175 = scmp.lt.s32.totalorder %s18, 0
      %s176 = scalar_select %p175, %s18, 0
      %s177 = sadd.s32 %s176, %s174
      %s178 = smul.addr %s177, 2
      %s179 = scalar_lea.vmem %s0, %s178
      %p180 = scmp.lt.s32.totalorder %s17, 1
      %s181 = scalar_select %p180, %s17, 1
      %p182 = scmp.lt.s32.totalorder %s18, 0
      %s183 = scalar_select %p182, %s18, 0
      %s184 = sadd.s32 %s183, %s181
      %s185 = smul.addr %s184, 2
      %s186 = scalar_lea.vmem %s1, %s185
      %p187 = scmp.lt.s32.totalorder %s17, 1
      %s188 = scalar_select %p187, %s17, 1
      %s189 = smul.addr %s188, 3
      %s190 = smul.addr %s189, 2
      %s191 = scalar_lea.vmem %s2, %s190
      %p192 = scmp.eq.s32.totalorder %s18, 0
      // Predicated region
      $region29: #{text_removal_loss.7} parent=27 // pred_check
        %p193 = pneg %p192
      $region30: #{text_removal_loss.7} parent=27 // pred_check_branch
        %195 = sbr.rel (%p193) target = $region32
      $region31: #{text_removal_loss.7} parent=27 // pred_region
        %196 = vst [vmem:[%s191] sm:$0x3] 0.0
        %197 = vst [vmem:[%s191 + $0x2] sm:$0x3] 0.0
        %198 = vst [vmem:[%s191 + $0x4] sm:$0x3] 0.0
      $region32: #{text_removal_loss.7} parent=27 // pred_fallthru
        _
      %v199 = vld [vmem:[%s179] sm:$0x3]
      %v200 = vsub.f32 0.0, %v199
      %v201 = vmul.f32 %v200, 1.442695
      %v202 = vpow.pop %v201
      %v203 = vadd.f32 %v202, 1.0
      %v204 = vrcp.pop %v203
      %v205 = vmul.f32 %v203, %v204
      %v206 = vsub.f32 1.0, %v205
      %v207 = vmul.f32 %v204, %v206
      %v208 = vadd.f32 %v204, %v207
      %vm209 = vweird.f32 %v203
      %vm210 = vweird.f32 %v204
      %vm211 = vmor %vm209, %vm210
      %v212 = vsel %vm211, %v204, %v208
      %v213 = vand.u32 2147483647, %v203
      %vm214 = vcmp.eq.f32.partialorder %v213, 8.507059e+37
      %v215 = vand.u32 %v203, 2147483648
      %v216 = vor.u32 1.1754944e-38, %v215
      %v217 = vsel %vm214, %v216, %v212
      %v218 = vmul.f32 1.0, %v217
      %v219 = vld [vmem:[%s186] sm:$0x3]
      %v220 = vsub.f32 1.0, %v219
      %v221 = vld [vmem:[%s191] sm:$0x3]
      %v222 = vmul.f32 %v218, %v220
      %v223 = vadd.f32 %v222, 0.0
      %v224 = vadd.f32 %v221, %v223
      %225 = vst [vmem:[%s191] sm:$0x3] %v224
      %s226 = scalar_lea.vmem %s191, 2
      %v227 = vld [vmem:[%s226] sm:$0x3]
      %v228 = vmul.f32 %v218, %v218
      %v229 = vadd.f32 %v228, 0.0
      %v230 = vadd.f32 %v227, %v229
      %231 = vst [vmem:[%s226] sm:$0x3] %v230
      %s232 = scalar_lea.vmem %s191, 4
      %v233 = vld [vmem:[%s232] sm:$0x3]
      %v234 = vmul.f32 %v220, %v220
      %v235 = vadd.f32 %v234, 0.0
      %v236 = vadd.f32 %v233, %v235
      %237 = vst [vmem:[%s232] sm:$0x3] %v236
      %p238 = scmp.lt.s32.totalorder %s17, 1
      %s239 = scalar_select %p238, %s17, 1
      %s240 = smul.addr %s239, 3
      %s241 = smul.addr %s240, 2
      %s242 = scalar_lea.vmem %s2, %s241
      // Predicated region
      $region33: #{text_removal_loss.7} parent=27 // pred_check
        %p243 = pneg %p99
      $region34: #{text_removal_loss.7} parent=27 // pred_check_branch
        %245 = sbr.rel (%p243) target = $region36
      $region35: #{text_removal_loss.7} parent=27 // pred_region
        _
      $region36: #{text_removal_loss.7} parent=27 // pred_fallthru
        _
    $region28: #{text_removal_loss.7} parent=5 // pred_fallthru
      _
    %p246 = scmp.le.s32.totalorder 2, %s8
    // Predicated region
    $region37: #{text_removal_loss.7} parent=5 // pred_check
      %p247 = pneg %p246
    $region38: #{text_removal_loss.7} parent=5 // pred_check_branch
      %249 = sbr.rel (%p247) target = $region40
    $region39: #{text_removal_loss.7} parent=5 // pred_region
      %s250 = ssub.s32 %s8, 2
      // Predicated region
      $region41: #{text_removal_loss.7} parent=39 // pred_check
        %p251 = pneg %p105
      $region42: #{text_removal_loss.7} parent=39 // pred_check_branch
        %253 = sbr.rel (%p251) target = $region44
      $region43: #{text_removal_loss.7} parent=39 // pred_region
        %p254 = scmp.lt.s32.totalorder %s19, 1
        %s255 = scalar_select %p254, %s19, 1
        %s256 = smul.addr %s255, 3
        %s257 = smul.addr %s256, 2
        %s258 = scalar_lea.vmem %s2, %s257
      $region44: #{text_removal_loss.7} parent=39 // pred_fallthru
        _
    $region40: #{text_removal_loss.7} parent=5 // pred_fallthru
      _
  $region6: #{text_removal_loss.7} parent=0 // loop_footer
    %s12 = sadd.s32 1, %s8
  $region7: #{text_removal_loss.7} parent=0 // loop_footer_branch
    %7 = sbr.rel target = $region3
  $region8: #{text_removal_loss.7} parent=0 // loop_exit
    _

// kernel: text_removal_loss.10
$region0: #{text_removal_loss.10}
  #allocation0 [shape = 'u32[]', space=smem, size = 0x4, offset = 0x4, fixed_abs, tag = 'smem constant byte address 0x4 - core index']
  #allocation1 [shape = 'u32[72,128]{1,0:T(1,128)}', space=vmem, size = 0x9000, scoped, tag = 'internal scratch']
  %s0 = inlined_call_operand.vmem [shape: f32[2,3,2,128], index: 0, kind: input, shape index: {}]
  %s1 = inlined_call_operand.vmem [shape: f32[2,3,2,128], index: 1, kind: input, shape index: {}]
  %s2 = inlined_call_operand.vmem [shape: f32[2,1,2,128], index: 2, kind: input, shape index: {}]
  %s3 = inlined_call_operand.vmem [shape: f32[2,2,6,128], index: 3, kind: output, shape index: {}]
  %s4 = sld [smem:[#allocation0]]
  $region49: #{text_removal_loss.10} parent=0
    _
  %s6 = ssub.s32 1, %s4
  %s7 = scalar_select 0, %s6, %s4
  loop: start=0, step=1, limit=4
  $region2: #{text_removal_loss.10} parent=0 // loop_pre_header
    _
  $region3: #{text_removal_loss.10} parent=0 // loop_header
    %s9 = sphi 0, %s13
    %p10 = scmp.ge.s32.totalorder %s9, 4
    %s16 = sphi 0, %s28
    %s17 = sphi 0, %s24
    %s18 = sphi 0, %s16
    %s19 = sphi 0, %s17
    %s20 = sphi 0, %s18
    %s21 = sphi 0, %s19
    %s33 = sphi 0, %s35
    %s36 = sphi 0, %s33
    %s37 = sphi 0, %s36
    %s53 = sphi 0, %s37
    %s61 = sphi 0, %s63
    %s64 = sphi 0, %s61
    %s65 = sphi 0, %s64
    %s81 = sphi 0, %s65
    %s89 = sphi 0, %s91
    %s92 = sphi 0, %s89
    %s93 = sphi 0, %s92
    %s109 = sphi 0, %s93
    %s115 = sphi 0, %s117
    %s118 = sphi 0, %s115
    %s119 = sphi 0, %s118
    %s135 = sphi 0, %s119
  $region4: #{text_removal_loss.10} parent=0 // loop_header_branch
    %12 = sbr.rel (%p10) target = $region8
  $region5: #{text_removal_loss.10} parent=0 // loop_body
    %s14 = ssub.s32 %s9, 1
    %s15 = ssub.s32 %s9, 2
    %s22 = sadd.s32 1, %s17
    %p23 = scmp.ge.s32.totalorder %s22, 1
    %s24 = scalar_select %p23, 0, %s22
    %s25 = sadd.s32 1, %s16
    %s26 = scalar_select %p23, %s25, %s16
    %p27 = scmp.ge.s32.totalorder %s26, 2
    %s28 = scalar_select %p27, 0, %s26
    %s29 = ssub.s32 %s16, %s28
    %s30 = ssub.s32 %s17, %s24
    %s31 = sor.u32 %s29, %s30
    %p32 = scmp.eq.s32.totalorder %s31, 0
    %s34 = sadd.s32 %s33, 1
    %s35 = scalar_select %p32, %s33, %s34
    %p38 = pneg %p32
    %p39 = scmp.eq.s32.totalorder %s9, 1
    %p40 = por %p38, %p39
    %p41 = scmp.ne.s32.totalorder %s33, %s36
    %p42 = scmp.eq.s32.totalorder %s9, 0
    %p43 = por %p41, %p42
    %p44 = scmp.ne.s32.totalorder %s33, %s36
    %p45 = scmp.eq.s32.totalorder %s14, 1
    %p46 = por %p44, %p45
    %p47 = scmp.ne.s32.totalorder %s36, %s37
    %p48 = scmp.eq.s32.totalorder %s14, 0
    %p49 = por %p47, %p48
    %p50 = scmp.ne.s32.totalorder %s36, %s37
    %p51 = scmp.eq.s32.totalorder %s15, 1
    %p52 = por %p50, %p51
    %p54 = scmp.ne.s32.totalorder %s37, %s53
    %p55 = scmp.eq.s32.totalorder %s15, 0
    %p56 = por %p54, %p55
    %s57 = ssub.s32 %s16, %s28
    %s58 = ssub.s32 %s17, %s24
    %s59 = sor.u32 %s57, %s58
    %p60 = scmp.eq.s32.totalorder %s59, 0
    %s62 = sadd.s32 %s61, 1
    %s63 = scalar_select %p60, %s61, %s62
    %p66 = pneg %p60
    %p67 = scmp.eq.s32.totalorder %s9, 1
    %p68 = por %p66, %p67
    %p69 = scmp.ne.s32.totalorder %s61, %s64
    %p70 = scmp.eq.s32.totalorder %s9, 0
    %p71 = por %p69, %p70
    %p72 = scmp.ne.s32.totalorder %s61, %s64
    %p73 = scmp.eq.s32.totalorder %s14, 1
    %p74 = por %p72, %p73
    %p75 = scmp.ne.s32.totalorder %s64, %s65
    %p76 = scmp.eq.s32.totalorder %s14, 0
    %p77 = por %p75, %p76
    %p78 = scmp.ne.s32.totalorder %s64, %s65
    %p79 = scmp.eq.s32.totalorder %s15, 1
    %p80 = por %p78, %p79
    %p82 = scmp.ne.s32.totalorder %s65, %s81
    %p83 = scmp.eq.s32.totalorder %s15, 0
    %p84 = por %p82, %p83
    %s85 = ssub.s32 %s16, %s28
    %s86 = ssub.s32 %s17, %s24
    %s87 = sor.u32 %s85, %s86
    %p88 = scmp.eq.s32.totalorder %s87, 0
    %s90 = sadd.s32 %s89, 1
    %s91 = scalar_select %p88, %s89, %s90
    %p94 = pneg %p88
    %p95 = scmp.eq.s32.totalorder %s9, 1
    %p96 = por %p94, %p95
    %p97 = scmp.ne.s32.totalorder %s89, %s92
    %p98 = scmp.eq.s32.totalorder %s9, 0
    %p99 = por %p97, %p98
    %p100 = scmp.ne.s32.totalorder %s89, %s92
    %p101 = scmp.eq.s32.totalorder %s14, 1
    %p102 = por %p100, %p101
    %p103 = scmp.ne.s32.totalorder %s92, %s93
    %p104 = scmp.eq.s32.totalorder %s14, 0
    %p105 = por %p103, %p104
    %p106 = scmp.ne.s32.totalorder %s92, %s93
    %p107 = scmp.eq.s32.totalorder %s15, 1
    %p108 = por %p106, %p107
    %p110 = scmp.ne.s32.totalorder %s93, %s109
    %p111 = scmp.eq.s32.totalorder %s15, 0
    %p112 = por %p110, %p111
    %s113 = ssub.s32 %s16, %s28
    %p114 = scmp.eq.s32.totalorder %s113, 0
    %s116 = sadd.s32 %s115, 1
    %s117 = scalar_select %p114, %s115, %s116
    %p120 = pneg %p114
    %p121 = scmp.eq.s32.totalorder %s9, 1
    %p122 = por %p120, %p121
    %p123 = scmp.ne.s32.totalorder %s115, %s118
    %p124 = scmp.eq.s32.totalorder %s9, 0
    %p125 = por %p123, %p124
    %p126 = scmp.ne.s32.totalorder %s115, %s118
    %p127 = scmp.eq.s32.totalorder %s14, 1
    %p128 = por %p126, %p127
    %p129 = scmp.ne.s32.totalorder %s118, %s119
    %p130 = scmp.eq.s32.totalorder %s14, 0
    %p131 = por %p129, %p130
    %p132 = scmp.ne.s32.totalorder %s118, %s119
    %p133 = scmp.eq.s32.totalorder %s15, 1
    %p134 = por %p132, %p133
    %p136 = scmp.ne.s32.totalorder %s119, %s135
    %p137 = scmp.eq.s32.totalorder %s15, 0
    %p138 = por %p136, %p137
    %p139 = scmp.le.s32.totalorder 1, %s9
    %p140 = scmp.lt.s32.totalorder %s9, 3
    %p141 = pnand %p139, %p140
    %p142 = pneg %p141
    // Predicated region
    $region9: #{text_removal_loss.10} parent=5 // pred_check
      _
    $region10: #{text_removal_loss.10} parent=5 // pred_check_branch
      %144 = sbr.rel (%p141) target = $region12
    $region11: #{text_removal_loss.10} parent=5 // pred_region
      %s145 = ssub.s32 %s9, 1
    $region12: #{text_removal_loss.10} parent=5 // pred_fallthru
      _
    %p146 = scmp.lt.s32.totalorder %s9, 2
    // Predicated region
    $region13: #{text_removal_loss.10} parent=5 // pred_check
      %p147 = pneg %p146
    $region14: #{text_removal_loss.10} parent=5 // pred_check_branch
      %149 = sbr.rel (%p147) target = $region16
    $region15: #{text_removal_loss.10} parent=5 // pred_region
      // Predicated region
      $region17: #{text_removal_loss.10} parent=15 // pred_check
        %p150 = pneg %p43
      $region18: #{text_removal_loss.10} parent=15 // pred_check_branch
        %152 = sbr.rel (%p150) target = $region20
      $region19: #{text_removal_loss.10} parent=15 // pred_region
        %p153 = scmp.lt.s32.totalorder %s16, 1
        %s154 = scalar_select %p153, %s16, 1
        %p155 = scmp.lt.s32.totalorder %s17, 0
        %s156 = scalar_select %p155, %s17, 0
        %s157 = smul.addr %s154, 3
        %s158 = sadd.s32 %s156, %s157
        %s159 = smul.addr %s158, 2
        %s160 = scalar_lea.vmem %s0, %s159
      $region20: #{text_removal_loss.10} parent=15 // pred_fallthru
        _
      // Predicated region
      $region21: #{text_removal_loss.10} parent=15 // pred_check
        %p161 = pneg %p71
      $region22: #{text_removal_loss.10} parent=15 // pred_check_branch
        %163 = sbr.rel (%p161) target = $region24
      $region23: #{text_removal_loss.10} parent=15 // pred_region
        %p164 = scmp.lt.s32.totalorder %s16, 1
        %s165 = scalar_select %p164, %s16, 1
        %p166 = scmp.lt.s32.totalorder %s17, 0
        %s167 = scalar_select %p166, %s17, 0
        %s168 = smul.addr %s165, 3
        %s169 = sadd.s32 %s167, %s168
        %s170 = smul.addr %s169, 2
        %s171 = scalar_lea.vmem %s1, %s170
      $region24: #{text_removal_loss.10} parent=15 // pred_fallthru
        _
      // Predicated region
      $region25: #{text_removal_loss.10} parent=15 // pred_check
        %p172 = pneg %p99
      $region26: #{text_removal_loss.10} parent=15 // pred_check_branch
        %174 = sbr.rel (%p172) target = $region28
      $region27: #{text_removal_loss.10} parent=15 // pred_region
        %p175 = scmp.lt.s32.totalorder %s16, 1
        %s176 = scalar_select %p175, %s16, 1
        %p177 = scmp.lt.s32.totalorder %s17, 0
        %s178 = scalar_select %p177, %s17, 0
        %s179 = sadd.s32 %s178, %s176
        %s180 = smul.addr %s179, 2
        %s181 = scalar_lea.vmem %s2, %s180
      $region28: #{text_removal_loss.10} parent=15 // pred_fallthru
        _
    $region16: #{text_removal_loss.10} parent=5 // pred_fallthru
      _
    %p182 = scmp.le.s32.totalorder 1, %s9
    %p183 = scmp.lt.s32.totalorder %s9, 3
    %p184 = pnand %p182, %p183
    %p185 = pneg %p184
    // Predicated region
    $region29: #{text_removal_loss.10} parent=5 // pred_check
      _
    $region30: #{text_removal_loss.10} parent=5 // pred_check_branch
      %187 = sbr.rel (%p184) target = $region32
    $region31: #{text_removal_loss.10} parent=5 // pred_region
      %s188 = ssub.s32 %s9, 1
      %p189 = scmp.lt.s32.totalorder %s18, 1
      %s190 = scalar_select %p189, %s18, 1
      %p191 = scmp.lt.s32.totalorder %s19, 0
      %s192 = scalar_select %p191, %s19, 0
      %s193 = smul.addr %s190, 3
      %s194 = sadd.s32 %s192, %s193
      %s195 = smul.addr %s194, 2
      %s196 = scalar_lea.vmem %s0, %s195
      %p197 = pneg %p49
      %p198 = pneg %p46
      %p199 = scmp.lt.s32.totalorder %s18, 1
      %s200 = scalar_select %p199, %s18, 1
      %p201 = scmp.lt.s32.totalorder %s19, 0
      %s202 = scalar_select %p201, %s19, 0
      %s203 = smul.addr %s200, 3
      %s204 = sadd.s32 %s202, %s203
      %s205 = smul.addr %s204, 2
      %s206 = scalar_lea.vmem %s1, %s205
      %p207 = pneg %p77
      %p208 = pneg %p74
      %p209 = scmp.lt.s32.totalorder %s18, 1
      %s210 = scalar_select %p209, %s18, 1
      %p211 = scmp.lt.s32.totalorder %s19, 0
      %s212 = scalar_select %p211, %s19, 0
      %s213 = sadd.s32 %s212, %s210
      %s214 = smul.addr %s213, 2
      %s215 = scalar_lea.vmem %s2, %s214
      %p216 = pneg %p105
      %p217 = pneg %p102
      %p218 = pneg %p131
      %p219 = pneg %p128
      %p220 = scmp.lt.s32.totalorder %s18, 1
      %s221 = scalar_select %p220, %s18, 1
      %s222 = smul.addr %s221, 2
      %s223 = smul.addr %s222, 8
      %s224 = scalar_lea.vmem %s3, %s223
      %p225 = scmp.lt.s32.totalorder %s18, 1
      %s226 = scalar_select %p225, %s18, 1
      %p227 = scmp.lt.s32.totalorder %s19, 0
      %s228 = scalar_select %p227, %s19, 0
      %s229 = smul.addr %s226, 3
      %s230 = sadd.s32 %s228, %s229
      %s231 = smul.addr %s230, 2
      %s232 = scalar_lea.vmem %s0, %s231
      %p233 = scmp.lt.s32.totalorder %s18, 1
      %s234 = scalar_select %p233, %s18, 1
      %p235 = scmp.lt.s32.totalorder %s19, 0
      %s236 = scalar_select %p235, %s19, 0
      %s237 = smul.addr %s234, 3
      %s238 = sadd.s32 %s236, %s237
      %s239 = smul.addr %s238, 2
      %s240 = scalar_lea.vmem %s1, %s239
      %p241 = scmp.lt.s32.totalorder %s18, 1
      %s242 = scalar_select %p241, %s18, 1
      %p243 = scmp.lt.s32.totalorder %s19, 0
      %s244 = scalar_select %p243, %s19, 0
      %s245 = sadd.s32 %s244, %s242
      %s246 = smul.addr %s245, 2
      %s247 = scalar_lea.vmem %s2, %s246
      %p248 = scmp.lt.s32.totalorder %s18, 1
      %s249 = scalar_select %p248, %s18, 1
      %s250 = smul.addr %s249, 2
      %s251 = smul.addr %s250, 8
      %s252 = scalar_lea.vmem %s3, %s251
      %p253 = scmp.eq.s32.totalorder %s19, 0
      // Predicated region
      $region33: #{text_removal_loss.10} parent=31 // pred_check
        %p254 = pneg %p253
      $region34: #{text_removal_loss.10} parent=31 // pred_check_branch
        %256 = sbr.rel (%p254) target = $region36
      $region35: #{text_removal_loss.10} parent=31 // pred_region
        %257 = vst [vmem:[%s252] sm:$0x3f] 0.0
        %258 = vst [vmem:[%s252 + $0x8] sm:$0x3f] 0.0
      $region36: #{text_removal_loss.10} parent=31 // pred_fallthru
        _
      %v259 = vld [vmem:[%s232] sm:$0x3]
      %v260 = vld [vmem:[%s232 + $0x2] sm:$0x3]
      %v261 = vld [vmem:[%s232 + $0x4] sm:$0x3]
      %v262 = vld [vmem:[%s240] sm:$0x3]
      %v263 = vld [vmem:[%s240 + $0x2] sm:$0x3]
      %v264 = vld [vmem:[%s240 + $0x4] sm:$0x3]
      %v265 = vld [vmem:[%s247] sm:$0x3]
      %v266 = vsub.f32 %v259, %v262
      %v267 = vsub.f32 %v260, %v263
      %v268 = vsub.f32 %v261, %v264
      %v269 = vand.u32 2147483647, %v266
      %v270 = vand.u32 2147483647, %v267
      %v271 = vand.u32 2147483647, %v268
      %v272 = vld [vmem:[%s252] sm:$0x3f]
      %v273 = vadd.f32 %v269, 0.0
      %v274 = vadd.f32 %v270, 0.0
      %v275 = vadd.f32 %v271, 0.0
      %279 = vst [vmem:[#allocation1] ss:$4 sm:$0xff] %v273
      %s280 = scalar_lea.vmem [#allocation1], 1
      %281 = vst [vmem:[%s280] ss:$4 sm:$0xff] %v274
      %s282 = scalar_lea.vmem [#allocation1], 2
      %283 = vst [vmem:[%s282] ss:$4 sm:$0xff] %v275
      %v284 = vld.sshfl [vmem:[#allocation1] sm:$0xff pattern:$0x73625140]
      %v286 = vadd.f32 %v272, %v284
      %287 = vst [vmem:[%s252] sm:$0x3f] %v286
      %s288 = scalar_lea.vmem %s252, 8
      %v289 = vld [vmem:[%s288] sm:$0x3f]
      %v290 = vmul.f32 %v265, %v269
      %v291 = vmul.f32 %v265, %v270
      %v292 = vmul.f32 %v265, %v271
      %v293 = vadd.f32 %v290, 0.0
      %v294 = vadd.f32 %v291, 0.0
      %v295 = vadd.f32 %v292, 0.0
      %299 = vst [vmem:[#allocation1] ss:$4 sm:$0xff] %v293
      %s300 = scalar_lea.vmem [#allocation1], 1
      %301 = vst [vmem:[%s300] ss:$4 sm:$0xff] %v294
      %s302 = scalar_lea.vmem [#allocation1], 2
      %303 = vst [vmem:[%s302] ss:$4 sm:$0xff] %v295
      %v304 = vld.sshfl [vmem:[#allocation1] sm:$0xff pattern:$0x73625140]
      %v306 = vadd.f32 %v289, %v304
      %307 = vst [vmem:[%s288] sm:$0x3f] %v306
      %p308 = scmp.lt.s32.totalorder %s18, 1
      %s309 = scalar_select %p308, %s18, 1
      %s310 = smul.addr %s309, 2
      %s311 = smul.addr %s310, 8
      %s312 = scalar_lea.vmem %s3, %s311
      // Predicated region
      $region37: #{text_removal_loss.10} parent=31 // pred_check
        %p313 = pneg %p128
      $region38: #{text_removal_loss.10} parent=31 // pred_check_branch
        %315 = sbr.rel (%p313) target = $region40
      $region39: #{text_removal_loss.10} parent=31 // pred_region
        _
      $region40: #{text_removal_loss.10} parent=31 // pred_fallthru
        _
    $region32: #{text_removal_loss.10} parent=5 // pred_fallthru
      _
    %p316 = scmp.le.s32.totalorder 2, %s9
    // Predicated region
    $region41: #{text_removal_loss.10} parent=5 // pred_check
      %p317 = pneg %p316
    $region42: #{text_removal_loss.10} parent=5 // pred_check_branch
      %319 = sbr.rel (%p317) target = $region44
    $region43: #{text_removal_loss.10} parent=5 // pred_region
      %s320 = ssub.s32 %s9, 2
      // Predicated region
      $region45: #{text_removal_loss.10} parent=43 // pred_check
        %p321 = pneg %p134
      $region46: #{text_removal_loss.10} parent=43 // pred_check_branch
        %323 = sbr.rel (%p321) target = $region48
      $region47: #{text_removal_loss.10} parent=43 // pred_region
        %p324 = scmp.lt.s32.totalorder %s20, 1
        %s325 = scalar_select %p324, %s20, 1
        %s326 = smul.addr %s325, 2
        %s327 = smul.addr %s326, 8
        %s328 = scalar_lea.vmem %s3, %s327
      $region48: #{text_removal_loss.10} parent=43 // pred_fallthru
        _
    $region44: #{text_removal_loss.10} parent=5 // pred_fallthru
      _
  $region6: #{text_removal_loss.10} parent=0 // loop_footer
    %s13 = sadd.s32 1, %s9
  $region7: #{text_removal_loss.10} parent=0 // loop_footer_branch
    %8 = sbr.rel target = $region3
  $region8: #{text_removal_loss.10} parent=0 // loop_exit
    _

// kernel: text_removal_loss.8
$region0: #{text_removal_loss.8}
  #allocation0 [shape = 'u32[]', space=smem, size = 0x4, offset = 0x4, fixed_abs, tag = 'smem constant byte address 0x4 - core index']
  #allocation1 [shape = 'u32[72,128]{1,0:T(1,128)}', space=vmem, size = 0x9000, scoped, tag = 'internal scratch']
  %s0 = inlined_call_operand.vmem [shape: f32[2,3,1,16], index: 0, kind: input, shape index: {}]
  %s1 = inlined_call_operand.vmem [shape: f32[2,3,1,16], index: 1, kind: input, shape index: {}]
  %s2 = inlined_call_operand.vmem [shape: f32[2,1,1,16], index: 2, kind: input, shape index: {}]
  %s3 = inlined_call_operand.vmem [shape: f32[2,2,3,16], index: 3, kind: output, shape index: {}]
  %s4 = sld [smem:[#allocation0]]
  $region49: #{text_removal_loss.8} parent=0
    _
  %s6 = ssub.s32 1, %s4
  %s7 = scalar_select 0, %s6, %s4
  loop: start=0, step=1, limit=4
  $region2: #{text_removal_loss.8} parent=0 // loop_pre_header
    _
  $region3: #{text_removal_loss.8} parent=0 // loop_header
    %s9 = sphi 0, %s13
    %p10 = scmp.ge.s32.totalorder %s9, 4
    %s16 = sphi 0, %s28
    %s17 = sphi 0, %s24
    %s18 = sphi 0, %s16
    %s19 = sphi 0, %s17
    %s20 = sphi 0, %s18
    %s21 = sphi 0, %s19
    %s33 = sphi 0, %s35
    %s36 = sphi 0, %s33
    %s37 = sphi 0, %s36
    %s53 = sphi 0, %s37
    %s61 = sphi 0, %s63
    %s64 = sphi 0, %s61
    %s65 = sphi 0, %s64
    %s81 = sphi 0, %s65
    %s89 = sphi 0, %s91
    %s92 = sphi 0, %s89
    %s93 = sphi 0, %s92
    %s109 = sphi 0, %s93
    %s115 = sphi 0, %s117
    %s118 = sphi 0, %s115
    %s119 = sphi 0, %s118
    %s135 = sphi 0, %s119
  $region4: #{text_removal_loss.8} parent=0 // loop_header_branch
    %12 = sbr.rel (%p10) target = $region8
  $region5: #{text_removal_loss.8} parent=0 // loop_body
    %s14 = ssub.s32 %s9, 1
    %s15 = ssub.s32 %s9, 2
    %s22 = sadd.s32 1, %s17
    %p23 = scmp.ge.s32.totalorder %s22, 1
    %s24 = scalar_select %p23, 0, %s22
    %s25 = sadd.s32 1, %s16
    %s26 = scalar_select %p23, %s25, %s16
    %p27 = scmp.ge.s32.totalorder %s26, 2
    %s28 = scalar_select %p27, 0, %s26
    %s29 = ssub.s32 %s16, %s28
    %s30 = ssub.s32 %s17, %s24
    %s31 = sor.u32 %s29, %s30
    %p32 = scmp.eq.s32.totalorder %s31, 0
    %s34 = sadd.s32 %s33, 1
    %s35 = scalar_select %p32, %s33, %s34
    %p38 = pneg %p32
    %p39 = scmp.eq.s32.totalorder %s9, 1
    %p40 = por %p38, %p39
    %p41 = scmp.ne.s32.totalorder %s33, %s36
    %p42 = scmp.eq.s32.totalorder %s9, 0
    %p43 = por %p41, %p42
    %p44 = scmp.ne.s32.totalorder %s33, %s36
    %p45 = scmp.eq.s32.totalorder %s14, 1
    %p46 = por %p44, %p45
    %p47 = scmp.ne.s32.totalorder %s36, %s37
    %p48 = scmp.eq.s32.totalorder %s14, 0
    %p49 = por %p47, %p48
    %p50 = scmp.ne.s32.totalorder %s36, %s37
    %p51 = scmp.eq.s32.totalorder %s15, 1
    %p52 = por %p50, %p51
    %p54 = scmp.ne.s32.totalorder %s37, %s53
    %p55 = scmp.eq.s32.totalorder %s15, 0
    %p56 = por %p54, %p55
    %s57 = ssub.s32 %s16, %s28
    %s58 = ssub.s32 %s17, %s24
    %s59 = sor.u32 %s57, %s58
    %p60 = scmp.eq.s32.totalorder %s59, 0
    %s62 = sadd.s32 %s61, 1
    %s63 = scalar_select %p60, %s61, %s62
    %p66 = pneg %p60
    %p67 = scmp.eq.s32.totalorder %s9, 1
    %p68 = por %p66, %p67
    %p69 = scmp.ne.s32.totalorder %s61, %s64
    %p70 = scmp.eq.s32.totalorder %s9, 0
    %p71 = por %p69, %p70
    %p72 = scmp.ne.s32.totalorder %s61, %s64
    %p73 = scmp.eq.s32.totalorder %s14, 1
    %p74 = por %p72, %p73
    %p75 = scmp.ne.s32.totalorder %s64, %s65
    %p76 = scmp.eq.s32.totalorder %s14, 0
    %p77 = por %p75, %p76
    %p78 = scmp.ne.s32.totalorder %s64, %s65
    %p79 = scmp.eq.s32.totalorder %s15, 1
    %p80 = por %p78, %p79
    %p82 = scmp.ne.s32.totalorder %s65, %s81
    %p83 = scmp.eq.s32.totalorder %s15, 0
    %p84 = por %p82, %p83
    %s85 = ssub.s32 %s16, %s28
    %s86 = ssub.s32 %s17, %s24
    %s87 = sor.u32 %s85, %s86
    %p88 = scmp.eq.s32.totalorder %s87, 0
    %s90 = sadd.s32 %s89, 1
    %s91 = scalar_select %p88, %s89, %s90
    %p94 = pneg %p88
    %p95 = scmp.eq.s32.totalorder %s9, 1
    %p96 = por %p94, %p95
    %p97 = scmp.ne.s32.totalorder %s89, %s92
    %p98 = scmp.eq.s32.totalorder %s9, 0
    %p99 = por %p97, %p98
    %p100 = scmp.ne.s32.totalorder %s89, %s92
    %p101 = scmp.eq.s32.totalorder %s14, 1
    %p102 = por %p100, %p101
    %p103 = scmp.ne.s32.totalorder %s92, %s93
    %p104 = scmp.eq.s32.totalorder %s14, 0
    %p105 = por %p103, %p104
    %p106 = scmp.ne.s32.totalorder %s92, %s93
    %p107 = scmp.eq.s32.totalorder %s15, 1
    %p108 = por %p106, %p107
    %p110 = scmp.ne.s32.totalorder %s93, %s109
    %p111 = scmp.eq.s32.totalorder %s15, 0
    %p112 = por %p110, %p111
    %s113 = ssub.s32 %s16, %s28
    %p114 = scmp.eq.s32.totalorder %s113, 0
    %s116 = sadd.s32 %s115, 1
    %s117 = scalar_select %p114, %s115, %s116
    %p120 = pneg %p114
    %p121 = scmp.eq.s32.totalorder %s9, 1
    %p122 = por %p120, %p121
    %p123 = scmp.ne.s32.totalorder %s115, %s118
    %p124 = scmp.eq.s32.totalorder %s9, 0
    %p125 = por %p123, %p124
    %p126 = scmp.ne.s32.totalorder %s115, %s118
    %p127 = scmp.eq.s32.totalorder %s14, 1
    %p128 = por %p126, %p127
    %p129 = scmp.ne.s32.totalorder %s118, %s119
    %p130 = scmp.eq.s32.totalorder %s14, 0
    %p131 = por %p129, %p130
    %p132 = scmp.ne.s32.totalorder %s118, %s119
    %p133 = scmp.eq.s32.totalorder %s15, 1
    %p134 = por %p132, %p133
    %p136 = scmp.ne.s32.totalorder %s119, %s135
    %p137 = scmp.eq.s32.totalorder %s15, 0
    %p138 = por %p136, %p137
    %p139 = scmp.le.s32.totalorder 1, %s9
    %p140 = scmp.lt.s32.totalorder %s9, 3
    %p141 = pnand %p139, %p140
    %p142 = pneg %p141
    // Predicated region
    $region9: #{text_removal_loss.8} parent=5 // pred_check
      _
    $region10: #{text_removal_loss.8} parent=5 // pred_check_branch
      %144 = sbr.rel (%p141) target = $region12
    $region11: #{text_removal_loss.8} parent=5 // pred_region
      %s145 = ssub.s32 %s9, 1
    $region12: #{text_removal_loss.8} parent=5 // pred_fallthru
      _
    %p146 = scmp.lt.s32.totalorder %s9, 2
    // Predicated region
    $region13: #{text_removal_loss.8} parent=5 // pred_check
      %p147 = pneg %p146
    $region14: #{text_removal_loss.8} parent=5 // pred_check_branch
      %149 = sbr.rel (%p147) target = $region16
    $region15: #{text_removal_loss.8} parent=5 // pred_region
      // Predicated region
      $region17: #{text_removal_loss.8} parent=15 // pred_check
        %p150 = pneg %p43
      $region18: #{text_removal_loss.8} parent=15 // pred_check_branch
        %152 = sbr.rel (%p150) target = $region20
      $region19: #{text_removal_loss.8} parent=15 // pred_region
        %p153 = scmp.lt.s32.totalorder %s16, 1
        %s154 = scalar_select %p153, %s16, 1
        %p155 = scmp.lt.s32.totalorder %s17, 0
        %s156 = scalar_select %p155, %s17, 0
        %s157 = smul.addr %s154, 3
        %s158 = sadd.s32 %s156, %s157
        %s159 = scalar_lea.vmem %s0, %s158
      $region20: #{text_removal_loss.8} parent=15 // pred_fallthru
        _
      // Predicated region
      $region21: #{text_removal_loss.8} parent=15 // pred_check
        %p160 = pneg %p71
      $region22: #{text_removal_loss.8} parent=15 // pred_check_branch
        %162 = sbr.rel (%p160) target = $region24
      $region23: #{text_removal_loss.8} parent=15 // pred_region
        %p163 = scmp.lt.s32.totalorder %s16, 1
        %s164 = scalar_select %p163, %s16, 1
        %p165 = scmp.lt.s32.totalorder %s17, 0
        %s166 = scalar_select %p165, %s17, 0
        %s167 = smul.addr %s164, 3
        %s168 = sadd.s32 %s166, %s167
        %s169 = scalar_lea.vmem %s1, %s168
      $region24: #{text_removal_loss.8} parent=15 // pred_fallthru
        _
      // Predicated region
      $region25: #{text_removal_loss.8} parent=15 // pred_check
        %p170 = pneg %p99
      $region26: #{text_removal_loss.8} parent=15 // pred_check_branch
        %172 = sbr.rel (%p170) target = $region28
      $region27: #{text_removal_loss.8} parent=15 // pred_region
        %p173 = scmp.lt.s32.totalorder %s16, 1
        %s174 = scalar_select %p173, %s16, 1
        %p175 = scmp.lt.s32.totalorder %s17, 0
        %s176 = scalar_select %p175, %s17, 0
        %s177 = sadd.s32 %s176, %s174
        %s178 = scalar_lea.vmem %s2, %s177
      $region28: #{text_removal_loss.8} parent=15 // pred_fallthru
        _
    $region16: #{text_removal_loss.8} parent=5 // pred_fallthru
      _
    %p179 = scmp.le.s32.totalorder 1, %s9
    %p180 = scmp.lt.s32.totalorder %s9, 3
    %p181 = pnand %p179, %p180
    %p182 = pneg %p181
    // Predicated region
    $region29: #{text_removal_loss.8} parent=5 // pred_check
      _
    $region30: #{text_removal_loss.8} parent=5 // pred_check_branch
      %184 = sbr.rel (%p181) target = $region32
    $region31: #{text_removal_loss.8} parent=5 // pred_region
      %s185 = ssub.s32 %s9, 1
      %p186 = scmp.lt.s32.totalorder %s18, 1
      %s187 = scalar_select %p186, %s18, 1
      %p188 = scmp.lt.s32.totalorder %s19, 0
      %s189 = scalar_select %p188, %s19, 0
      %s190 = smul.addr %s187, 3
      %s191 = sadd.s32 %s189, %s190
      %s192 = scalar_lea.vmem %s0, %s191
      %p193 = pneg %p49
      %p194 = pneg %p46
      %p195 = scmp.lt.s32.totalorder %s18, 1
      %s196 = scalar_select %p195, %s18, 1
      %p197 = scmp.lt.s32.totalorder %s19, 0
      %s198 = scalar_select %p197, %s19, 0
      %s199 = smul.addr %s196, 3
      %s200 = sadd.s32 %s198, %s199
      %s201 = scalar_lea.vmem %s1, %s200
      %p202 = pneg %p77
      %p203 = pneg %p74
      %p204 = scmp.lt.s32.totalorder %s18, 1
      %s205 = scalar_select %p204, %s18, 1
      %p206 = scmp.lt.s32.totalorder %s19, 0
      %s207 = scalar_select %p206, %s19, 0
      %s208 = sadd.s32 %s207, %s205
      %s209 = scalar_lea.vmem %s2, %s208
      %p210 = pneg %p105
      %p211 = pneg %p102
      %p212 = pneg %p131
      %p213 = pneg %p128
      %p214 = scmp.lt.s32.totalorder %s18, 1
      %s215 = scalar_select %p214, %s18, 1
      %s216 = smul.addr %s215, 2
      %s217 = smul.addr %s216, 4
      %s218 = scalar_lea.vmem %s3, %s217
      %p219 = scmp.lt.s32.totalorder %s18, 1
      %s220 = scalar_select %p219, %s18, 1
      %p221 = scmp.lt.s32.totalorder %s19, 0
      %s222 = scalar_select %p221, %s19, 0
      %s223 = smul.addr %s220, 3
      %s224 = sadd.s32 %s222, %s223
      %s225 = scalar_lea.vmem %s0, %s224
      %p226 = scmp.lt.s32.totalorder %s18, 1
      %s227 = scalar_select %p226, %s18, 1
      %p228 = scmp.lt.s32.totalorder %s19, 0
      %s229 = scalar_select %p228, %s19, 0
      %s230 = smul.addr %s227, 3
      %s231 = sadd.s32 %s229, %s230
      %s232 = scalar_lea.vmem %s1, %s231
      %p233 = scmp.lt.s32.totalorder %s18, 1
      %s234 = scalar_select %p233, %s18, 1
      %p235 = scmp.lt.s32.totalorder %s19, 0
      %s236 = scalar_select %p235, %s19, 0
      %s237 = sadd.s32 %s236, %s234
      %s238 = scalar_lea.vmem %s2, %s237
      %p239 = scmp.lt.s32.totalorder %s18, 1
      %s240 = scalar_select %p239, %s18, 1
      %s241 = smul.addr %s240, 2
      %s242 = smul.addr %s241, 4
      %s243 = scalar_lea.vmem %s3, %s242
      %p244 = scmp.eq.s32.totalorder %s19, 0
      // Predicated region
      $region33: #{text_removal_loss.8} parent=31 // pred_check
        %p245 = pneg %p244
      $region34: #{text_removal_loss.8} parent=31 // pred_check_branch
        %247 = sbr.rel (%p245) target = $region36
      $region35: #{text_removal_loss.8} parent=31 // pred_region
        %vm248 = vcmask 124928
        %249 = vst.msk [vmem:[%s243] sm:$0x7] %vm248, 0.0
        %250 = vst.msk [vmem:[%s243 + $0x4] sm:$0x7] %vm248, 0.0
      $region36: #{text_removal_loss.8} parent=31 // pred_fallthru
        _
      %v251 = vld [vmem:[%s225] sm:$0x1]
      %v252 = vld [vmem:[%s225 + $0x1] sm:$0x1]
      %v253 = vld [vmem:[%s225 + $0x2] sm:$0x1]
      %v254 = vld [vmem:[%s232] sm:$0x1]
      %v255 = vld [vmem:[%s232 + $0x1] sm:$0x1]
      %v256 = vld [vmem:[%s232 + $0x2] sm:$0x1]
      %v257 = vld [vmem:[%s238] sm:$0x1]
      %v258 = vsub.f32 %v251, %v254
      %v259 = vsub.f32 %v252, %v255
      %v260 = vsub.f32 %v253, %v256
      %v261 = vand.u32 2147483647, %v258
      %v262 = vand.u32 2147483647, %v259
      %v263 = vand.u32 2147483647, %v260
      %v264 = vld [vmem:[%s243] sm:$0x7]
      %v265 = vadd.f32 %v261, 0.0
      %v266 = vadd.f32 %v262, 0.0
      %v267 = vadd.f32 %v263, 0.0
      %271 = vst [vmem:[#allocation1] ss:$9 sm:$0xff] %v265
      %s272 = scalar_lea.vmem [#allocation1], 1
      %273 = vst [vmem:[%s272] ss:$9 sm:$0xff] %v266
      %s274 = scalar_lea.vmem [#allocation1], 2
      %275 = vst [vmem:[%s274] ss:$9 sm:$0xff] %v267
      %v276 = vld [vmem:[#allocation1] sm:$0xff]
      %v278 = vadd.f32 %v264, %v276
      %vm279 = vcmask 124928
      %280 = vst.msk [vmem:[%s243] sm:$0x7] %vm279, %v278
      %s281 = scalar_lea.vmem %s243, 4
      %v282 = vld [vmem:[%s281] sm:$0x7]
      %v283 = vmul.f32 %v257, %v261
      %v284 = vmul.f32 %v257, %v262
      %v285 = vmul.f32 %v257, %v263
      %v286 = vadd.f32 %v283, 0.0
      %v287 = vadd.f32 %v284, 0.0
      %v288 = vadd.f32 %v285, 0.0
      %292 = vst [vmem:[#allocation1] ss:$9 sm:$0xff] %v286
      %s293 = scalar_lea.vmem [#allocation1], 1
      %294 = vst [vmem:[%s293] ss:$9 sm:$0xff] %v287
      %s295 = scalar_lea.vmem [#allocation1], 2
      %296 = vst [vmem:[%s295] ss:$9 sm:$0xff] %v288
      %v297 = vld [vmem:[#allocation1] sm:$0xff]
      %v299 = vadd.f32 %v282, %v297
      %300 = vst.msk [vmem:[%s281] sm:$0x7] %vm279, %v299
      %p301 = scmp.lt.s32.totalorder %s18, 1
      %s302 = scalar_select %p301, %s18, 1
      %s303 = smul.addr %s302, 2
      %s304 = smul.addr %s303, 4
      %s305 = scalar_lea.vmem %s3, %s304
      // Predicated region
      $region37: #{text_removal_loss.8} parent=31 // pred_check
        %p306 = pneg %p128
      $region38: #{text_removal_loss.8} parent=31 // pred_check_branch
        %308 = sbr.rel (%p306) target = $region40
      $region39: #{text_removal_loss.8} parent=31 // pred_region
        _
      $region40: #{text_removal_loss.8} parent=31 // pred_fallthru
        _
    $region32: #{text_removal_loss.8} parent=5 // pred_fallthru
      _
    %p309 = scmp.le.s32.totalorder 2, %s9
    // Predicated region
    $region41: #{text_removal_loss.8} parent=5 // pred_check
      %p310 = pneg %p309
    $region42: #{text_removal_loss.8} parent=5 // pred_check_branch
      %312 = sbr.rel (%p310) target = $region44
    $region43: #{text_removal_loss.8} parent=5 // pred_region
      %s313 = ssub.s32 %s9, 2
      // Predicated region
      $region45: #{text_removal_loss.8} parent=43 // pred_check
        %p314 = pneg %p134
      $region46: #{text_removal_loss.8} parent=43 // pred_check_branch
        %316 = sbr.rel (%p314) target = $region48
      $region47: #{text_removal_loss.8} parent=43 // pred_region
        %p317 = scmp.lt.s32.totalorder %s20, 1
        %s318 = scalar_select %p317, %s20, 1
        %s319 = smul.addr %s318, 2
        %s320 = smul.addr %s319, 4
        %s321 = scalar_lea.vmem %s3, %s320
      $region48: #{text_removal_loss.8} parent=43 // pred_fallthru
        _
    $region44: #{text_removal_loss.8} parent=5 // pred_fallthru
      _
  $region6: #{text_removal_loss.8} parent=0 // loop_footer
    %s13 = sadd.s32 1, %s9
  $region7: #{text_removal_loss.8} parent=0 // loop_footer_branch
    %8 = sbr.rel target = $region3
  $region8: #{text_removal_loss.8} parent=0 // loop_exit
    _

// kernel: text_removal_loss.11
$region0: #{text_removal_loss.11}
  #allocation0 [shape = 'u32[]', space=smem, size = 0x4, offset = 0x4, fixed_abs, tag = 'smem constant byte address 0x4 - core index']
  #allocation1 [shape = 'u32[72,128]{1,0:T(1,128)}', space=vmem, size = 0x9000, scoped, tag = 'internal scratch']
  #allocation2 [shape = 'f32[8,256]{1,0:T(8,128)}', space=vmem, size = 0x2000, scoped, tag = 'scratch operand']
  #allocation3 [shape = 'f32[24,256]{1,0:T(8,128)}', space=vmem, size = 0x6000, scoped, tag = 'scratch operand']
  #allocation4 [shape = 'f32[24,24]{1,0:T(8,128)}', space=vmem, size = 0x3000, scoped, tag = 'scratch operand']
  %s0 = inlined_call_operand.vmem [shape: f32[2,8,256], index: 0, kind: input, shape index: {}]
  %s1 = inlined_call_operand.vmem [shape: f32[2,8,256], index: 1, kind: input, shape index: {}]
  %s2 = inlined_call_operand.vmem [shape: f32[2,8,256], index: 2, kind: input, shape index: {}]
  %s3 = inlined_call_operand.vmem [shape: f32[2,1,2], index: 3, kind: output, shape index: {}]
  %s4 = sld [smem:[#allocation0]]
  $region53: #{text_removal_loss.11} parent=0
    _
  %s6 = ssub.s32 1, %s4
  %s7 = scalar_select 0, %s6, %s4
  loop: start=0, step=1, limit=4
  $region2: #{text_removal_loss.11} parent=0 // loop_pre_header
    _
  $region3: #{text_removal_loss.11} parent=0 // loop_header
    %s9 = sphi 0, %s13
    %p10 = scmp.ge.s32.totalorder %s9, 4
    %s16 = sphi 0, %s28
    %s17 = sphi 0, %s24
    %s18 = sphi 0, %s16
    %s19 = sphi 0, %s17
    %s20 = sphi 0, %s18
    %s21 = sphi 0, %s19
    %s33 = sphi 0, %s35
    %s36 = sphi 0, %s33
    %s37 = sphi 0, %s36
    %s53 = sphi 0, %s37
    %s61 = sphi 0, %s63
    %s64 = sphi 0, %s61
    %s65 = sphi 0, %s64
    %s81 = sphi 0, %s65
    %s89 = sphi 0, %s91
    %s92 = sphi 0, %s89
    %s93 = sphi 0, %s92
    %s109 = sphi 0, %s93
    %s115 = sphi 0, %s117
    %s118 = sphi 0, %s115
    %s119 = sphi 0, %s118
    %s135 = sphi 0, %s119
  $region4: #{text_removal_loss.11} parent=0 // loop_header_branch
    %12 = sbr.rel (%p10) target = $region8
  $region5: #{text_removal_loss.11} parent=0 // loop_body
    %s14 = ssub.s32 %s9, 1
    %s15 = ssub.s32 %s9, 2
    %s22 = sadd.s32 1, %s17
    %p23 = scmp.ge.s32.totalorder %s22, 1
    %s24 = scalar_select %p23, 0, %s22
    %s25 = sadd.s32 1, %s16
    %s26 = scalar_select %p23, %s25, %s16
    %p27 = scmp.ge.s32.totalorder %s26, 2
    %s28 = scalar_select %p27, 0, %s26
    %s29 = ssub.s32 %s16, %s28
    %s30 = ssub.s32 %s17, %s24
    %s31 = sor.u32 %s29, %s30
    %p32 = scmp.eq.s32.totalorder %s31, 0
    %s34 = sadd.s32 %s33, 1
    %s35 = scalar_select %p32, %s33, %s34
    %p38 = pneg %p32
    %p39 = scmp.eq.s32.totalorder %s9, 1
    %p40 = por %p38, %p39
    %p41 = scmp.ne.s32.totalorder %s33, %s36
    %p42 = scmp.eq.s32.totalorder %s9, 0
    %p43 = por %p41, %p42
    %p44 = scmp.ne.s32.totalorder %s33, %s36
    %p45 = scmp.eq.s32.totalorder %s14, 1
    %p46 = por %p44, %p45
    %p47 = scmp.ne.s32.totalorder %s36, %s37
    %p48 = scmp.eq.s32.totalorder %s14, 0
    %p49 = por %p47, %p48
    %p50 = scmp.ne.s32.totalorder %s36, %s37
    %p51 = scmp.eq.s32.totalorder %s15, 1
    %p52 = por %p50, %p51
    %p54 = scmp.ne.s32.totalorder %s37, %s53
    %p55 = scmp.eq.s32.totalorder %s15, 0
    %p56 = por %p54, %p55
    %s57 = ssub.s32 %s16, %s28
    %s58 = ssub.s32 %s17, %s24
    %s59 = sor.u32 %s57, %s58
    %p60 = scmp.eq.s32.totalorder %s59, 0
    %s62 = sadd.s32 %s61, 1
    %s63 = scalar_select %p60, %s61, %s62
    %p66 = pneg %p60
    %p67 = scmp.eq.s32.totalorder %s9, 1
    %p68 = por %p66, %p67
    %p69 = scmp.ne.s32.totalorder %s61, %s64
    %p70 = scmp.eq.s32.totalorder %s9, 0
    %p71 = por %p69, %p70
    %p72 = scmp.ne.s32.totalorder %s61, %s64
    %p73 = scmp.eq.s32.totalorder %s14, 1
    %p74 = por %p72, %p73
    %p75 = scmp.ne.s32.totalorder %s64, %s65
    %p76 = scmp.eq.s32.totalorder %s14, 0
    %p77 = por %p75, %p76
    %p78 = scmp.ne.s32.totalorder %s64, %s65
    %p79 = scmp.eq.s32.totalorder %s15, 1
    %p80 = por %p78, %p79
    %p82 = scmp.ne.s32.totalorder %s65, %s81
    %p83 = scmp.eq.s32.totalorder %s15, 0
    %p84 = por %p82, %p83
    %s85 = ssub.s32 %s16, %s28
    %s86 = ssub.s32 %s17, %s24
    %s87 = sor.u32 %s85, %s86
    %p88 = scmp.eq.s32.totalorder %s87, 0
    %s90 = sadd.s32 %s89, 1
    %s91 = scalar_select %p88, %s89, %s90
    %p94 = pneg %p88
    %p95 = scmp.eq.s32.totalorder %s9, 1
    %p96 = por %p94, %p95
    %p97 = scmp.ne.s32.totalorder %s89, %s92
    %p98 = scmp.eq.s32.totalorder %s9, 0
    %p99 = por %p97, %p98
    %p100 = scmp.ne.s32.totalorder %s89, %s92
    %p101 = scmp.eq.s32.totalorder %s14, 1
    %p102 = por %p100, %p101
    %p103 = scmp.ne.s32.totalorder %s92, %s93
    %p104 = scmp.eq.s32.totalorder %s14, 0
    %p105 = por %p103, %p104
    %p106 = scmp.ne.s32.totalorder %s92, %s93
    %p107 = scmp.eq.s32.totalorder %s15, 1
    %p108 = por %p106, %p107
    %p110 = scmp.ne.s32.totalorder %s93, %s109
    %p111 = scmp.eq.s32.totalorder %s15, 0
    %p112 = por %p110, %p111
    %s113 = ssub.s32 %s16, %s28
    %p114 = scmp.eq.s32.totalorder %s113, 0
    %s116 = sadd.s32 %s115, 1
    %s117 = scalar_select %p114, %s115, %s116
    %p120 = pneg %p114
    %p121 = scmp.eq.s32.totalorder %s9, 1
    %p122 = por %p120, %p121
    %p123 = scmp.ne.s32.totalorder %s115, %s118
    %p124 = scmp.eq.s32.totalorder %s9, 0
    %p125 = por %p123, %p124
    %p126 = scmp.ne.s32.totalorder %s115, %s118
    %p127 = scmp.eq.s32.totalorder %s14, 1
    %p128 = por %p126, %p127
    %p129 = scmp.ne.s32.totalorder %s118, %s119
    %p130 = scmp.eq.s32.totalorder %s14, 0
    %p131 = por %p129, %p130
    %p132 = scmp.ne.s32.totalorder %s118, %s119
    %p133 = scmp.eq.s32.totalorder %s15, 1
    %p134 = por %p132, %p133
    %p136 = scmp.ne.s32.totalorder %s119, %s135
    %p137 = scmp.eq.s32.totalorder %s15, 0
    %p138 = por %p136, %p137
    %p139 = scmp.le.s32.totalorder 1, %s9
    %p140 = scmp.lt.s32.totalorder %s9, 3
    %p141 = pnand %p139, %p140
    %p142 = pneg %p141
    // Predicated region
    $region9: #{text_removal_loss.11} parent=5 // pred_check
      _
    $region10: #{text_removal_loss.11} parent=5 // pred_check_branch
      %144 = sbr.rel (%p141) target = $region12
    $region11: #{text_removal_loss.11} parent=5 // pred_region
      %s145 = ssub.s32 %s9, 1
    $region12: #{text_removal_loss.11} parent=5 // pred_fallthru
      _
    %p146 = scmp.lt.s32.totalorder %s9, 2
    // Predicated region
    $region13: #{text_removal_loss.11} parent=5 // pred_check
      %p147 = pneg %p146
    $region14: #{text_removal_loss.11} parent=5 // pred_check_branch
      %149 = sbr.rel (%p147) target = $region16
    $region15: #{text_removal_loss.11} parent=5 // pred_region
      // Predicated region
      $region17: #{text_removal_loss.11} parent=15 // pred_check
        %p150 = pneg %p43
      $region18: #{text_removal_loss.11} parent=15 // pred_check_branch
        %152 = sbr.rel (%p150) target = $region20
      $region19: #{text_removal_loss.11} parent=15 // pred_region
        %s153 = smul.u32 2, %s17
        %p154 = scmp.lt.s32.totalorder %s16, 1
        %s155 = scalar_select %p154, %s16, 1
        %p156 = scmp.lt.s32.totalorder %s153, 1
        %s157 = scalar_select %p156, %s153, 1
        %s158 = smul.addr %s155, 2
        %s159 = sadd.s32 %s157, %s158
        %s160 = smul.addr %s159, 8
        %s161 = scalar_lea.vmem %s0, %s160
        %s162 = smul.u32 2, %s17
      $region20: #{text_removal_loss.11} parent=15 // pred_fallthru
        _
      // Predicated region
      $region21: #{text_removal_loss.11} parent=15 // pred_check
        %p163 = pneg %p71
      $region22: #{text_removal_loss.11} parent=15 // pred_check_branch
        %165 = sbr.rel (%p163) target = $region24
      $region23: #{text_removal_loss.11} parent=15 // pred_region
        %s166 = smul.u32 2, %s17
        %p167 = scmp.lt.s32.totalorder %s16, 1
        %s168 = scalar_select %p167, %s16, 1
        %p169 = scmp.lt.s32.totalorder %s166, 1
        %s170 = scalar_select %p169, %s166, 1
        %s171 = smul.addr %s168, 2
        %s172 = sadd.s32 %s170, %s171
        %s173 = smul.addr %s172, 8
        %s174 = scalar_lea.vmem %s1, %s173
        %s175 = smul.u32 2, %s17
      $region24: #{text_removal_loss.11} parent=15 // pred_fallthru
        _
      // Predicated region
      $region25: #{text_removal_loss.11} parent=15 // pred_check
        %p176 = pneg %p99
      $region26: #{text_removal_loss.11} parent=15 // pred_check_branch
        %178 = sbr.rel (%p176) target = $region28
      $region27: #{text_removal_loss.11} parent=15 // pred_region
        %s179 = smul.u32 2, %s17
        %p180 = scmp.lt.s32.totalorder %s16, 1
        %s181 = scalar_select %p180, %s16, 1
        %p182 = scmp.lt.s32.totalorder %s179, 1
        %s183 = scalar_select %p182, %s179, 1
        %s184 = smul.addr %s181, 2
        %s185 = sadd.s32 %s183, %s184
        %s186 = smul.addr %s185, 8
        %s187 = scalar_lea.vmem %s2, %s186
        %s188 = smul.u32 2, %s17
      $region28: #{text_removal_loss.11} parent=15 // pred_fallthru
        _
    $region16: #{text_removal_loss.11} parent=5 // pred_fallthru
      _
    %p189 = scmp.le.s32.totalorder 1, %s9
    %p190 = scmp.lt.s32.totalorder %s9, 3
    %p191 = pnand %p189, %p190
    %p192 = pneg %p191
    // Predicated region
    $region29: #{text_removal_loss.11} parent=5 // pred_check
      _
    $region30: #{text_removal_loss.11} parent=5 // pred_check_branch
      %194 = sbr.rel (%p191) target = $region32
    $region31: #{text_removal_loss.11} parent=5 // pred_region
      %s195 = ssub.s32 %s9, 1
      %s196 = smul.u32 2, %s19
      %p197 = scmp.lt.s32.totalorder %s18, 1
      %s198 = scalar_select %p197, %s18, 1
      %p199 = scmp.lt.s32.totalorder %s196, 1
      %s200 = scalar_select %p199, %s196, 1
      %s201 = smul.addr %s198, 2
      %s202 = sadd.s32 %s200, %s201
      %s203 = smul.addr %s202, 8
      %s204 = scalar_lea.vmem %s0, %s203
      %p205 = pneg %p49
      %p206 = pneg %p46
      %s207 = smul.u32 2, %s19
      %p208 = scmp.lt.s32.totalorder %s18, 1
      %s209 = scalar_select %p208, %s18, 1
      %p210 = scmp.lt.s32.totalorder %s207, 1
      %s211 = scalar_select %p210, %s207, 1
      %s212 = smul.addr %s209, 2
      %s213 = sadd.s32 %s211, %s212
      %s214 = smul.addr %s213, 8
      %s215 = scalar_lea.vmem %s1, %s214
      %p216 = pneg %p77
      %p217 = pneg %p74
      %s218 = smul.u32 2, %s19
      %p219 = scmp.lt.s32.totalorder %s18, 1
      %s220 = scalar_select %p219, %s18, 1
      %p221 = scmp.lt.s32.totalorder %s218, 1
      %s222 = scalar_select %p221, %s218, 1
      %s223 = smul.addr %s220, 2
      %s224 = sadd.s32 %s222, %s223
      %s225 = smul.addr %s224, 8
      %s226 = scalar_lea.vmem %s2, %s225
      %p227 = pneg %p105
      %p228 = pneg %p102
      %p229 = pneg %p131
      %p230 = pneg %p128
      %p231 = scmp.lt.s32.totalorder %s18, 1
      %s232 = scalar_select %p231, %s18, 1
      %s233 = scalar_lea.vmem %s3, %s232
      %s234 = smul.u32 2, %s19
      %p235 = scmp.lt.s32.totalorder %s18, 1
      %s236 = scalar_select %p235, %s18, 1
      %p237 = scmp.lt.s32.totalorder %s234, 1
      %s238 = scalar_select %p237, %s234, 1
      %s239 = smul.addr %s236, 2
      %s240 = sadd.s32 %s238, %s239
      %s241 = smul.addr %s240, 8
      %s242 = scalar_lea.vmem %s0, %s241
      %s243 = smul.u32 2, %s19
      %s244 = smul.u32 2, %s19
      %p245 = scmp.lt.s32.totalorder %s18, 1
      %s246 = scalar_select %p245, %s18, 1
      %p247 = scmp.lt.s32.totalorder %s244, 1
      %s248 = scalar_select %p247, %s244, 1
      %s249 = smul.addr %s246, 2
      %s250 = sadd.s32 %s248, %s249
      %s251 = smul.addr %s250, 8
      %s252 = scalar_lea.vmem %s1, %s251
      %s253 = smul.u32 2, %s19
      %s254 = smul.u32 2, %s19
      %p255 = scmp.lt.s32.totalorder %s18, 1
      %s256 = scalar_select %p255, %s18, 1
      %p257 = scmp.lt.s32.totalorder %s254, 1
      %s258 = scalar_select %p257, %s254, 1
      %s259 = smul.addr %s256, 2
      %s260 = sadd.s32 %s258, %s259
      %s261 = smul.addr %s260, 8
      %s262 = scalar_lea.vmem %s2, %s261
      %s263 = smul.u32 2, %s19
      %p264 = scmp.lt.s32.totalorder %s18, 1
      %s265 = scalar_select %p264, %s18, 1
      %s266 = scalar_lea.vmem %s3, %s265
      %p267 = scmp.eq.s32.totalorder %s19, 0
      // Predicated region
      $region33: #{text_removal_loss.11} parent=31 // pred_check
        %p268 = pneg %p267
      $region34: #{text_removal_loss.11} parent=31 // pred_check_branch
        %270 = sbr.rel (%p268) target = $region36
      $region35: #{text_removal_loss.11} parent=31 // pred_region
        %271 = vst [vmem:[#allocation2] sm:$0xff] 0.0
        %272 = vst [vmem:[#allocation2 + $0x8] sm:$0xff] 0.0
        %vm273 = vcmask 195584
        %274 = vst.msk [vmem:[#allocation4] sm:$0xff] %vm273, 0.0
        %275 = vst.msk [vmem:[#allocation4 + $0x8] sm:$0xff] %vm273, 0.0
        %276 = vst.msk [vmem:[#allocation4 + $0x10] sm:$0xff] %vm273, 0.0
      $region36: #{text_removal_loss.11} parent=31 // pred_fallthru
        _
      %v277 = vld [vmem:[%s242] sm:$0xff]
      %v278 = vld [vmem:[%s242 + $0x8] sm:$0xff]
      %v279 = vld [vmem:[%s252] sm:$0xff]
      %v280 = vld [vmem:[%s252 + $0x8] sm:$0xff]
      %v281 = vld [vmem:[%s262] sm:$0xff]
      %v282 = vld [vmem:[%s262 + $0x8] sm:$0xff]
      %v283 = vsub.f32 %v277, %v281
      %v284 = vsub.f32 %v278, %v282
      %v285 = vand.u32 2147483647, %v283
      %v286 = vand.u32 2147483647, %v284
      %v287 = vsub.f32 %v279, %v281
      %v288 = vsub.f32 %v280, %v282
      %v289 = vand.u32 2147483647, %v287
      %v290 = vand.u32 2147483647, %v288
      %v291 = vadd.f32 %v285, %v289
      %v292 = vadd.f32 %v286, %v290
      %v293 = vld [vmem:[#allocation2] sm:$0xff]
      %v294 = vld [vmem:[#allocation2 + $0x8] sm:$0xff]
      %v295 = vadd.f32 %v291, 0.0
      %v296 = vadd.f32 %v292, 0.0
      %v297 = vadd.f32 %v293, %v295
      %v298 = vadd.f32 %v294, %v296
      %299 = vst [vmem:[#allocation2] sm:$0xff] %v297
      %300 = vst [vmem:[#allocation2 + $0x8] sm:$0xff] %v298
      %301 = vst [vmem:[#allocation3] sm:$0xff] %v277
      %302 = vst [vmem:[#allocation3 + $0x8] sm:$0xff] %v278
      %303 = vst [vmem:[#allocation3 + $0x10] sm:$0xff] %v279
      %304 = vst [vmem:[#allocation3 + $0x18] sm:$0xff] %v280
      %305 = vst [vmem:[#allocation3 + $0x20] sm:$0xff] %v281
      %306 = vst [vmem:[#allocation3 + $0x28] sm:$0xff] %v282
      %v307 = vld [vmem:[#allocation3] sm:$0xff]
      %v308 = vld [vmem:[#allocation3 + $0x8] sm:$0xff]
      %v309 = vld [vmem:[#allocation3 + $0x10] sm:$0xff]
      %v310 = vld [vmem:[#allocation3 + $0x18] sm:$0xff]
      %v311 = vld [vmem:[#allocation3 + $0x20] sm:$0xff]
      %v312 = vld [vmem:[#allocation3 + $0x28] sm:$0xff]
      %v313 = vld [vmem:[#allocation4] sm:$0xff]
      %v314 = vld [vmem:[#allocation4 + $0x8] sm:$0xff]
      %v315 = vld [vmem:[#allocation4 + $0x10] sm:$0xff]
      %316 = vmatpush.xpose.msra.mxu0 0.0
      %317 = vmatpush.xpose.msra.mxu0 0.0
      %318 = vmatpush.xpose.msra.mxu0 0.0
      %319 = vmatpush.xpose.msra.mxu0 0.0
      %320 = vmatpush.xpose.msra.mxu0 0.0
      %321 = vmatpush.xpose.msra.mxu0 0.0
      %322 = vmatpush.xpose.msra.mxu0 0.0
      %323 = vmatpush.xpose.msra.mxu0 0.0
      %324 = vmatpush.xpose.msra.mxu0 0.0
      %325 = vmatpush.xpose.msra.mxu0 0.0
      %326 = vmatpush.xpose.msra.mxu0 0.0
      %327 = vmatpush.xpose.msra.mxu0 0.0
      %328 = vmatpush.xpose.msra.mxu0 0.0
      %329 = vmatpush.xpose.msra.mxu0 %v311
      %330 = vmatpush.xpose.msra.mxu0 %v309
      %331 = vmatpush.xpose.msra.mxu0 %v307
      %332 = vmatmul.f32.gmra.mxu0 %v307
      %v333 = vpop.f32.mrf.mxu0
      %v334 = vadd.f32 0.0, %v333
      %335 = vmatmul.f32.gmra.mxu0 %v309
      %v336 = vpop.f32.mrf.mxu0
      %v337 = vadd.f32 0.0, %v336
      %338 = vmatmul.f32.gmra.mxu0 %v311
      %v339 = vpop.f32.mrf.mxu0
      %v340 = vadd.f32 0.0, %v339
      %341 = vdwg.mxu0
      %342 = vmatpush.xpose.msra.mxu0 0.0
      %343 = vmatpush.xpose.msra.mxu0 0.0
      %344 = vmatpush.xpose.msra.mxu0 0.0
      %345 = vmatpush.xpose.msra.mxu0 0.0
      %346 = vmatpush.xpose.msra.mxu0 0.0
      %347 = vmatpush.xpose.msra.mxu0 0.0
      %348 = vmatpush.xpose.msra.mxu0 0.0
      %349 = vmatpush.xpose.msra.mxu0 0.0
      %350 = vmatpush.xpose.msra.mxu0 0.0
      %351 = vmatpush.xpose.msra.mxu0 0.0
      %352 = vmatpush.xpose.msra.mxu0 0.0
      %353 = vmatpush.xpose.msra.mxu0 0.0
      %354 = vmatpush.xpose.msra.mxu0 0.0
      %355 = vmatpush.xpose.msra.mxu0 %v312
      %356 = vmatpush.xpose.msra.mxu0 %v310
      %357 = vmatpush.xpose.msra.mxu0 %v308
      %358 = vmatmul.f32.gmra.mxu0 %v308
      %v359 = vpop.f32.mrf.mxu0
      %v360 = vadd.f32 %v334, %v359
      %361 = vmatmul.f32.gmra.mxu0 %v310
      %v362 = vpop.f32.mrf.mxu0
      %v363 = vadd.f32 %v337, %v362
      %364 = vmatmul.f32.gmra.mxu0 %v312
      %v365 = vpop.f32.mrf.mxu0
      %v366 = vadd.f32 %v340, %v365
      %367 = vdwg.mxu0
      %v368 = vadd.f32 %v313, %v360
      %v369 = vadd.f32 %v314, %v363
      %v370 = vadd.f32 %v315, %v366
      %vm371 = vcmask 195584
      %372 = vst.msk [vmem:[#allocation4] sm:$0xff] %vm371, %v368
      %373 = vst.msk [vmem:[#allocation4 + $0x8] sm:$0xff] %vm371, %v369
      %374 = vst.msk [vmem:[#allocation4 + $0x10] sm:$0xff] %vm371, %v370
      // Predicated region
      $region37: #{text_removal_loss.11} parent=31 // pred_check
        %p375 = pneg %p267
      $region38: #{text_removal_loss.11} parent=31 // pred_check_branch
        %377 = sbr.rel (%p375) target = $region40
      $region39: #{text_removal_loss.11} parent=31 // pred_region
        %v378 = vld [vmem:[#allocation4] sm:$0xff]
        %v379 = vld [vmem:[#allocation4 + $0x8] sm:$0xff]
        %v380 = vld [vmem:[#allocation4 + $0x10] sm:$0xff]
        %v381 = vmul.f32 %v378, 0.00048828125
        %v382 = vmul.f32 %v379, 0.00048828125
        %v383 = vmul.f32 %v380, 0.00048828125
        %385 = vrot.lane.b32.xlu0 %v383, 112
        %v386 = vpop.permute.xlu0 %385
        %v388 = vsub.f32 %v381, %v386
        %v389 = vand.u32 2147483647, %v388
        %vm390 = vcmask 64512
        %v391 = vsel %vm390, %v389, 0.0
        %392 = vadd.xlane.f32.xlu0 %v391
        %v393 = vpop.xlane.xlu0 %392
        %v394 = vrot.slane %v393, 4
        %v395 = vadd.f32 %v393, %v394
        %v396 = vrot.slane %v395, 2
        %v397 = vadd.f32 %v395, %v396
        %v398 = vrot.slane %v397, 1
        %v399 = vadd.f32 %v397, %v398
        %s400 = vtos %v399
        %401 = vrot.lane.b32.xlu0 %v383, 120
        %v402 = vpop.permute.xlu0 %401
        %v404 = vsub.f32 %v382, %v402
        %v405 = vand.u32 2147483647, %v404
        %407 = vrot.lane.b32.xlu0 %v405, 120
        %v408 = vpop.permute.xlu0 %407
        %v410 = vsel %vm390, %v408, 0.0
        %411 = vadd.xlane.f32.xlu0 %v410
        %v412 = vpop.xlane.xlu0 %411
        %v413 = vrot.slane %v412, 4
        %v414 = vadd.f32 %v412, %v413
        %v415 = vrot.slane %v414, 2
        %v416 = vadd.f32 %v414, %v415
        %v417 = vrot.slane %v416, 1
        %v418 = vadd.f32 %v416, %v417
        %s419 = vtos %v418
        %s420 = sadd.f32 %s400, %s419
        %v421 = vld [vmem:[#allocation2] sm:$0xff]
        %v422 = vld [vmem:[#allocation2 + $0x8] sm:$0xff]
        %v423 = vadd.f32 %v421, %v422
        %424 = vadd.xlane.f32.xlu0 %v423
        %v425 = vpop.xlane.xlu0 %424
        %v426 = vrot.slane %v425, 4
        %v427 = vadd.f32 %v425, %v426
        %v428 = vrot.slane %v427, 2
        %v429 = vadd.f32 %v427, %v428
        %v430 = vrot.slane %v429, 1
        %v431 = vadd.f32 %v429, %v430
        %s432 = vtos %v431
        %v433 = vstv %s432
        %vm434 = vcmask 0
        %435 = vst.msk [vmem:[%s266] sm:$0x1] %vm434, %v433
        %v436 = vstv %s420
        %vm437 = vcmask 8200
        %438 = vst.msk [vmem:[%s266] sm:$0x1] %vm437, %v436
      $region40: #{text_removal_loss.11} parent=31 // pred_fallthru
        _
      %p439 = scmp.lt.s32.totalorder %s18, 1
      %s440 = scalar_select %p439, %s18, 1
      %s441 = scalar_lea.vmem %s3, %s440
      // Predicated region
      $region41: #{text_removal_loss.11} parent=31 // pred_check
        %p442 = pneg %p128
      $region42: #{text_removal_loss.11} parent=31 // pred_check_branch
        %444 = sbr.rel (%p442) target = $region44
      $region43: #{text_removal_loss.11} parent=31 // pred_region
        _
      $region44: #{text_removal_loss.11} parent=31 // pred_fallthru
        _
    $region32: #{text_removal_loss.11} parent=5 // pred_fallthru
      _
    %p445 = scmp.le.s32.totalorder 2, %s9
    // Predicated region
    $region45: #{text_removal_loss.11} parent=5 // pred_check
      %p446 = pneg %p445
    $region46: #{text_removal_loss.11} parent=5 // pred_check_branch
      %448 = sbr.rel (%p446) target = $region48
    $region47: #{text_removal_loss.11} parent=5 // pred_region
      %s449 = ssub.s32 %s9, 2
      // Predicated region
      $region49: #{text_removal_loss.11} parent=47 // pred_check
        %p450 = pneg %p134
      $region50: #{text_removal_loss.11} parent=47 // pred_check_branch
        %452 = sbr.rel (%p450) target = $region52
      $region51: #{text_removal_loss.11} parent=47 // pred_region
        %p453 = scmp.lt.s32.totalorder %s20, 1
        %s454 = scalar_select %p453, %s20, 1
        %s455 = scalar_lea.vmem %s3, %s454
      $region52: #{text_removal_loss.11} parent=47 // pred_fallthru
        _
    $region48: #{text_removal_loss.11} parent=5 // pred_fallthru
      _
  $region6: #{text_removal_loss.11} parent=0 // loop_footer
    %s13 = sadd.s32 1, %s9
  $region7: #{text_removal_loss.11} parent=0 // loop_footer_branch
    %8 = sbr.rel target = $region3
  $region8: #{text_removal_loss.11} parent=0 // loop_exit
    _

// kernel: text_removal_loss.12
$region0: #{text_removal_loss.12}
  #allocation0 [shape = 'u32[]', space=smem, size = 0x4, offset = 0x4, fixed_abs, tag = 'smem constant byte address 0x4 - core index']
  #allocation1 [shape = 'u32[72,128]{1,0:T(1,128)}', space=vmem, size = 0x9000, scoped, tag = 'internal scratch']
  #allocation2 [shape = 'f32[8,64]{1,0:T(8,128)}', space=vmem, size = 0x1000, scoped, tag = 'scratch operand']
  #allocation3 [shape = 'f32[48,64]{1,0:T(8,128)}', space=vmem, size = 0x6000, scoped, tag = 'scratch operand']
  #allocation4 [shape = 'f32[48,48]{1,0:T(8,128)}', space=vmem, size = 0x6000, scoped, tag = 'scratch operand']
  %s0 = inlined_call_operand.vmem [shape: f32[2,16,64], index: 0, kind: input, shape index: {}]
  %s1 = inlined_call_operand.vmem [shape: f32[2,16,64], index: 1, kind: input, shape index: {}]
  %s2 = inlined_call_operand.vmem [shape: f32[2,16,64], index: 2, kind: input, shape index: {}]
  %s3 = inlined_call_operand.vmem [shape: f32[2,1,2], index: 3, kind: output, shape index: {}]
  %s4 = sld [smem:[#allocation0]]
  $region53: #{text_removal_loss.12} parent=0
    _
  %s6 = ssub.s32 1, %s4
  %s7 = scalar_select 0, %s6, %s4
  loop: start=0, step=1, limit=4
  $region2: #{text_removal_loss.12} parent=0 // loop_pre_header
    _
  $region3: #{text_removal_loss.12} parent=0 // loop_header
    %s9 = sphi 0, %s13
    %p10 = scmp.ge.s32.totalorder %s9, 4
    %s16 = sphi 0, %s28
    %s17 = sphi 0, %s24
    %s18 = sphi 0, %s16
    %s19 = sphi 0, %s17
    %s20 = sphi 0, %s18
    %s21 = sphi 0, %s19
    %s33 = sphi 0, %s35
    %s36 = sphi 0, %s33
    %s37 = sphi 0, %s36
    %s53 = sphi 0, %s37
    %s61 = sphi 0, %s63
    %s64 = sphi 0, %s61
    %s65 = sphi 0, %s64
    %s81 = sphi 0, %s65
    %s89 = sphi 0, %s91
    %s92 = sphi 0, %s89
    %s93 = sphi 0, %s92
    %s109 = sphi 0, %s93
    %s115 = sphi 0, %s117
    %s118 = sphi 0, %s115
    %s119 = sphi 0, %s118
    %s135 = sphi 0, %s119
  $region4: #{text_removal_loss.12} parent=0 // loop_header_branch
    %12 = sbr.rel (%p10) target = $region8
  $region5: #{text_removal_loss.12} parent=0 // loop_body
    %s14 = ssub.s32 %s9, 1
    %s15 = ssub.s32 %s9, 2
    %s22 = sadd.s32 1, %s17
    %p23 = scmp.ge.s32.totalorder %s22, 1
    %s24 = scalar_select %p23, 0, %s22
    %s25 = sadd.s32 1, %s16
    %s26 = scalar_select %p23, %s25, %s16
    %p27 = scmp.ge.s32.totalorder %s26, 2
    %s28 = scalar_select %p27, 0, %s26
    %s29 = ssub.s32 %s16, %s28
    %s30 = ssub.s32 %s17, %s24
    %s31 = sor.u32 %s29, %s30
    %p32 = scmp.eq.s32.totalorder %s31, 0
    %s34 = sadd.s32 %s33, 1
    %s35 = scalar_select %p32, %s33, %s34
    %p38 = pneg %p32
    %p39 = scmp.eq.s32.totalorder %s9, 1
    %p40 = por %p38, %p39
    %p41 = scmp.ne.s32.totalorder %s33, %s36
    %p42 = scmp.eq.s32.totalorder %s9, 0
    %p43 = por %p41, %p42
    %p44 = scmp.ne.s32.totalorder %s33, %s36
    %p45 = scmp.eq.s32.totalorder %s14, 1
    %p46 = por %p44, %p45
    %p47 = scmp.ne.s32.totalorder %s36, %s37
    %p48 = scmp.eq.s32.totalorder %s14, 0
    %p49 = por %p47, %p48
    %p50 = scmp.ne.s32.totalorder %s36, %s37
    %p51 = scmp.eq.s32.totalorder %s15, 1
    %p52 = por %p50, %p51
    %p54 = scmp.ne.s32.totalorder %s37, %s53
    %p55 = scmp.eq.s32.totalorder %s15, 0
    %p56 = por %p54, %p55
    %s57 = ssub.s32 %s16, %s28
    %s58 = ssub.s32 %s17, %s24
    %s59 = sor.u32 %s57, %s58
    %p60 = scmp.eq.s32.totalorder %s59, 0
    %s62 = sadd.s32 %s61, 1
    %s63 = scalar_select %p60, %s61, %s62
    %p66 = pneg %p60
    %p67 = scmp.eq.s32.totalorder %s9, 1
    %p68 = por %p66, %p67
    %p69 = scmp.ne.s32.totalorder %s61, %s64
    %p70 = scmp.eq.s32.totalorder %s9, 0
    %p71 = por %p69, %p70
    %p72 = scmp.ne.s32.totalorder %s61, %s64
    %p73 = scmp.eq.s32.totalorder %s14, 1
    %p74 = por %p72, %p73
    %p75 = scmp.ne.s32.totalorder %s64, %s65
    %p76 = scmp.eq.s32.totalorder %s14, 0
    %p77 = por %p75, %p76
    %p78 = scmp.ne.s32.totalorder %s64, %s65
    %p79 = scmp.eq.s32.totalorder %s15, 1
    %p80 = por %p78, %p79
    %p82 = scmp.ne.s32.totalorder %s65, %s81
    %p83 = scmp.eq.s32.totalorder %s15, 0
    %p84 = por %p82, %p83
    %s85 = ssub.s32 %s16, %s28
    %s86 = ssub.s32 %s17, %s24
    %s87 = sor.u32 %s85, %s86
    %p88 = scmp.eq.s32.totalorder %s87, 0
    %s90 = sadd.s32 %s89, 1
    %s91 = scalar_select %p88, %s89, %s90
    %p94 = pneg %p88
    %p95 = scmp.eq.s32.totalorder %s9, 1
    %p96 = por %p94, %p95
    %p97 = scmp.ne.s32.totalorder %s89, %s92
    %p98 = scmp.eq.s32.totalorder %s9, 0
    %p99 = por %p97, %p98
    %p100 = scmp.ne.s32.totalorder %s89, %s92
    %p101 = scmp.eq.s32.totalorder %s14, 1
    %p102 = por %p100, %p101
    %p103 = scmp.ne.s32.totalorder %s92, %s93
    %p104 = scmp.eq.s32.totalorder %s14, 0
    %p105 = por %p103, %p104
    %p106 = scmp.ne.s32.totalorder %s92, %s93
    %p107 = scmp.eq.s32.totalorder %s15, 1
    %p108 = por %p106, %p107
    %p110 = scmp.ne.s32.totalorder %s93, %s109
    %p111 = scmp.eq.s32.totalorder %s15, 0
    %p112 = por %p110, %p111
    %s113 = ssub.s32 %s16, %s28
    %p114 = scmp.eq.s32.totalorder %s113, 0
    %s116 = sadd.s32 %s115, 1
    %s117 = scalar_select %p114, %s115, %s116
    %p120 = pneg %p114
    %p121 = scmp.eq.s32.totalorder %s9, 1
    %p122 = por %p120, %p121
    %p123 = scmp.ne.s32.totalorder %s115, %s118
    %p124 = scmp.eq.s32.totalorder %s9, 0
    %p125 = por %p123, %p124
    %p126 = scmp.ne.s32.totalorder %s115, %s118
    %p127 = scmp.eq.s32.totalorder %s14, 1
    %p128 = por %p126, %p127
    %p129 = scmp.ne.s32.totalorder %s118, %s119
    %p130 = scmp.eq.s32.totalorder %s14, 0
    %p131 = por %p129, %p130
    %p132 = scmp.ne.s32.totalorder %s118, %s119
    %p133 = scmp.eq.s32.totalorder %s15, 1
    %p134 = por %p132, %p133
    %p136 = scmp.ne.s32.totalorder %s119, %s135
    %p137 = scmp.eq.s32.totalorder %s15, 0
    %p138 = por %p136, %p137
    %p139 = scmp.le.s32.totalorder 1, %s9
    %p140 = scmp.lt.s32.totalorder %s9, 3
    %p141 = pnand %p139, %p140
    %p142 = pneg %p141
    // Predicated region
    $region9: #{text_removal_loss.12} parent=5 // pred_check
      _
    $region10: #{text_removal_loss.12} parent=5 // pred_check_branch
      %144 = sbr.rel (%p141) target = $region12
    $region11: #{text_removal_loss.12} parent=5 // pred_region
      %s145 = ssub.s32 %s9, 1
    $region12: #{text_removal_loss.12} parent=5 // pred_fallthru
      _
    %p146 = scmp.lt.s32.totalorder %s9, 2
    // Predicated region
    $region13: #{text_removal_loss.12} parent=5 // pred_check
      %p147 = pneg %p146
    $region14: #{text_removal_loss.12} parent=5 // pred_check_branch
      %149 = sbr.rel (%p147) target = $region16
    $region15: #{text_removal_loss.12} parent=5 // pred_region
      // Predicated region
      $region17: #{text_removal_loss.12} parent=15 // pred_check
        %p150 = pneg %p43
      $region18: #{text_removal_loss.12} parent=15 // pred_check_branch
        %152 = sbr.rel (%p150) target = $region20
      $region19: #{text_removal_loss.12} parent=15 // pred_region
        %p153 = scmp.lt.s32.totalorder %s16, 1
        %s154 = scalar_select %p153, %s16, 1
        %p155 = scmp.lt.s32.totalorder %s17, 0
        %s156 = scalar_select %p155, %s17, 0
        %s157 = smul.addr %s154, 2
        %s158 = sadd.s32 %s156, %s157
        %s159 = smul.addr %s158, 8
        %s160 = scalar_lea.vmem %s0, %s159
      $region20: #{text_removal_loss.12} parent=15 // pred_fallthru
        _
      // Predicated region
      $region21: #{text_removal_loss.12} parent=15 // pred_check
        %p161 = pneg %p71
      $region22: #{text_removal_loss.12} parent=15 // pred_check_branch
        %163 = sbr.rel (%p161) target = $region24
      $region23: #{text_removal_loss.12} parent=15 // pred_region
        %p164 = scmp.lt.s32.totalorder %s16, 1
        %s165 = scalar_select %p164, %s16, 1
        %p166 = scmp.lt.s32.totalorder %s17, 0
        %s167 = scalar_select %p166, %s17, 0
        %s168 = smul.addr %s165, 2
        %s169 = sadd.s32 %s167, %s168
        %s170 = smul.addr %s169, 8
        %s171 = scalar_lea.vmem %s1, %s170
      $region24: #{text_removal_loss.12} parent=15 // pred_fallthru
        _
      // Predicated region
      $region25: #{text_removal_loss.12} parent=15 // pred_check
        %p172 = pneg %p99
      $region26: #{text_removal_loss.12} parent=15 // pred_check_branch
        %174 = sbr.rel (%p172) target = $region28
      $region27: #{text_removal_loss.12} parent=15 // pred_region
        %p175 = scmp.lt.s32.totalorder %s16, 1
        %s176 = scalar_select %p175, %s16, 1
        %p177 = scmp.lt.s32.totalorder %s17, 0
        %s178 = scalar_select %p177, %s17, 0
        %s179 = smul.addr %s176, 2
        %s180 = sadd.s32 %s178, %s179
        %s181 = smul.addr %s180, 8
        %s182 = scalar_lea.vmem %s2, %s181
      $region28: #{text_removal_loss.12} parent=15 // pred_fallthru
        _
    $region16: #{text_removal_loss.12} parent=5 // pred_fallthru
      _
    %p183 = scmp.le.s32.totalorder 1, %s9
    %p184 = scmp.lt.s32.totalorder %s9, 3
    %p185 = pnand %p183, %p184
    %p186 = pneg %p185
    // Predicated region
    $region29: #{text_removal_loss.12} parent=5 // pred_check
      _
    $region30: #{text_removal_loss.12} parent=5 // pred_check_branch
      %188 = sbr.rel (%p185) target = $region32
    $region31: #{text_removal_loss.12} parent=5 // pred_region
      %s189 = ssub.s32 %s9, 1
      %p190 = scmp.lt.s32.totalorder %s18, 1
      %s191 = scalar_select %p190, %s18, 1
      %p192 = scmp.lt.s32.totalorder %s19, 0
      %s193 = scalar_select %p192, %s19, 0
      %s194 = smul.addr %s191, 2
      %s195 = sadd.s32 %s193, %s194
      %s196 = smul.addr %s195, 8
      %s197 = scalar_lea.vmem %s0, %s196
      %p198 = pneg %p49
      %p199 = pneg %p46
      %p200 = scmp.lt.s32.totalorder %s18, 1
      %s201 = scalar_select %p200, %s18, 1
      %p202 = scmp.lt.s32.totalorder %s19, 0
      %s203 = scalar_select %p202, %s19, 0
      %s204 = smul.addr %s201, 2
      %s205 = sadd.s32 %s203, %s204
      %s206 = smul.addr %s205, 8
      %s207 = scalar_lea.vmem %s1, %s206
      %p208 = pneg %p77
      %p209 = pneg %p74
      %p210 = scmp.lt.s32.totalorder %s18, 1
      %s211 = scalar_select %p210, %s18, 1
      %p212 = scmp.lt.s32.totalorder %s19, 0
      %s213 = scalar_select %p212, %s19, 0
      %s214 = smul.addr %s211, 2
      %s215 = sadd.s32 %s213, %s214
      %s216 = smul.addr %s215, 8
      %s217 = scalar_lea.vmem %s2, %s216
      %p218 = pneg %p105
      %p219 = pneg %p102
      %p220 = pneg %p131
      %p221 = pneg %p128
      %p222 = scmp.lt.s32.totalorder %s18, 1
      %s223 = scalar_select %p222, %s18, 1
      %s224 = scalar_lea.vmem %s3, %s223
      %p225 = scmp.lt.s32.totalorder %s18, 1
      %s226 = scalar_select %p225, %s18, 1
      %p227 = scmp.lt.s32.totalorder %s19, 0
      %s228 = scalar_select %p227, %s19, 0
      %s229 = smul.addr %s226, 2
      %s230 = sadd.s32 %s228, %s229
      %s231 = smul.addr %s230, 8
      %s232 = scalar_lea.vmem %s0, %s231
      %p233 = scmp.lt.s32.totalorder %s18, 1
      %s234 = scalar_select %p233, %s18, 1
      %p235 = scmp.lt.s32.totalorder %s19, 0
      %s236 = scalar_select %p235, %s19, 0
      %s237 = smul.addr %s234, 2
      %s238 = sadd.s32 %s236, %s237
      %s239 = smul.addr %s238, 8
      %s240 = scalar_lea.vmem %s1, %s239
      %p241 = scmp.lt.s32.totalorder %s18, 1
      %s242 = scalar_select %p241, %s18, 1
      %p243 = scmp.lt.s32.totalorder %s19, 0
      %s244 = scalar_select %p243, %s19, 0
      %s245 = smul.addr %s242, 2
      %s246 = sadd.s32 %s244, %s245
      %s247 = smul.addr %s246, 8
      %s248 = scalar_lea.vmem %s2, %s247
      %p249 = scmp.lt.s32.totalorder %s18, 1
      %s250 = scalar_select %p249, %s18, 1
      %s251 = scalar_lea.vmem %s3, %s250
      %p252 = scmp.eq.s32.totalorder %s19, 0
      // Predicated region
      $region33: #{text_removal_loss.12} parent=31 // pred_check
        %p253 = pneg %p252
      $region34: #{text_removal_loss.12} parent=31 // pred_check_branch
        %255 = sbr.rel (%p253) target = $region36
      $region35: #{text_removal_loss.12} parent=31 // pred_region
        %vm256 = vcmask 523264
        %257 = vst.msk [vmem:[#allocation2] sm:$0xff] %vm256, 0.0
        %vm258 = vcmask 392192
        %259 = vst.msk [vmem:[#allocation4] sm:$0xff] %vm258, 0.0
        %260 = vst.msk [vmem:[#allocation4 + $0x8] sm:$0xff] %vm258, 0.0
        %261 = vst.msk [vmem:[#allocation4 + $0x10] sm:$0xff] %vm258, 0.0
        %262 = vst.msk [vmem:[#allocation4 + $0x18] sm:$0xff] %vm258, 0.0
        %263 = vst.msk [vmem:[#allocation4 + $0x20] sm:$0xff] %vm258, 0.0
        %264 = vst.msk [vmem:[#allocation4 + $0x28] sm:$0xff] %vm258, 0.0
      $region36: #{text_removal_loss.12} parent=31 // pred_fallthru
        _
      %v265 = vld [vmem:[%s232] sm:$0xff]
      %v266 = vld [vmem:[%s232 + $0x8] sm:$0xff]
      %v267 = vld [vmem:[%s240] sm:$0xff]
      %v268 = vld [vmem:[%s240 + $0x8] sm:$0xff]
      %v269 = vld [vmem:[%s248] sm:$0xff]
      %v270 = vld [vmem:[%s248 + $0x8] sm:$0xff]
      %v271 = vsub.f32 %v265, %v269
      %v272 = vsub.f32 %v266, %v270
      %v273 = vand.u32 2147483647, %v271
      %v274 = vand.u32 2147483647, %v272
      %v275 = vsub.f32 %v267, %v269
      %v276 = vsub.f32 %v268, %v270
      %v277 = vand.u32 2147483647, %v275
      %v278 = vand.u32 2147483647, %v276
      %v279 = vadd.f32 %v273, %v277
      %v280 = vadd.f32 %v274, %v278
      %v281 = vld [vmem:[#allocation2] sm:$0xff]
      %vm282 = vcmask 523264
      %v283 = vsel %vm282, %v279, 0.0
      %v284 = vsel %vm282, %v280, 0.0
      %v285 = vadd.f32 %v283, %v284
      %v286 = vadd.f32 %v281, %v285
      %287 = vst.msk [vmem:[#allocation2] sm:$0xff] %vm282, %v286
      %288 = vst.msk [vmem:[#allocation3] sm:$0xff] %vm282, %v265
      %289 = vst.msk [vmem:[#allocation3 + $0x8] sm:$0xff] %vm282, %v266
      %290 = vst.msk [vmem:[#allocation3 + $0x10] sm:$0xff] %vm282, %v267
      %291 = vst.msk [vmem:[#allocation3 + $0x18] sm:$0xff] %vm282, %v268
      %292 = vst.msk [vmem:[#allocation3 + $0x20] sm:$0xff] %vm282, %v269
      %293 = vst.msk [vmem:[#allocation3 + $0x28] sm:$0xff] %vm282, %v270
      %v294 = vld [vmem:[#allocation3] sm:$0xff]
      %v295 = vld [vmem:[#allocation3 + $0x8] sm:$0xff]
      %v296 = vld [vmem:[#allocation3 + $0x10] sm:$0xff]
      %v297 = vld [vmem:[#allocation3 + $0x18] sm:$0xff]
      %v298 = vld [vmem:[#allocation3 + $0x20] sm:$0xff]
      %v299 = vld [vmem:[#allocation3 + $0x28] sm:$0xff]
      %v300 = vld [vmem:[#allocation4] sm:$0xff]
      %v301 = vld [vmem:[#allocation4 + $0x8] sm:$0xff]
      %v302 = vld [vmem:[#allocation4 + $0x10] sm:$0xff]
      %v303 = vld [vmem:[#allocation4 + $0x18] sm:$0xff]
      %v304 = vld [vmem:[#allocation4 + $0x20] sm:$0xff]
      %v305 = vld [vmem:[#allocation4 + $0x28] sm:$0xff]
      %v307 = vsel %vm282, %v294, 0
      %v310 = vsel %vm282, %v295, 0
      %v313 = vsel %vm282, %v296, 0
      %v316 = vsel %vm282, %v297, 0
      %v319 = vsel %vm282, %v298, 0
      %v322 = vsel %vm282, %v299, 0
      %324 = vmatpush.xpose.msra.mxu0 0.0
      %325 = vmatpush.xpose.msra.mxu0 0.0
      %326 = vmatpush.xpose.msra.mxu0 0.0
      %327 = vmatpush.xpose.msra.mxu0 0.0
      %328 = vmatpush.xpose.msra.mxu0 0.0
      %329 = vmatpush.xpose.msra.mxu0 0.0
      %330 = vmatpush.xpose.msra.mxu0 0.0
      %331 = vmatpush.xpose.msra.mxu0 0.0
      %332 = vmatpush.xpose.msra.mxu0 0.0
      %333 = vmatpush.xpose.msra.mxu0 0.0
      %334 = vmatpush.xpose.msra.mxu0 %v322
      %335 = vmatpush.xpose.msra.mxu0 %v319
      %336 = vmatpush.xpose.msra.mxu0 %v316
      %337 = vmatpush.xpose.msra.mxu0 %v313
      %338 = vmatpush.xpose.msra.mxu0 %v310
      %339 = vmatpush.xpose.msra.mxu0 %v307
      %340 = vmatmul.f32.gmra.mxu0 %v307
      %v341 = vpop.f32.mrf.mxu0
      %v342 = vadd.f32 0.0, %v341
      %343 = vmatmul.f32.gmra.mxu0 %v310
      %v344 = vpop.f32.mrf.mxu0
      %v345 = vadd.f32 0.0, %v344
      %346 = vmatmul.f32.gmra.mxu0 %v313
      %v347 = vpop.f32.mrf.mxu0
      %v348 = vadd.f32 0.0, %v347
      %349 = vmatmul.f32.gmra.mxu0 %v316
      %v350 = vpop.f32.mrf.mxu0
      %v351 = vadd.f32 0.0, %v350
      %352 = vmatmul.f32.gmra.mxu0 %v319
      %v353 = vpop.f32.mrf.mxu0
      %v354 = vadd.f32 0.0, %v353
      %355 = vmatmul.f32.gmra.mxu0 %v322
      %v356 = vpop.f32.mrf.mxu0
      %v357 = vadd.f32 0.0, %v356
      %358 = vdwg.mxu0
      %v359 = vadd.f32 %v300, %v342
      %v360 = vadd.f32 %v301, %v345
      %v361 = vadd.f32 %v302, %v348
      %v362 = vadd.f32 %v303, %v351
      %v363 = vadd.f32 %v304, %v354
      %v364 = vadd.f32 %v305, %v357
      %vm365 = vcmask 392192
      %366 = vst.msk [vmem:[#allocation4] sm:$0xff] %vm365, %v359
      %367 = vst.msk [vmem:[#allocation4 + $0x8] sm:$0xff] %vm365, %v360
      %368 = vst.msk [vmem:[#allocation4 + $0x10] sm:$0xff] %vm365, %v361
      %369 = vst.msk [vmem:[#allocation4 + $0x18] sm:$0xff] %vm365, %v362
      %370 = vst.msk [vmem:[#allocation4 + $0x20] sm:$0xff] %vm365, %v363
      %371 = vst.msk [vmem:[#allocation4 + $0x28] sm:$0xff] %vm365, %v364
      // Predicated region
      $region37: #{text_removal_loss.12} parent=31 // pred_check
        %p372 = pneg %p252
      $region38: #{text_removal_loss.12} parent=31 // pred_check_branch
        %374 = sbr.rel (%p372) target = $region40
      $region39: #{text_removal_loss.12} parent=31 // pred_region
        %v375 = vld [vmem:[#allocation4] sm:$0xff]
        %v376 = vld [vmem:[#allocation4 + $0x8] sm:$0xff]
        %v377 = vld [vmem:[#allocation4 + $0x10] sm:$0xff]
        %v378 = vld [vmem:[#allocation4 + $0x18] sm:$0xff]
        %v379 = vld [vmem:[#allocation4 + $0x20] sm:$0xff]
        %v380 = vld [vmem:[#allocation4 + $0x28] sm:$0xff]
        %v381 = vmul.f32 %v375, 0.0009765625
        %v382 = vmul.f32 %v376, 0.0009765625
        %v383 = vmul.f32 %v377, 0.0009765625
        %v384 = vmul.f32 %v378, 0.0009765625
        %v385 = vmul.f32 %v379, 0.0009765625
        %v386 = vmul.f32 %v380, 0.0009765625
        %389 = vrot.lane.b32.xlu0 %v385, 96
        %v390 = vpop.permute.xlu0 %389
        %391 = vrot.lane.b32.xlu0 %v386, 96
        %v392 = vpop.permute.xlu0 %391
        %v395 = vsub.f32 %v381, %v390
        %v396 = vsub.f32 %v382, %v392
        %v397 = vand.u32 2147483647, %v395
        %v398 = vand.u32 2147483647, %v396
        %vm399 = vcmask 130048
        %v400 = vsel %vm399, %v397, 0.0
        %v401 = vsel %vm399, %v398, 0.0
        %v402 = vadd.f32 %v400, %v401
        %403 = vadd.xlane.f32.xlu0 %v402
        %v404 = vpop.xlane.xlu0 %403
        %v405 = vrot.slane %v404, 4
        %v406 = vadd.f32 %v404, %v405
        %v407 = vrot.slane %v406, 2
        %v408 = vadd.f32 %v406, %v407
        %v409 = vrot.slane %v408, 1
        %v410 = vadd.f32 %v408, %v409
        %s411 = vtos %v410
        %412 = vrot.lane.b32.xlu0 %v385, 112
        %v413 = vpop.permute.xlu0 %412
        %414 = vrot.lane.b32.xlu0 %v386, 112
        %v415 = vpop.permute.xlu0 %414
        %v418 = vsub.f32 %v383, %v413
        %v419 = vsub.f32 %v384, %v415
        %v420 = vand.u32 2147483647, %v418
        %v421 = vand.u32 2147483647, %v419
        %424 = vrot.lane.b32.xlu0 %v420, 112
        %v425 = vpop.permute.xlu0 %424
        %426 = vrot.lane.b32.xlu0 %v421, 112
        %v427 = vpop.permute.xlu0 %426
        %v430 = vsel %vm399, %v425, 0.0
        %v431 = vsel %vm399, %v427, 0.0
        %v432 = vadd.f32 %v430, %v431
        %433 = vadd.xlane.f32.xlu0 %v432
        %v434 = vpop.xlane.xlu0 %433
        %v435 = vrot.slane %v434, 4
        %v436 = vadd.f32 %v434, %v435
        %v437 = vrot.slane %v436, 2
        %v438 = vadd.f32 %v436, %v437
        %v439 = vrot.slane %v438, 1
        %v440 = vadd.f32 %v438, %v439
        %s441 = vtos %v440
        %s442 = sadd.f32 %s411, %s441
        %v443 = vld [vmem:[#allocation2] sm:$0xff]
        %v444 = vsel %vm282, %v443, 0.0
        %445 = vadd.xlane.f32.xlu0 %v444
        %v446 = vpop.xlane.xlu0 %445
        %v447 = vrot.slane %v446, 4
        %v448 = vadd.f32 %v446, %v447
        %v449 = vrot.slane %v448, 2
        %v450 = vadd.f32 %v448, %v449
        %v451 = vrot.slane %v450, 1
        %v452 = vadd.f32 %v450, %v451
        %s453 = vtos %v452
        %v454 = vstv %s453
        %vm455 = vcmask 0
        %456 = vst.msk [vmem:[%s251] sm:$0x1] %vm455, %v454
        %v457 = vstv %s442
        %vm458 = vcmask 8200
        %459 = vst.msk [vmem:[%s251] sm:$0x1] %vm458, %v457
      $region40: #{text_removal_loss.12} parent=31 // pred_fallthru
        _
      %p460 = scmp.lt.s32.totalorder %s18, 1
      %s461 = scalar_select %p460, %s18, 1
      %s462 = scalar_lea.vmem %s3, %s461
      // Predicated region
      $region41: #{text_removal_loss.12} parent=31 // pred_check
        %p463 = pneg %p128
      $region42: #{text_removal_loss.12} parent=31 // pred_check_branch
        %465 = sbr.rel (%p463) target = $region44
      $region43: #{text_removal_loss.12} parent=31 // pred_region
        _
      $region44: #{text_removal_loss.12} parent=31 // pred_fallthru
        _
    $region32: #{text_removal_loss.12} parent=5 // pred_fallthru
      _
    %p466 = scmp.le.s32.totalorder 2, %s9
    // Predicated region
    $region45: #{text_removal_loss.12} parent=5 // pred_check
      %p467 = pneg %p466
    $region46: #{text_removal_loss.12} parent=5 // pred_check_branch
      %469 = sbr.rel (%p467) target = $region48
    $region47: #{text_removal_loss.12} parent=5 // pred_region
      %s470 = ssub.s32 %s9, 2
      // Predicated region
      $region49: #{text_removal_loss.12} parent=47 // pred_check
        %p471 = pneg %p134
      $region50: #{text_removal_loss.12} parent=47 // pred_check_branch
        %473 = sbr.rel (%p471) target = $region52
      $region51: #{text_removal_loss.12} parent=47 // pred_region
        %p474 = scmp.lt.s32.totalorder %s20, 1
        %s475 = scalar_select %p474, %s20, 1
        %s476 = scalar_lea.vmem %s3, %s475
      $region52: #{text_removal_loss.12} parent=47 // pred_fallthru
        _
    $region48: #{text_removal_loss.12} parent=5 // pred_fallthru
      _
  $region6: #{text_removal_loss.12} parent=0 // loop_footer
    %s13 = sadd.s32 1, %s9
  $region7: #{text_removal_loss.12} parent=0 // loop_footer_branch
    %8 = sbr.rel target = $region3
  $region8: #{text_removal_loss.12} parent=0 // loop_exit
    _

// kernel: text_removal_loss.9
$region0: #{text_removal_loss.9}
  #allocation0 [shape = 'u32[]', space=smem, size = 0x4, offset = 0x4, fixed_abs, tag = 'smem constant byte address 0x4 - core index']
  #allocation1 [shape = 'u32[72,128]{1,0:T(1,128)}', space=vmem, size = 0x9000, scoped, tag = 'internal scratch']
  %s0 = inlined_call_operand.vmem [shape: f32[2,3,1,64], index: 0, kind: input, shape index: {}]
  %s1 = inlined_call_operand.vmem [shape: f32[2,3,1,64], index: 1, kind: input, shape index: {}]
  %s2 = inlined_call_operand.vmem [shape: f32[2,1,1,64], index: 2, kind: input, shape index: {}]
  %s3 = inlined_call_operand.vmem [shape: f32[2,2,3,64], index: 3, kind: output, shape index: {}]
  %s4 = sld [smem:[#allocation0]]
  $region49: #{text_removal_loss.9} parent=0
    _
  %s6 = ssub.s32 1, %s4
  %s7 = scalar_select 0, %s6, %s4
  loop: start=0, step=1, limit=4
  $region2: #{text_removal_loss.9} parent=0 // loop_pre_header
    _
  $region3: #{text_removal_loss.9} parent=0 // loop_header
    %s9 = sphi 0, %s13
    %p10 = scmp.ge.s32.totalorder %s9, 4
    %s16 = sphi 0, %s28
    %s17 = sphi 0, %s24
    %s18 = sphi 0, %s16
    %s19 = sphi 0, %s17
    %s20 = sphi 0, %s18
    %s21 = sphi 0, %s19
    %s33 = sphi 0, %s35
    %s36 = sphi 0, %s33
    %s37 = sphi 0, %s36
    %s53 = sphi 0, %s37
    %s61 = sphi 0, %s63
    %s64 = sphi 0, %s61
    %s65 = sphi 0, %s64
    %s81 = sphi 0, %s65
    %s89 = sphi 0, %s91
    %s92 = sphi 0, %s89
    %s93 = sphi 0, %s92
    %s109 = sphi 0, %s93
    %s115 = sphi 0, %s117
    %s118 = sphi 0, %s115
    %s119 = sphi 0, %s118
    %s135 = sphi 0, %s119
  $region4: #{text_removal_loss.9} parent=0 // loop_header_branch
    %12 = sbr.rel (%p10) target = $region8
  $region5: #{text_removal_loss.9} parent=0 // loop_body
    %s14 = ssub.s32 %s9, 1
    %s15 = ssub.s32 %s9, 2
    %s22 = sadd.s32 1, %s17
    %p23 = scmp.ge.s32.totalorder %s22, 1
    %s24 = scalar_select %p23, 0, %s22
    %s25 = sadd.s32 1, %s16
    %s26 = scalar_select %p23, %s25, %s16
    %p27 = scmp.ge.s32.totalorder %s26, 2
    %s28 = scalar_select %p27, 0, %s26
    %s29 = ssub.s32 %s16, %s28
    %s30 = ssub.s32 %s17, %s24
    %s31 = sor.u32 %s29, %s30
    %p32 = scmp.eq.s32.totalorder %s31, 0
    %s34 = sadd.s32 %s33, 1
    %s35 = scalar_select %p32, %s33, %s34
    %p38 = pneg %p32
    %p39 = scmp.eq.s32.totalorder %s9, 1
    %p40 = por %p38, %p39
    %p41 = scmp.ne.s32.totalorder %s33, %s36
    %p42 = scmp.eq.s32.totalorder %s9, 0
    %p43 = por %p41, %p42
    %p44 = scmp.ne.s32.totalorder %s33, %s36
    %p45 = scmp.eq.s32.totalorder %s14, 1
    %p46 = por %p44, %p45
    %p47 = scmp.ne.s32.totalorder %s36, %s37
    %p48 = scmp.eq.s32.totalorder %s14, 0
    %p49 = por %p47, %p48
    %p50 = scmp.ne.s32.totalorder %s36, %s37
    %p51 = scmp.eq.s32.totalorder %s15, 1
    %p52 = por %p50, %p51
    %p54 = scmp.ne.s32.totalorder %s37, %s53
    %p55 = scmp.eq.s32.totalorder %s15, 0
    %p56 = por %p54, %p55
    %s57 = ssub.s32 %s16, %s28
    %s58 = ssub.s32 %s17, %s24
    %s59 = sor.u32 %s57, %s58
    %p60 = scmp.eq.s32.totalorder %s59, 0
    %s62 = sadd.s32 %s61, 1
    %s63 = scalar_select %p60, %s61, %s62
    %p66 = pneg %p60
    %p67 = scmp.eq.s32.totalorder %s9, 1
    %p68 = por %p66, %p67
    %p69 = scmp.ne.s32.totalorder %s61, %s64
    %p70 = scmp.eq.s32.totalorder %s9, 0
    %p71 = por %p69, %p70
    %p72 = scmp.ne.s32.totalorder %s61, %s64
    %p73 = scmp.eq.s32.totalorder %s14, 1
    %p74 = por %p72, %p73
    %p75 = scmp.ne.s32.totalorder %s64, %s65
    %p76 = scmp.eq.s32.totalorder %s14, 0
    %p77 = por %p75, %p76
    %p78 = scmp.ne.s32.totalorder %s64, %s65
    %p79 = scmp.eq.s32.totalorder %s15, 1
    %p80 = por %p78, %p79
    %p82 = scmp.ne.s32.totalorder %s65, %s81
    %p83 = scmp.eq.s32.totalorder %s15, 0
    %p84 = por %p82, %p83
    %s85 = ssub.s32 %s16, %s28
    %s86 = ssub.s32 %s17, %s24
    %s87 = sor.u32 %s85, %s86
    %p88 = scmp.eq.s32.totalorder %s87, 0
    %s90 = sadd.s32 %s89, 1
    %s91 = scalar_select %p88, %s89, %s90
    %p94 = pneg %p88
    %p95 = scmp.eq.s32.totalorder %s9, 1
    %p96 = por %p94, %p95
    %p97 = scmp.ne.s32.totalorder %s89, %s92
    %p98 = scmp.eq.s32.totalorder %s9, 0
    %p99 = por %p97, %p98
    %p100 = scmp.ne.s32.totalorder %s89, %s92
    %p101 = scmp.eq.s32.totalorder %s14, 1
    %p102 = por %p100, %p101
    %p103 = scmp.ne.s32.totalorder %s92, %s93
    %p104 = scmp.eq.s32.totalorder %s14, 0
    %p105 = por %p103, %p104
    %p106 = scmp.ne.s32.totalorder %s92, %s93
    %p107 = scmp.eq.s32.totalorder %s15, 1
    %p108 = por %p106, %p107
    %p110 = scmp.ne.s32.totalorder %s93, %s109
    %p111 = scmp.eq.s32.totalorder %s15, 0
    %p112 = por %p110, %p111
    %s113 = ssub.s32 %s16, %s28
    %p114 = scmp.eq.s32.totalorder %s113, 0
    %s116 = sadd.s32 %s115, 1
    %s117 = scalar_select %p114, %s115, %s116
    %p120 = pneg %p114
    %p121 = scmp.eq.s32.totalorder %s9, 1
    %p122 = por %p120, %p121
    %p123 = scmp.ne.s32.totalorder %s115, %s118
    %p124 = scmp.eq.s32.totalorder %s9, 0
    %p125 = por %p123, %p124
    %p126 = scmp.ne.s32.totalorder %s115, %s118
    %p127 = scmp.eq.s32.totalorder %s14, 1
    %p128 = por %p126, %p127
    %p129 = scmp.ne.s32.totalorder %s118, %s119
    %p130 = scmp.eq.s32.totalorder %s14, 0
    %p131 = por %p129, %p130
    %p132 = scmp.ne.s32.totalorder %s118, %s119
    %p133 = scmp.eq.s32.totalorder %s15, 1
    %p134 = por %p132, %p133
    %p136 = scmp.ne.s32.totalorder %s119, %s135
    %p137 = scmp.eq.s32.totalorder %s15, 0
    %p138 = por %p136, %p137
    %p139 = scmp.le.s32.totalorder 1, %s9
    %p140 = scmp.lt.s32.totalorder %s9, 3
    %p141 = pnand %p139, %p140
    %p142 = pneg %p141
    // Predicated region
    $region9: #{text_removal_loss.9} parent=5 // pred_check
      _
    $region10: #{text_removal_loss.9} parent=5 // pred_check_branch
      %144 = sbr.rel (%p141) target = $region12
    $region11: #{text_removal_loss.9} parent=5 // pred_region
      %s145 = ssub.s32 %s9, 1
    $region12: #{text_removal_loss.9} parent=5 // pred_fallthru
      _
    %p146 = scmp.lt.s32.totalorder %s9, 2
    // Predicated region
    $region13: #{text_removal_loss.9} parent=5 // pred_check
      %p147 = pneg %p146
    $region14: #{text_removal_loss.9} parent=5 // pred_check_branch
      %149 = sbr.rel (%p147) target = $region16
    $region15: #{text_removal_loss.9} parent=5 // pred_region
      // Predicated region
      $region17: #{text_removal_loss.9} parent=15 // pred_check
        %p150 = pneg %p43
      $region18: #{text_removal_loss.9} parent=15 // pred_check_branch
        %152 = sbr.rel (%p150) target = $region20
      $region19: #{text_removal_loss.9} parent=15 // pred_region
        %p153 = scmp.lt.s32.totalorder %s16, 1
        %s154 = scalar_select %p153, %s16, 1
        %p155 = scmp.lt.s32.totalorder %s17, 0
        %s156 = scalar_select %p155, %s17, 0
        %s157 = smul.addr %s154, 3
        %s158 = sadd.s32 %s156, %s157
        %s159 = scalar_lea.vmem %s0, %s158
      $region20: #{text_removal_loss.9} parent=15 // pred_fallthru
        _
      // Predicated region
      $region21: #{text_removal_loss.9} parent=15 // pred_check
        %p160 = pneg %p71
      $region22: #{text_removal_loss.9} parent=15 // pred_check_branch
        %162 = sbr.rel (%p160) target = $region24
      $region23: #{text_removal_loss.9} parent=15 // pred_region
        %p163 = scmp.lt.s32.totalorder %s16, 1
        %s164 = scalar_select %p163, %s16, 1
        %p165 = scmp.lt.s32.totalorder %s17, 0
        %s166 = scalar_select %p165, %s17, 0
        %s167 = smul.addr %s164, 3
        %s168 = sadd.s32 %s166, %s167
        %s169 = scalar_lea.vmem %s1, %s168
      $region24: #{text_removal_loss.9} parent=15 // pred_fallthru
        _
      // Predicated region
      $region25: #{text_removal_loss.9} parent=15 // pred_check
        %p170 = pneg %p99
      $region26: #{text_removal_loss.9} parent=15 // pred_check_branch
        %172 = sbr.rel (%p170) target = $region28
      $region27: #{text_removal_loss.9} parent=15 // pred_region
        %p173 = scmp.lt.s32.totalorder %s16, 1
        %s174 = scalar_select %p173, %s16, 1
        %p175 = scmp.lt.s32.totalorder %s17, 0
        %s176 = scalar_select %p175, %s17, 0
        %s177 = sadd.s32 %s176, %s174
        %s178 = scalar_lea.vmem %s2, %s177
      $region28: #{text_removal_loss.9} parent=15 // pred_fallthru
        _
    $region16: #{text_removal_loss.9} parent=5 // pred_fallthru
      _
    %p179 = scmp.le.s32.totalorder 1, %s9
    %p180 = scmp.lt.s32.totalorder %s9, 3
    %p181 = pnand %p179, %p180
    %p182 = pneg %p181
    // Predicated region
    $region29: #{text_removal_loss.9} parent=5 // pred_check
      _
    $region30: #{text_removal_loss.9} parent=5 // pred_check_branch
      %184 = sbr.rel (%p181) target = $region32
    $region31: #{text_removal_loss.9} parent=5 // pred_region
      %s185 = ssub.s32 %s9, 1
      %p186 = scmp.lt.s32.totalorder %s18, 1
      %s187 = scalar_select %p186, %s18, 1
      %p188 = scmp.lt.s32.totalorder %s19, 0
      %s189 = scalar_select %p188, %s19, 0
      %s190 = smul.addr %s187, 3
      %s191 = sadd.s32 %s189, %s190
      %s192 = scalar_lea.vmem %s0, %s191
      %p193 = pneg %p49
      %p194 = pneg %p46
      %p195 = scmp.lt.s32.totalorder %s18, 1
      %s196 = scalar_select %p195, %s18, 1
      %p197 = scmp.lt.s32.totalorder %s19, 0
      %s198 = scalar_select %p197, %s19, 0
      %s199 = smul.addr %s196, 3
      %s200 = sadd.s32 %s198, %s199
      %s201 = scalar_lea.vmem %s1, %s200
      %p202 = pneg %p77
      %p203 = pneg %p74
      %p204 = scmp.lt.s32.totalorder %s18, 1
      %s205 = scalar_select %p204, %s18, 1
      %p206 = scmp.lt.s32.totalorder %s19, 0
      %s207 = scalar_select %p206, %s19, 0
      %s208 = sadd.s32 %s207, %s205
      %s209 = scalar_lea.vmem %s2, %s208
      %p210 = pneg %p105
      %p211 = pneg %p102
      %p212 = pneg %p131
      %p213 = pneg %p128
      %p214 = scmp.lt.s32.totalorder %s18, 1
      %s215 = scalar_select %p214, %s18, 1
      %s216 = smul.addr %s215, 2
      %s217 = smul.addr %s216, 4
      %s218 = scalar_lea.vmem %s3, %s217
      %p219 = scmp.lt.s32.totalorder %s18, 1
      %s220 = scalar_select %p219, %s18, 1
      %p221 = scmp.lt.s32.totalorder %s19, 0
      %s222 = scalar_select %p221, %s19, 0
      %s223 = smul.addr %s220, 3
      %s224 = sadd.s32 %s222, %s223
      %s225 = scalar_lea.vmem %s0, %s224
      %p226 = scmp.lt.s32.totalorder %s18, 1
      %s227 = scalar_select %p226, %s18, 1
      %p228 = scmp.lt.s32.totalorder %s19, 0
      %s229 = scalar_select %p228, %s19, 0
      %s230 = smul.addr %s227, 3
      %s231 = sadd.s32 %s229, %s230
      %s232 = scalar_lea.vmem %s1, %s231
      %p233 = scmp.lt.s32.totalorder %s18, 1
      %s234 = scalar_select %p233, %s18, 1
      %p235 = scmp.lt.s32.totalorder %s19, 0
      %s236 = scalar_select %p235, %s19, 0
      %s237 = sadd.s32 %s236, %s234
      %s238 = scalar_lea.vmem %s2, %s237
      %p239 = scmp.lt.s32.totalorder %s18, 1
      %s240 = scalar_select %p239, %s18, 1
      %s241 = smul.addr %s240, 2
      %s242 = smul.addr %s241, 4
      %s243 = scalar_lea.vmem %s3, %s242
      %p244 = scmp.eq.s32.totalorder %s19, 0
      // Predicated region
      $region33: #{text_removal_loss.9} parent=31 // pred_check
        %p245 = pneg %p244
      $region34: #{text_removal_loss.9} parent=31 // pred_check_branch
        %247 = sbr.rel (%p245) target = $region36
      $region35: #{text_removal_loss.9} parent=31 // pred_region
        %vm248 = vcmask 518144
        %249 = vst.msk [vmem:[%s243] sm:$0x7] %vm248, 0.0
        %250 = vst.msk [vmem:[%s243 + $0x4] sm:$0x7] %vm248, 0.0
      $region36: #{text_removal_loss.9} parent=31 // pred_fallthru
        _
      %v251 = vld [vmem:[%s225] sm:$0x1]
      %v252 = vld [vmem:[%s225 + $0x1] sm:$0x1]
      %v253 = vld [vmem:[%s225 + $0x2] sm:$0x1]
      %v254 = vld [vmem:[%s232] sm:$0x1]
      %v255 = vld [vmem:[%s232 + $0x1] sm:$0x1]
      %v256 = vld [vmem:[%s232 + $0x2] sm:$0x1]
      %v257 = vld [vmem:[%s238] sm:$0x1]
      %v258 = vsub.f32 %v251, %v254
      %v259 = vsub.f32 %v252, %v255
      %v260 = vsub.f32 %v253, %v256
      %v261 = vand.u32 2147483647, %v258
      %v262 = vand.u32 2147483647, %v259
      %v263 = vand.u32 2147483647, %v260
      %v264 = vld [vmem:[%s243] sm:$0x7]
      %v265 = vadd.f32 %v261, 0.0
      %v266 = vadd.f32 %v262, 0.0
      %v267 = vadd.f32 %v263, 0.0
      %271 = vst [vmem:[#allocation1] ss:$9 sm:$0xff] %v265
      %s272 = scalar_lea.vmem [#allocation1], 1
      %273 = vst [vmem:[%s272] ss:$9 sm:$0xff] %v266
      %s274 = scalar_lea.vmem [#allocation1], 2
      %275 = vst [vmem:[%s274] ss:$9 sm:$0xff] %v267
      %v276 = vld [vmem:[#allocation1] sm:$0xff]
      %v278 = vadd.f32 %v264, %v276
      %vm279 = vcmask 518144
      %280 = vst.msk [vmem:[%s243] sm:$0x7] %vm279, %v278
      %s281 = scalar_lea.vmem %s243, 4
      %v282 = vld [vmem:[%s281] sm:$0x7]
      %v283 = vmul.f32 %v257, %v261
      %v284 = vmul.f32 %v257, %v262
      %v285 = vmul.f32 %v257, %v263
      %v286 = vadd.f32 %v283, 0.0
      %v287 = vadd.f32 %v284, 0.0
      %v288 = vadd.f32 %v285, 0.0
      %292 = vst [vmem:[#allocation1] ss:$9 sm:$0xff] %v286
      %s293 = scalar_lea.vmem [#allocation1], 1
      %294 = vst [vmem:[%s293] ss:$9 sm:$0xff] %v287
      %s295 = scalar_lea.vmem [#allocation1], 2
      %296 = vst [vmem:[%s295] ss:$9 sm:$0xff] %v288
      %v297 = vld [vmem:[#allocation1] sm:$0xff]
      %v299 = vadd.f32 %v282, %v297
      %300 = vst.msk [vmem:[%s281] sm:$0x7] %vm279, %v299
      %p301 = scmp.lt.s32.totalorder %s18, 1
      %s302 = scalar_select %p301, %s18, 1
      %s303 = smul.addr %s302, 2
      %s304 = smul.addr %s303, 4
      %s305 = scalar_lea.vmem %s3, %s304
      // Predicated region
      $region37: #{text_removal_loss.9} parent=31 // pred_check
        %p306 = pneg %p128
      $region38: #{text_removal_loss.9} parent=31 // pred_check_branch
        %308 = sbr.rel (%p306) target = $region40
      $region39: #{text_removal_loss.9} parent=31 // pred_region
        _
      $region40: #{text_removal_loss.9} parent=31 // pred_fallthru
        _
    $region32: #{text_removal_loss.9} parent=5 // pred_fallthru
      _
    %p309 = scmp.le.s32.totalorder 2, %s9
    // Predicated region
    $region41: #{text_removal_loss.9} parent=5 // pred_check
      %p310 = pneg %p309
    $region42: #{text_removal_loss.9} parent=5 // pred_check_branch
      %312 = sbr.rel (%p310) target = $region44
    $region43: #{text_removal_loss.9} parent=5 // pred_region
      %s313 = ssub.s32 %s9, 2
      // Predicated region
      $region45: #{text_removal_loss.9} parent=43 // pred_check
        %p314 = pneg %p134
      $region46: #{text_removal_loss.9} parent=43 // pred_check_branch
        %316 = sbr.rel (%p314) target = $region48
      $region47: #{text_removal_loss.9} parent=43 // pred_region
        %p317 = scmp.lt.s32.totalorder %s20, 1
        %s318 = scalar_select %p317, %s20, 1
        %s319 = smul.addr %s318, 2
        %s320 = smul.addr %s319, 4
        %s321 = scalar_lea.vmem %s3, %s320
      $region48: #{text_removal_loss.9} parent=43 // pred_fallthru
        _
    $region44: #{text_removal_loss.9} parent=5 // pred_fallthru
      _
  $region6: #{text_removal_loss.9} parent=0 // loop_footer
    %s13 = sadd.s32 1, %s9
  $region7: #{text_removal_loss.9} parent=0 // loop_footer_branch
    %8 = sbr.rel target = $region3
  $region8: #{text_removal_loss.9} parent=0 // loop_exit
    _

// kernel: text_removal_loss.13
$region0: #{text_removal_loss.13}
  #allocation0 [shape = 'u32[]', space=smem, size = 0x4, offset = 0x4, fixed_abs, tag = 'smem constant byte address 0x4 - core index']
  #allocation1 [shape = 'u32[72,128]{1,0:T(1,128)}', space=vmem, size = 0x9000, scoped, tag = 'internal scratch']
  #allocation2 [shape = 'f32[8,16]{1,0:T(8,128)}', space=vmem, size = 0x1000, scoped, tag = 'scratch operand']
  #allocation3 [shape = 'f32[96,16]{1,0:T(8,128)}', space=vmem, size = 0xc000, scoped, tag = 'scratch operand']
  #allocation4 [shape = 'f32[96,96]{1,0:T(8,128)}', space=vmem, size = 0xc000, scoped, tag = 'scratch operand']
  %s0 = inlined_call_operand.vmem [shape: f32[2,32,16], index: 0, kind: input, shape index: {}]
  %s1 = inlined_call_operand.vmem [shape: f32[2,32,16], index: 1, kind: input, shape index: {}]
  %s2 = inlined_call_operand.vmem [shape: f32[2,32,16], index: 2, kind: input, shape index: {}]
  %s3 = inlined_call_operand.vmem [shape: f32[2,1,2], index: 3, kind: output, shape index: {}]
  %s4 = sld [smem:[#allocation0]]
  $region53: #{text_removal_loss.13} parent=0
    _
  %s6 = ssub.s32 1, %s4
  %s7 = scalar_select 0, %s6, %s4
  loop: start=0, step=1, limit=4
  $region2: #{text_removal_loss.13} parent=0 // loop_pre_header
    _
  $region3: #{text_removal_loss.13} parent=0 // loop_header
    %s9 = sphi 0, %s13
    %p10 = scmp.ge.s32.totalorder %s9, 4
    %s16 = sphi 0, %s28
    %s17 = sphi 0, %s24
    %s18 = sphi 0, %s16
    %s19 = sphi 0, %s17
    %s20 = sphi 0, %s18
    %s21 = sphi 0, %s19
    %s33 = sphi 0, %s35
    %s36 = sphi 0, %s33
    %s37 = sphi 0, %s36
    %s53 = sphi 0, %s37
    %s61 = sphi 0, %s63
    %s64 = sphi 0, %s61
    %s65 = sphi 0, %s64
    %s81 = sphi 0, %s65
    %s89 = sphi 0, %s91
    %s92 = sphi 0, %s89
    %s93 = sphi 0, %s92
    %s109 = sphi 0, %s93
    %s115 = sphi 0, %s117
    %s118 = sphi 0, %s115
    %s119 = sphi 0, %s118
    %s135 = sphi 0, %s119
  $region4: #{text_removal_loss.13} parent=0 // loop_header_branch
    %12 = sbr.rel (%p10) target = $region8
  $region5: #{text_removal_loss.13} parent=0 // loop_body
    %s14 = ssub.s32 %s9, 1
    %s15 = ssub.s32 %s9, 2
    %s22 = sadd.s32 1, %s17
    %p23 = scmp.ge.s32.totalorder %s22, 1
    %s24 = scalar_select %p23, 0, %s22
    %s25 = sadd.s32 1, %s16
    %s26 = scalar_select %p23, %s25, %s16
    %p27 = scmp.ge.s32.totalorder %s26, 2
    %s28 = scalar_select %p27, 0, %s26
    %s29 = ssub.s32 %s16, %s28
    %s30 = ssub.s32 %s17, %s24
    %s31 = sor.u32 %s29, %s30
    %p32 = scmp.eq.s32.totalorder %s31, 0
    %s34 = sadd.s32 %s33, 1
    %s35 = scalar_select %p32, %s33, %s34
    %p38 = pneg %p32
    %p39 = scmp.eq.s32.totalorder %s9, 1
    %p40 = por %p38, %p39
    %p41 = scmp.ne.s32.totalorder %s33, %s36
    %p42 = scmp.eq.s32.totalorder %s9, 0
    %p43 = por %p41, %p42
    %p44 = scmp.ne.s32.totalorder %s33, %s36
    %p45 = scmp.eq.s32.totalorder %s14, 1
    %p46 = por %p44, %p45
    %p47 = scmp.ne.s32.totalorder %s36, %s37
    %p48 = scmp.eq.s32.totalorder %s14, 0
    %p49 = por %p47, %p48
    %p50 = scmp.ne.s32.totalorder %s36, %s37
    %p51 = scmp.eq.s32.totalorder %s15, 1
    %p52 = por %p50, %p51
    %p54 = scmp.ne.s32.totalorder %s37, %s53
    %p55 = scmp.eq.s32.totalorder %s15, 0
    %p56 = por %p54, %p55
    %s57 = ssub.s32 %s16, %s28
    %s58 = ssub.s32 %s17, %s24
    %s59 = sor.u32 %s57, %s58
    %p60 = scmp.eq.s32.totalorder %s59, 0
    %s62 = sadd.s32 %s61, 1
    %s63 = scalar_select %p60, %s61, %s62
    %p66 = pneg %p60
    %p67 = scmp.eq.s32.totalorder %s9, 1
    %p68 = por %p66, %p67
    %p69 = scmp.ne.s32.totalorder %s61, %s64
    %p70 = scmp.eq.s32.totalorder %s9, 0
    %p71 = por %p69, %p70
    %p72 = scmp.ne.s32.totalorder %s61, %s64
    %p73 = scmp.eq.s32.totalorder %s14, 1
    %p74 = por %p72, %p73
    %p75 = scmp.ne.s32.totalorder %s64, %s65
    %p76 = scmp.eq.s32.totalorder %s14, 0
    %p77 = por %p75, %p76
    %p78 = scmp.ne.s32.totalorder %s64, %s65
    %p79 = scmp.eq.s32.totalorder %s15, 1
    %p80 = por %p78, %p79
    %p82 = scmp.ne.s32.totalorder %s65, %s81
    %p83 = scmp.eq.s32.totalorder %s15, 0
    %p84 = por %p82, %p83
    %s85 = ssub.s32 %s16, %s28
    %s86 = ssub.s32 %s17, %s24
    %s87 = sor.u32 %s85, %s86
    %p88 = scmp.eq.s32.totalorder %s87, 0
    %s90 = sadd.s32 %s89, 1
    %s91 = scalar_select %p88, %s89, %s90
    %p94 = pneg %p88
    %p95 = scmp.eq.s32.totalorder %s9, 1
    %p96 = por %p94, %p95
    %p97 = scmp.ne.s32.totalorder %s89, %s92
    %p98 = scmp.eq.s32.totalorder %s9, 0
    %p99 = por %p97, %p98
    %p100 = scmp.ne.s32.totalorder %s89, %s92
    %p101 = scmp.eq.s32.totalorder %s14, 1
    %p102 = por %p100, %p101
    %p103 = scmp.ne.s32.totalorder %s92, %s93
    %p104 = scmp.eq.s32.totalorder %s14, 0
    %p105 = por %p103, %p104
    %p106 = scmp.ne.s32.totalorder %s92, %s93
    %p107 = scmp.eq.s32.totalorder %s15, 1
    %p108 = por %p106, %p107
    %p110 = scmp.ne.s32.totalorder %s93, %s109
    %p111 = scmp.eq.s32.totalorder %s15, 0
    %p112 = por %p110, %p111
    %s113 = ssub.s32 %s16, %s28
    %p114 = scmp.eq.s32.totalorder %s113, 0
    %s116 = sadd.s32 %s115, 1
    %s117 = scalar_select %p114, %s115, %s116
    %p120 = pneg %p114
    %p121 = scmp.eq.s32.totalorder %s9, 1
    %p122 = por %p120, %p121
    %p123 = scmp.ne.s32.totalorder %s115, %s118
    %p124 = scmp.eq.s32.totalorder %s9, 0
    %p125 = por %p123, %p124
    %p126 = scmp.ne.s32.totalorder %s115, %s118
    %p127 = scmp.eq.s32.totalorder %s14, 1
    %p128 = por %p126, %p127
    %p129 = scmp.ne.s32.totalorder %s118, %s119
    %p130 = scmp.eq.s32.totalorder %s14, 0
    %p131 = por %p129, %p130
    %p132 = scmp.ne.s32.totalorder %s118, %s119
    %p133 = scmp.eq.s32.totalorder %s15, 1
    %p134 = por %p132, %p133
    %p136 = scmp.ne.s32.totalorder %s119, %s135
    %p137 = scmp.eq.s32.totalorder %s15, 0
    %p138 = por %p136, %p137
    %p139 = scmp.le.s32.totalorder 1, %s9
    %p140 = scmp.lt.s32.totalorder %s9, 3
    %p141 = pnand %p139, %p140
    %p142 = pneg %p141
    // Predicated region
    $region9: #{text_removal_loss.13} parent=5 // pred_check
      _
    $region10: #{text_removal_loss.13} parent=5 // pred_check_branch
      %144 = sbr.rel (%p141) target = $region12
    $region11: #{text_removal_loss.13} parent=5 // pred_region
      %s145 = ssub.s32 %s9, 1
    $region12: #{text_removal_loss.13} parent=5 // pred_fallthru
      _
    %p146 = scmp.lt.s32.totalorder %s9, 2
    // Predicated region
    $region13: #{text_removal_loss.13} parent=5 // pred_check
      %p147 = pneg %p146
    $region14: #{text_removal_loss.13} parent=5 // pred_check_branch
      %149 = sbr.rel (%p147) target = $region16
    $region15: #{text_removal_loss.13} parent=5 // pred_region
      // Predicated region
      $region17: #{text_removal_loss.13} parent=15 // pred_check
        %p150 = pneg %p43
      $region18: #{text_removal_loss.13} parent=15 // pred_check_branch
        %152 = sbr.rel (%p150) target = $region20
      $region19: #{text_removal_loss.13} parent=15 // pred_region
        %p153 = scmp.lt.s32.totalorder %s16, 1
        %s154 = scalar_select %p153, %s16, 1
        %p155 = scmp.lt.s32.totalorder %s17, 0
        %s156 = scalar_select %p155, %s17, 0
        %s157 = smul.addr %s154, 4
        %s158 = sadd.s32 %s156, %s157
        %s159 = smul.addr %s158, 8
        %s160 = scalar_lea.vmem %s0, %s159
      $region20: #{text_removal_loss.13} parent=15 // pred_fallthru
        _
      // Predicated region
      $region21: #{text_removal_loss.13} parent=15 // pred_check
        %p161 = pneg %p71
      $region22: #{text_removal_loss.13} parent=15 // pred_check_branch
        %163 = sbr.rel (%p161) target = $region24
      $region23: #{text_removal_loss.13} parent=15 // pred_region
        %p164 = scmp.lt.s32.totalorder %s16, 1
        %s165 = scalar_select %p164, %s16, 1
        %p166 = scmp.lt.s32.totalorder %s17, 0
        %s167 = scalar_select %p166, %s17, 0
        %s168 = smul.addr %s165, 4
        %s169 = sadd.s32 %s167, %s168
        %s170 = smul.addr %s169, 8
        %s171 = scalar_lea.vmem %s1, %s170
      $region24: #{text_removal_loss.13} parent=15 // pred_fallthru
        _
      // Predicated region
      $region25: #{text_removal_loss.13} parent=15 // pred_check
        %p172 = pneg %p99
      $region26: #{text_removal_loss.13} parent=15 // pred_check_branch
        %174 = sbr.rel (%p172) target = $region28
      $region27: #{text_removal_loss.13} parent=15 // pred_region
        %p175 = scmp.lt.s32.totalorder %s16, 1
        %s176 = scalar_select %p175, %s16, 1
        %p177 = scmp.lt.s32.totalorder %s17, 0
        %s178 = scalar_select %p177, %s17, 0
        %s179 = smul.addr %s176, 4
        %s180 = sadd.s32 %s178, %s179
        %s181 = smul.addr %s180, 8
        %s182 = scalar_lea.vmem %s2, %s181
      $region28: #{text_removal_loss.13} parent=15 // pred_fallthru
        _
    $region16: #{text_removal_loss.13} parent=5 // pred_fallthru
      _
    %p183 = scmp.le.s32.totalorder 1, %s9
    %p184 = scmp.lt.s32.totalorder %s9, 3
    %p185 = pnand %p183, %p184
    %p186 = pneg %p185
    // Predicated region
    $region29: #{text_removal_loss.13} parent=5 // pred_check
      _
    $region30: #{text_removal_loss.13} parent=5 // pred_check_branch
      %188 = sbr.rel (%p185) target = $region32
    $region31: #{text_removal_loss.13} parent=5 // pred_region
      %s189 = ssub.s32 %s9, 1
      %p190 = scmp.lt.s32.totalorder %s18, 1
      %s191 = scalar_select %p190, %s18, 1
      %p192 = scmp.lt.s32.totalorder %s19, 0
      %s193 = scalar_select %p192, %s19, 0
      %s194 = smul.addr %s191, 4
      %s195 = sadd.s32 %s193, %s194
      %s196 = smul.addr %s195, 8
      %s197 = scalar_lea.vmem %s0, %s196
      %p198 = pneg %p49
      %p199 = pneg %p46
      %p200 = scmp.lt.s32.totalorder %s18, 1
      %s201 = scalar_select %p200, %s18, 1
      %p202 = scmp.lt.s32.totalorder %s19, 0
      %s203 = scalar_select %p202, %s19, 0
      %s204 = smul.addr %s201, 4
      %s205 = sadd.s32 %s203, %s204
      %s206 = smul.addr %s205, 8
      %s207 = scalar_lea.vmem %s1, %s206
      %p208 = pneg %p77
      %p209 = pneg %p74
      %p210 = scmp.lt.s32.totalorder %s18, 1
      %s211 = scalar_select %p210, %s18, 1
      %p212 = scmp.lt.s32.totalorder %s19, 0
      %s213 = scalar_select %p212, %s19, 0
      %s214 = smul.addr %s211, 4
      %s215 = sadd.s32 %s213, %s214
      %s216 = smul.addr %s215, 8
      %s217 = scalar_lea.vmem %s2, %s216
      %p218 = pneg %p105
      %p219 = pneg %p102
      %p220 = pneg %p131
      %p221 = pneg %p128
      %p222 = scmp.lt.s32.totalorder %s18, 1
      %s223 = scalar_select %p222, %s18, 1
      %s224 = scalar_lea.vmem %s3, %s223
      %p225 = scmp.lt.s32.totalorder %s18, 1
      %s226 = scalar_select %p225, %s18, 1
      %p227 = scmp.lt.s32.totalorder %s19, 0
      %s228 = scalar_select %p227, %s19, 0
      %s229 = smul.addr %s226, 4
      %s230 = sadd.s32 %s228, %s229
      %s231 = smul.addr %s230, 8
      %s232 = scalar_lea.vmem %s0, %s231
      %p233 = scmp.lt.s32.totalorder %s18, 1
      %s234 = scalar_select %p233, %s18, 1
      %p235 = scmp.lt.s32.totalorder %s19, 0
      %s236 = scalar_select %p235, %s19, 0
      %s237 = smul.addr %s234, 4
      %s238 = sadd.s32 %s236, %s237
      %s239 = smul.addr %s238, 8
      %s240 = scalar_lea.vmem %s1, %s239
      %p241 = scmp.lt.s32.totalorder %s18, 1
      %s242 = scalar_select %p241, %s18, 1
      %p243 = scmp.lt.s32.totalorder %s19, 0
      %s244 = scalar_select %p243, %s19, 0
      %s245 = smul.addr %s242, 4
      %s246 = sadd.s32 %s244, %s245
      %s247 = smul.addr %s246, 8
      %s248 = scalar_lea.vmem %s2, %s247
      %p249 = scmp.lt.s32.totalorder %s18, 1
      %s250 = scalar_select %p249, %s18, 1
      %s251 = scalar_lea.vmem %s3, %s250
      %p252 = scmp.eq.s32.totalorder %s19, 0
      // Predicated region
      $region33: #{text_removal_loss.13} parent=31 // pred_check
        %p253 = pneg %p252
      $region34: #{text_removal_loss.13} parent=31 // pred_check_branch
        %255 = sbr.rel (%p253) target = $region36
      $region35: #{text_removal_loss.13} parent=31 // pred_region
        %vm256 = vcmask 130048
        %257 = vst.msk [vmem:[#allocation2] sm:$0xff] %vm256, 0.0
        %vm258 = vcmask 785408
        %259 = vst.msk [vmem:[#allocation4] sm:$0xff] %vm258, 0.0
        %260 = vst.msk [vmem:[#allocation4 + $0x8] sm:$0xff] %vm258, 0.0
        %261 = vst.msk [vmem:[#allocation4 + $0x10] sm:$0xff] %vm258, 0.0
        %262 = vst.msk [vmem:[#allocation4 + $0x18] sm:$0xff] %vm258, 0.0
        %263 = vst.msk [vmem:[#allocation4 + $0x20] sm:$0xff] %vm258, 0.0
        %264 = vst.msk [vmem:[#allocation4 + $0x28] sm:$0xff] %vm258, 0.0
        %265 = vst.msk [vmem:[#allocation4 + $0x30] sm:$0xff] %vm258, 0.0
        %266 = vst.msk [vmem:[#allocation4 + $0x38] sm:$0xff] %vm258, 0.0
        %267 = vst.msk [vmem:[#allocation4 + $0x40] sm:$0xff] %vm258, 0.0
        %268 = vst.msk [vmem:[#allocation4 + $0x48] sm:$0xff] %vm258, 0.0
        %269 = vst.msk [vmem:[#allocation4 + $0x50] sm:$0xff] %vm258, 0.0
        %270 = vst.msk [vmem:[#allocation4 + $0x58] sm:$0xff] %vm258, 0.0
      $region36: #{text_removal_loss.13} parent=31 // pred_fallthru
        _
      %v271 = vld [vmem:[%s232] sm:$0xff]
      %v272 = vld [vmem:[%s232 + $0x8] sm:$0xff]
      %v273 = vld [vmem:[%s232 + $0x10] sm:$0xff]
      %v274 = vld [vmem:[%s232 + $0x18] sm:$0xff]
      %v275 = vld [vmem:[%s240] sm:$0xff]
      %v276 = vld [vmem:[%s240 + $0x8] sm:$0xff]
      %v277 = vld [vmem:[%s240 + $0x10] sm:$0xff]
      %v278 = vld [vmem:[%s240 + $0x18] sm:$0xff]
      %v279 = vld [vmem:[%s248] sm:$0xff]
      %v280 = vld [vmem:[%s248 + $0x8] sm:$0xff]
      %v281 = vld [vmem:[%s248 + $0x10] sm:$0xff]
      %v282 = vld [vmem:[%s248 + $0x18] sm:$0xff]
      %v283 = vsub.f32 %v271, %v279
      %v284 = vsub.f32 %v272, %v280
      %v285 = vsub.f32 %v273, %v281
      %v286 = vsub.f32 %v274, %v282
      %v287 = vand.u32 2147483647, %v283
      %v288 = vand.u32 2147483647, %v284
      %v289 = vand.u32 2147483647, %v285
      %v290 = vand.u32 2147483647, %v286
      %v291 = vsub.f32 %v275, %v279
      %v292 = vsub.f32 %v276, %v280
      %v293 = vsub.f32 %v277, %v281
      %v294 = vsub.f32 %v278, %v282
      %v295 = vand.u32 2147483647, %v291
      %v296 = vand.u32 2147483647, %v292
      %v297 = vand.u32 2147483647, %v293
      %v298 = vand.u32 2147483647, %v294
      %v299 = vadd.f32 %v287, %v295
      %v300 = vadd.f32 %v288, %v296
      %v301 = vadd.f32 %v289, %v297
      %v302 = vadd.f32 %v290, %v298
      %v303 = vld [vmem:[#allocation2] sm:$0xff]
      %vm304 = vcmask 130048
      %v305 = vsel %vm304, %v299, 0.0
      %v306 = vsel %vm304, %v300, 0.0
      %v307 = vadd.f32 %v305, %v306
      %v308 = vsel %vm304, %v301, 0.0
      %v309 = vadd.f32 %v307, %v308
      %v310 = vsel %vm304, %v302, 0.0
      %v311 = vadd.f32 %v309, %v310
      %v312 = vadd.f32 %v303, %v311
      %313 = vst.msk [vmem:[#allocation2] sm:$0xff] %vm304, %v312
      %314 = vst.msk [vmem:[#allocation3] sm:$0xff] %vm304, %v271
      %315 = vst.msk [vmem:[#allocation3 + $0x8] sm:$0xff] %vm304, %v272
      %316 = vst.msk [vmem:[#allocation3 + $0x10] sm:$0xff] %vm304, %v273
      %317 = vst.msk [vmem:[#allocation3 + $0x18] sm:$0xff] %vm304, %v274
      %318 = vst.msk [vmem:[#allocation3 + $0x20] sm:$0xff] %vm304, %v275
      %319 = vst.msk [vmem:[#allocation3 + $0x28] sm:$0xff] %vm304, %v276
      %320 = vst.msk [vmem:[#allocation3 + $0x30] sm:$0xff] %vm304, %v277
      %321 = vst.msk [vmem:[#allocation3 + $0x38] sm:$0xff] %vm304, %v278
      %322 = vst.msk [vmem:[#allocation3 + $0x40] sm:$0xff] %vm304, %v279
      %323 = vst.msk [vmem:[#allocation3 + $0x48] sm:$0xff] %vm304, %v280
      %324 = vst.msk [vmem:[#allocation3 + $0x50] sm:$0xff] %vm304, %v281
      %325 = vst.msk [vmem:[#allocation3 + $0x58] sm:$0xff] %vm304, %v282
      %v326 = vld [vmem:[#allocation3] sm:$0xff]
      %v327 = vld [vmem:[#allocation3 + $0x8] sm:$0xff]
      %v328 = vld [vmem:[#allocation3 + $0x10] sm:$0xff]
      %v329 = vld [vmem:[#allocation3 + $0x18] sm:$0xff]
      %v330 = vld [vmem:[#allocation3 + $0x20] sm:$0xff]
      %v331 = vld [vmem:[#allocation3 + $0x28] sm:$0xff]
      %v332 = vld [vmem:[#allocation3 + $0x30] sm:$0xff]
      %v333 = vld [vmem:[#allocation3 + $0x38] sm:$0xff]
      %v334 = vld [vmem:[#allocation3 + $0x40] sm:$0xff]
      %v335 = vld [vmem:[#allocation3 + $0x48] sm:$0xff]
      %v336 = vld [vmem:[#allocation3 + $0x50] sm:$0xff]
      %v337 = vld [vmem:[#allocation3 + $0x58] sm:$0xff]
      %v338 = vld [vmem:[#allocation4] sm:$0xff]
      %v339 = vld [vmem:[#allocation4 + $0x8] sm:$0xff]
      %v340 = vld [vmem:[#allocation4 + $0x10] sm:$0xff]
      %v341 = vld [vmem:[#allocation4 + $0x18] sm:$0xff]
      %v342 = vld [vmem:[#allocation4 + $0x20] sm:$0xff]
      %v343 = vld [vmem:[#allocation4 + $0x28] sm:$0xff]
      %v344 = vld [vmem:[#allocation4 + $0x30] sm:$0xff]
      %v345 = vld [vmem:[#allocation4 + $0x38] sm:$0xff]
      %v346 = vld [vmem:[#allocation4 + $0x40] sm:$0xff]
      %v347 = vld [vmem:[#allocation4 + $0x48] sm:$0xff]
      %v348 = vld [vmem:[#allocation4 + $0x50] sm:$0xff]
      %v349 = vld [vmem:[#allocation4 + $0x58] sm:$0xff]
      %v351 = vsel %vm304, %v326, 0
      %v354 = vsel %vm304, %v327, 0
      %v357 = vsel %vm304, %v328, 0
      %v360 = vsel %vm304, %v329, 0
      %v363 = vsel %vm304, %v330, 0
      %v366 = vsel %vm304, %v331, 0
      %v369 = vsel %vm304, %v332, 0
      %v372 = vsel %vm304, %v333, 0
      %v375 = vsel %vm304, %v334, 0
      %v378 = vsel %vm304, %v335, 0
      %v381 = vsel %vm304, %v336, 0
      %v384 = vsel %vm304, %v337, 0
      %386 = vmatpush.xpose.msra.mxu0 0.0
      %387 = vmatpush.xpose.msra.mxu0 0.0
      %388 = vmatpush.xpose.msra.mxu0 0.0
      %389 = vmatpush.xpose.msra.mxu0 0.0
      %390 = vmatpush.xpose.msra.mxu0 %v384
      %391 = vmatpush.xpose.msra.mxu0 %v381
      %392 = vmatpush.xpose.msra.mxu0 %v378
      %393 = vmatpush.xpose.msra.mxu0 %v375
      %394 = vmatpush.xpose.msra.mxu0 %v372
      %395 = vmatpush.xpose.msra.mxu0 %v369
      %396 = vmatpush.xpose.msra.mxu0 %v366
      %397 = vmatpush.xpose.msra.mxu0 %v363
      %398 = vmatpush.xpose.msra.mxu0 %v360
      %399 = vmatpush.xpose.msra.mxu0 %v357
      %400 = vmatpush.xpose.msra.mxu0 %v354
      %401 = vmatpush.xpose.msra.mxu0 %v351
      %402 = vmatmul.f32.gmra.mxu0 %v351
      %v403 = vpop.f32.mrf.mxu0
      %v404 = vadd.f32 0.0, %v403
      %405 = vmatmul.f32.gmra.mxu0 %v354
      %v406 = vpop.f32.mrf.mxu0
      %v407 = vadd.f32 0.0, %v406
      %408 = vmatmul.f32.gmra.mxu0 %v357
      %v409 = vpop.f32.mrf.mxu0
      %v410 = vadd.f32 0.0, %v409
      %411 = vmatmul.f32.gmra.mxu0 %v360
      %v412 = vpop.f32.mrf.mxu0
      %v413 = vadd.f32 0.0, %v412
      %414 = vmatmul.f32.gmra.mxu0 %v363
      %v415 = vpop.f32.mrf.mxu0
      %v416 = vadd.f32 0.0, %v415
      %417 = vmatmul.f32.gmra.mxu0 %v366
      %v418 = vpop.f32.mrf.mxu0
      %v419 = vadd.f32 0.0, %v418
      %420 = vmatmul.f32.gmra.mxu0 %v369
      %v421 = vpop.f32.mrf.mxu0
      %v422 = vadd.f32 0.0, %v421
      %423 = vmatmul.f32.gmra.mxu0 %v372
      %v424 = vpop.f32.mrf.mxu0
      %v425 = vadd.f32 0.0, %v424
      %426 = vmatmul.f32.gmra.mxu0 %v375
      %v427 = vpop.f32.mrf.mxu0
      %v428 = vadd.f32 0.0, %v427
      %429 = vmatmul.f32.gmra.mxu0 %v378
      %v430 = vpop.f32.mrf.mxu0
      %v431 = vadd.f32 0.0, %v430
      %432 = vmatmul.f32.gmra.mxu0 %v381
      %v433 = vpop.f32.mrf.mxu0
      %v434 = vadd.f32 0.0, %v433
      %435 = vmatmul.f32.gmra.mxu0 %v384
      %v436 = vpop.f32.mrf.mxu0
      %v437 = vadd.f32 0.0, %v436
      %438 = vdwg.mxu0
      %v439 = vadd.f32 %v338, %v404
      %v440 = vadd.f32 %v339, %v407
      %v441 = vadd.f32 %v340, %v410
      %v442 = vadd.f32 %v341, %v413
      %v443 = vadd.f32 %v342, %v416
      %v444 = vadd.f32 %v343, %v419
      %v445 = vadd.f32 %v344, %v422
      %v446 = vadd.f32 %v345, %v425
      %v447 = vadd.f32 %v346, %v428
      %v448 = vadd.f32 %v347, %v431
      %v449 = vadd.f32 %v348, %v434
      %v450 = vadd.f32 %v349, %v437
      %vm451 = vcmask 785408
      %452 = vst.msk [vmem:[#allocation4] sm:$0xff] %vm451, %v439
      %453 = vst.msk [vmem:[#allocation4 + $0x8] sm:$0xff] %vm451, %v440
      %454 = vst.msk [vmem:[#allocation4 + $0x10] sm:$0xff] %vm451, %v441
      %455 = vst.msk [vmem:[#allocation4 + $0x18] sm:$0xff] %vm451, %v442
      %456 = vst.msk [vmem:[#allocation4 + $0x20] sm:$0xff] %vm451, %v443
      %457 = vst.msk [vmem:[#allocation4 + $0x28] sm:$0xff] %vm451, %v444
      %458 = vst.msk [vmem:[#allocation4 + $0x30] sm:$0xff] %vm451, %v445
      %459 = vst.msk [vmem:[#allocation4 + $0x38] sm:$0xff] %vm451, %v446
      %460 = vst.msk [vmem:[#allocation4 + $0x40] sm:$0xff] %vm451, %v447
      %461 = vst.msk [vmem:[#allocation4 + $0x48] sm:$0xff] %vm451, %v448
      %462 = vst.msk [vmem:[#allocation4 + $0x50] sm:$0xff] %vm451, %v449
      %463 = vst.msk [vmem:[#allocation4 + $0x58] sm:$0xff] %vm451, %v450
      // Predicated region
      $region37: #{text_removal_loss.13} parent=31 // pred_check
        %p464 = pneg %p252
      $region38: #{text_removal_loss.13} parent=31 // pred_check_branch
        %466 = sbr.rel (%p464) target = $region40
      $region39: #{text_removal_loss.13} parent=31 // pred_region
        %v467 = vld [vmem:[#allocation4] sm:$0xff]
        %v468 = vld [vmem:[#allocation4 + $0x8] sm:$0xff]
        %v469 = vld [vmem:[#allocation4 + $0x10] sm:$0xff]
        %v470 = vld [vmem:[#allocation4 + $0x18] sm:$0xff]
        %v471 = vld [vmem:[#allocation4 + $0x20] sm:$0xff]
        %v472 = vld [vmem:[#allocation4 + $0x28] sm:$0xff]
        %v473 = vld [vmem:[#allocation4 + $0x30] sm:$0xff]
        %v474 = vld [vmem:[#allocation4 + $0x38] sm:$0xff]
        %v475 = vld [vmem:[#allocation4 + $0x40] sm:$0xff]
        %v476 = vld [vmem:[#allocation4 + $0x48] sm:$0xff]
        %v477 = vld [vmem:[#allocation4 + $0x50] sm:$0xff]
        %v478 = vld [vmem:[#allocation4 + $0x58] sm:$0xff]
        %v479 = vmul.f32 %v467, 0.001953125
        %v480 = vmul.f32 %v468, 0.001953125
        %v481 = vmul.f32 %v469, 0.001953125
        %v482 = vmul.f32 %v470, 0.001953125
        %v483 = vmul.f32 %v471, 0.001953125
        %v484 = vmul.f32 %v472, 0.001953125
        %v485 = vmul.f32 %v473, 0.001953125
        %v486 = vmul.f32 %v474, 0.001953125
        %v487 = vmul.f32 %v475, 0.001953125
        %v488 = vmul.f32 %v476, 0.001953125
        %v489 = vmul.f32 %v477, 0.001953125
        %v490 = vmul.f32 %v478, 0.001953125
        %495 = vrot.lane.b32.xlu0 %v487, 64
        %v496 = vpop.permute.xlu0 %495
        %497 = vrot.lane.b32.xlu0 %v488, 64
        %v498 = vpop.permute.xlu0 %497
        %499 = vrot.lane.b32.xlu0 %v489, 64
        %v500 = vpop.permute.xlu0 %499
        %501 = vrot.lane.b32.xlu0 %v490, 64
        %v502 = vpop.permute.xlu0 %501
        %v507 = vsub.f32 %v479, %v496
        %v508 = vsub.f32 %v480, %v498
        %v509 = vsub.f32 %v481, %v500
        %v510 = vsub.f32 %v482, %v502
        %v511 = vand.u32 2147483647, %v507
        %v512 = vand.u32 2147483647, %v508
        %v513 = vand.u32 2147483647, %v509
        %v514 = vand.u32 2147483647, %v510
        %vm515 = vcmask 261120
        %v516 = vsel %vm515, %v511, 0.0
        %v517 = vsel %vm515, %v512, 0.0
        %v518 = vadd.f32 %v516, %v517
        %v519 = vsel %vm515, %v513, 0.0
        %v520 = vadd.f32 %v518, %v519
        %v521 = vsel %vm515, %v514, 0.0
        %v522 = vadd.f32 %v520, %v521
        %523 = vadd.xlane.f32.xlu0 %v522
        %v524 = vpop.xlane.xlu0 %523
        %v525 = vrot.slane %v524, 4
        %v526 = vadd.f32 %v524, %v525
        %v527 = vrot.slane %v526, 2
        %v528 = vadd.f32 %v526, %v527
        %v529 = vrot.slane %v528, 1
        %v530 = vadd.f32 %v528, %v529
        %s531 = vtos %v530
        %532 = vrot.lane.b32.xlu0 %v487, 96
        %v533 = vpop.permute.xlu0 %532
        %534 = vrot.lane.b32.xlu0 %v488, 96
        %v535 = vpop.permute.xlu0 %534
        %536 = vrot.lane.b32.xlu0 %v489, 96
        %v537 = vpop.permute.xlu0 %536
        %538 = vrot.lane.b32.xlu0 %v490, 96
        %v539 = vpop.permute.xlu0 %538
        %v544 = vsub.f32 %v483, %v533
        %v545 = vsub.f32 %v484, %v535
        %v546 = vsub.f32 %v485, %v537
        %v547 = vsub.f32 %v486, %v539
        %v548 = vand.u32 2147483647, %v544
        %v549 = vand.u32 2147483647, %v545
        %v550 = vand.u32 2147483647, %v546
        %v551 = vand.u32 2147483647, %v547
        %556 = vrot.lane.b32.xlu0 %v548, 96
        %v557 = vpop.permute.xlu0 %556
        %558 = vrot.lane.b32.xlu0 %v549, 96
        %v559 = vpop.permute.xlu0 %558
        %560 = vrot.lane.b32.xlu0 %v550, 96
        %v561 = vpop.permute.xlu0 %560
        %562 = vrot.lane.b32.xlu0 %v551, 96
        %v563 = vpop.permute.xlu0 %562
        %v568 = vsel %vm515, %v557, 0.0
        %v569 = vsel %vm515, %v559, 0.0
        %v570 = vadd.f32 %v568, %v569
        %v571 = vsel %vm515, %v561, 0.0
        %v572 = vadd.f32 %v570, %v571
        %v573 = vsel %vm515, %v563, 0.0
        %v574 = vadd.f32 %v572, %v573
        %575 = vadd.xlane.f32.xlu0 %v574
        %v576 = vpop.xlane.xlu0 %575
        %v577 = vrot.slane %v576, 4
        %v578 = vadd.f32 %v576, %v577
        %v579 = vrot.slane %v578, 2
        %v580 = vadd.f32 %v578, %v579
        %v581 = vrot.slane %v580, 1
        %v582 = vadd.f32 %v580, %v581
        %s583 = vtos %v582
        %s584 = sadd.f32 %s531, %s583
        %v585 = vld [vmem:[#allocation2] sm:$0xff]
        %v586 = vsel %vm304, %v585, 0.0
        %587 = vadd.xlane.f32.xlu0 %v586
        %v588 = vpop.xlane.xlu0 %587
        %v589 = vrot.slane %v588, 4
        %v590 = vadd.f32 %v588, %v589
        %v591 = vrot.slane %v590, 2
        %v592 = vadd.f32 %v590, %v591
        %v593 = vrot.slane %v592, 1
        %v594 = vadd.f32 %v592, %v593
        %s595 = vtos %v594
        %v596 = vstv %s595
        %vm597 = vcmask 0
        %598 = vst.msk [vmem:[%s251] sm:$0x1] %vm597, %v596
        %v599 = vstv %s584
        %vm600 = vcmask 8200
        %601 = vst.msk [vmem:[%s251] sm:$0x1] %vm600, %v599
      $region40: #{text_removal_loss.13} parent=31 // pred_fallthru
        _
      %p602 = scmp.lt.s32.totalorder %s18, 1
      %s603 = scalar_select %p602, %s18, 1
      %s604 = scalar_lea.vmem %s3, %s603
      // Predicated region
      $region41: #{text_removal_loss.13} parent=31 // pred_check
        %p605 = pneg %p128
      $region42: #{text_removal_loss.13} parent=31 // pred_check_branch
        %607 = sbr.rel (%p605) target = $region44
      $region43: #{text_removal_loss.13} parent=31 // pred_region
        _
      $region44: #{text_removal_loss.13} parent=31 // pred_fallthru
        _
    $region32: #{text_removal_loss.13} parent=5 // pred_fallthru
      _
    %p608 = scmp.le.s32.totalorder 2, %s9
    // Predicated region
    $region45: #{text_removal_loss.13} parent=5 // pred_check
      %p609 = pneg %p608
    $region46: #{text_removal_loss.13} parent=5 // pred_check_branch
      %611 = sbr.rel (%p609) target = $region48
    $region47: #{text_removal_loss.13} parent=5 // pred_region
      %s612 = ssub.s32 %s9, 2
      // Predicated region
      $region49: #{text_removal_loss.13} parent=47 // pred_check
        %p613 = pneg %p134
      $region50: #{text_removal_loss.13} parent=47 // pred_check_branch
        %615 = sbr.rel (%p613) target = $region52
      $region51: #{text_removal_loss.13} parent=47 // pred_region
        %p616 = scmp.lt.s32.totalorder %s20, 1
        %s617 = scalar_select %p616, %s20, 1
        %s618 = scalar_lea.vmem %s3, %s617
      $region52: #{text_removal_loss.13} parent=47 // pred_fallthru
        _
    $region48: #{text_removal_loss.13} parent=5 // pred_fallthru
      _
  $region6: #{text_removal_loss.13} parent=0 // loop_footer
    %s13 = sadd.s32 1, %s9
  $region7: #{text_removal_loss.13} parent=0 // loop_footer_branch
    %8 = sbr.rel target = $region3
  $region8: #{text_removal_loss.13} parent=0 // loop_exit
    _

</llo_original>
